<compile_context>
chip_gen: v6e
topology: v6e:2x2x1
jax: 0.10.0
libtpu: 0.0.40
codegen_flags: <defaults>
</compile_context>

<pallas_src>
import jax
import jax.numpy as jnp
from jax.experimental import pallas as pl
from jax.experimental.pallas import tpu as pltpu


def add_relu_conv1x1_kernel(a_ref, b_ref, w_ref, o_ref, x_ref):
    # a_ref, b_ref : (1, Cin, HW)   residual branches (NCHW memory layout)
    # w_ref        : (tn, Cin)      slice of the 1x1-conv weight (natural layout)
    # o_ref        : (1, tn, HW)
    # x_ref        : (Cin, HW)      VMEM scratch holding relu(a + b)
    @pl.when(pl.program_id(1) == 0)
    def _():
        # add + ReLU (VPU) -- computed once per batch element, reused by all
        # Cout tiles.
        x_ref[...] = jnp.maximum(a_ref[0] + b_ref[0], 0.0)

    # 1x1 conv == W @ X on the MXU, f32 accumulation, fast single-pass path.
    o_ref[0] = jnp.dot(
        w_ref[...], x_ref[...],
        preferred_element_type=jnp.float32,
        precision=jax.lax.Precision.DEFAULT,
    ).astype(o_ref.dtype)


def add_relu_conv1x1(x118, x110, weight, *, tn=512):
    """x118, x110: NCHW float32. weight: (Cout, Cin, 1, 1) float32 (PyTorch layout)."""
    N, C, H, W = x118.shape
    Cout = weight.shape[0]
    HW = H * W

    # NCHW is already (N, C, H*W) row-major: pure reshapes, zero data movement.
    a = x118.reshape(N, C, HW)
    b = x110.reshape(N, C, HW)
    # (Cout, Cin, 1, 1) -> (Cout, Cin): squeeze only, no transpose round-trip.
    w = weight.reshape(Cout, C)

    if Cout % tn != 0:
        tn = Cout
    grid = (N, Cout // tn)

    # Accurate (cheap) cost hint: matmul + add/relu flops, total HBM traffic.
    flops = 2 * N * Cout * C * HW + 2 * N * C * HW
    bytes_accessed = 4 * (2 * N * C * HW + Cout * C + N * Cout * HW)

    out3d = pl.pallas_call(
        add_relu_conv1x1_kernel,
        out_shape=jax.ShapeDtypeStruct((N, Cout, HW), jnp.float32),
        grid=grid,
        in_specs=[
            pl.BlockSpec((1, C, HW), lambda n, j: (n, 0, 0)),   # resident across Cout tiles
            pl.BlockSpec((1, C, HW), lambda n, j: (n, 0, 0)),   # resident across Cout tiles
            pl.BlockSpec((tn, C), lambda n, j: (j, 0)),         # streamed weight tiles
        ],
        out_specs=pl.BlockSpec((1, tn, HW), lambda n, j: (n, j, 0)),
        scratch_shapes=[pltpu.VMEM((C, HW), jnp.float32)],      # relu(a+b), computed once
        compiler_params=pltpu.CompilerParams(
            # Cout-tile axis carries the scratch dependence -> "arbitrary".
            dimension_semantics=("parallel", "arbitrary")),
        cost_estimate=pl.CostEstimate(
            flops=flops, bytes_accessed=bytes_accessed, transcendentals=0),
    )(a, b, w)

    # (N, Cout, H*W) -> NCHW, again a pure reshape.
    return out3d.reshape(N, Cout, H, W)


if __name__ == "__main__":
    # Shapes from the module: x118, x110 in [1, 1024, 14, 14]; 1x1 conv 1024->1024.
    N, C, H, W = 1, 1024, 14, 14
    Cout = 1024

    key = jax.random.PRNGKey(0)
    k1, k2, k3 = jax.random.split(key, 3)
    x118 = jax.random.normal(k1, (N, C, H, W), dtype=jnp.float32)
    x110 = jax.random.normal(k2, (N, C, H, W), dtype=jnp.float32)
    # deterministic synthetic conv weight (PyTorch layout: (Cout, Cin, 1, 1))
    weight = (jax.random.normal(k3, (Cout, C, 1, 1), dtype=jnp.float32)
              * (1.0 / jnp.sqrt(C)))

    out = add_relu_conv1x1(x118, x110, weight)
    out = jax.block_until_ready(out)

    # quick sanity check against plain-JAX reference (same default MXU precision)
    ref = jnp.einsum(
        "nchw,oc->nohw",
        jnp.maximum(x118 + x110, 0.0),
        weight[:, :, 0, 0],
    )
    assert out.shape == (N, Cout, H, W)
    assert jnp.allclose(out, ref, atol=1e-3, rtol=1e-3)

    print("KERNEL_OK")
</pallas_src>

<mosaic_0001>
module attributes {stable_mosaic.version = 11 : i64} {
  func.func @add_relu_conv1x1_kernel(%arg0: i32, %arg1: i32, %arg2: memref<1x1024x196xf32, #tpu.memory_space<vmem>>, %arg3: memref<1x1024x196xf32, #tpu.memory_space<vmem>>, %arg4: memref<512x1024xf32, #tpu.memory_space<vmem>>, %arg5: memref<1x512x196xf32, #tpu.memory_space<vmem>>, %arg6: memref<1024x196xf32, #tpu.memory_space<vmem>>) attributes {dimension_semantics = [#tpu.dimension_semantics<parallel>, #tpu.dimension_semantics<arbitrary>], iteration_bounds = array<i64: 1, 2>, scalar_prefetch = 0 : i64, scratch_operands = 1 : i64, tpu.core_type = #tpu.core_type<tc>, window_params = [{transform_indices = @transform_0, window_bounds = array<i64: 1, 1024, 196>}, {transform_indices = @transform_1, window_bounds = array<i64: 1, 1024, 196>}, {transform_indices = @transform_2, window_bounds = array<i64: 512, 1024>}, {transform_indices = @transform_3, window_bounds = array<i64: 1, 512, 196>}]} {
    %c0_i32 = arith.constant 0 : i32
    %0 = arith.cmpi eq, %arg1, %c0_i32 : i32
    %1 = arith.extui %0 : i1 to i32
    %c0_i32_0 = arith.constant 0 : i32
    %2 = arith.cmpi ne, %1, %c0_i32_0 : i32
    scf.if %2 {
      %c0_7 = arith.constant 0 : index
      %c0_8 = arith.constant 0 : index
      %c0_9 = arith.constant 0 : index
      %9 = vector.load %arg2[%c0_7, %c0_8, %c0_9] : memref<1x1024x196xf32, #tpu.memory_space<vmem>>, vector<1x1024x196xf32>
      %10 = vector.shape_cast %9 : vector<1x1024x196xf32> to vector<1024x196xf32>
      %c0_10 = arith.constant 0 : index
      %c0_11 = arith.constant 0 : index
      %c0_12 = arith.constant 0 : index
      %11 = vector.load %arg3[%c0_10, %c0_11, %c0_12] : memref<1x1024x196xf32, #tpu.memory_space<vmem>>, vector<1x1024x196xf32>
      %12 = vector.shape_cast %11 : vector<1x1024x196xf32> to vector<1024x196xf32>
      %13 = arith.addf %10, %12 : vector<1024x196xf32>
      %cst_13 = arith.constant 0.000000e+00 : f32
      %14 = vector.broadcast %cst_13 : f32 to vector<1024x196xf32>
      %15 = arith.maximumf %13, %14 : vector<1024x196xf32>
      %c0_14 = arith.constant 0 : index
      %c0_15 = arith.constant 0 : index
      %16 = vector.load %arg6[%c0_14, %c0_15] : memref<1024x196xf32, #tpu.memory_space<vmem>>, vector<1024x196xf32>
      tpu.vector_store %arg6[%c0_14, %c0_15], %15 {strides = array<i32>} : memref<1024x196xf32, #tpu.memory_space<vmem>>, vector<1024x196xf32>,
    } else {
    }
    %c0 = arith.constant 0 : index
    %c0_1 = arith.constant 0 : index
    %3 = vector.load %arg4[%c0, %c0_1] : memref<512x1024xf32, #tpu.memory_space<vmem>>, vector<512x1024xf32>
    %c0_2 = arith.constant 0 : index
    %c0_3 = arith.constant 0 : index
    %4 = vector.load %arg6[%c0_2, %c0_3] : memref<1024x196xf32, #tpu.memory_space<vmem>>, vector<1024x196xf32>
    %cst = arith.constant dense<0.000000e+00> : vector<512x196xf32>
    %5 = tpu.matmul %3, %4, %cst {dimension_numbers = #tpu.dot_dimension_numbers<[1], [0], [0], [1], [0, 0, 1, 1], [], []>} : vector<512x1024xf32>, vector<1024x196xf32>, vector<512x196xf32> -> vector<512x196xf32>
    %c0_4 = arith.constant 0 : index
    %c0_5 = arith.constant 0 : index
    %c0_6 = arith.constant 0 : index
    %6 = vector.load %arg5[%c0_4, %c0_5, %c0_6] : memref<1x512x196xf32, #tpu.memory_space<vmem>>, vector<1x512x196xf32>
    %7 = vector.shape_cast %6 : vector<1x512x196xf32> to vector<512x196xf32>
    %8 = vector.shape_cast %5 : vector<512x196xf32> to vector<1x512x196xf32>
    tpu.vector_store %arg5[%c0_4, %c0_5, %c0_6], %8 {strides = array<i32>} : memref<1x512x196xf32, #tpu.memory_space<vmem>>, vector<1x512x196xf32>,
    return
  }
  func.func @transform_0(%arg0: i32, %arg1: i32) -> (i32, i32, i32) {
    %c0_i32 = arith.constant 0 : i32
    %c0_i32_0 = arith.constant 0 : i32
    %c0_i32_1 = arith.constant 0 : i32
    return %arg0, %c0_i32, %c0_i32_0 : i32, i32, i32
  }
  func.func @transform_1(%arg0: i32, %arg1: i32) -> (i32, i32, i32) {
    %c0_i32 = arith.constant 0 : i32
    %c0_i32_0 = arith.constant 0 : i32
    %c0_i32_1 = arith.constant 0 : i32
    return %arg0, %c0_i32, %c0_i32_0 : i32, i32, i32
  }
  func.func @transform_2(%arg0: i32, %arg1: i32) -> (i32, i32) {
    %c0_i32 = arith.constant 0 : i32
    %c0_i32_0 = arith.constant 0 : i32
    return %arg1, %c0_i32 : i32, i32
  }
  func.func @transform_3(%arg0: i32, %arg1: i32) -> (i32, i32, i32) {
    %c0_i32 = arith.constant 0 : i32
    %c0_i32_0 = arith.constant 0 : i32
    return %arg0, %arg1, %c0_i32 : i32, i32, i32
  }
}

</mosaic_0001>

<llo_original>
// kernel: tpu_custom_call.1
$region0: #{tpu_custom_call.1}
  #allocation0 [shape = 'u32[]', space=smem, size = 0x4, offset = 0x4, fixed_abs, tag = 'smem constant byte address 0x4 - core index']
  #allocation1 [shape = 'u32[144,128]{1,0:T(1,128)}', space=vmem, size = 0x12000, scoped, tag = 'internal scratch']
  #allocation2 [shape = 'f32[1024,196]{1,0:T(8,128)}', space=vmem, size = 0x100000, scoped, tag = 'scratch operand']
  %s0 = inlined_call_operand.vmem [shape: f32[1,1024,196], index: 0, kind: input, shape index: {}]
  %s1 = inlined_call_operand.vmem [shape: f32[1,1024,196], index: 1, kind: input, shape index: {}]
  %s2 = inlined_call_operand.hbm [shape: f32[1024,1024], index: 2, kind: input, shape index: {}]
  %s3 = inlined_call_operand.vmem [shape: f32[1,1024,196], index: 3, kind: output, shape index: {}]
  %s4 = sld [smem:[#allocation0]]
  $region53: #{tpu_custom_call.1} parent=0
    _
  %s6 = ssub.s32 1, %s4
  %s7 = scalar_select 0, %s6, %s4
  $region1: #{tpu_custom_call.1} parent=0
    #allocation3 [shape = 'u8[4194304]{0}', space=vmem, size = 0x400000, scoped, tag = 'input window, operand 2']
    #allocation4 [shape = 's32[2]{0}', space=sflag, size = 0x8, scoped, tag = 'scoped memory for tpu_custom_call.1']
    %8 = vsyncpa [#allocation4], 0
    %s9 = scalar_lea.sflag [#allocation4], 1
    %10 = vsyncpa %s9, 0
    loop: start=0, step=1, limit=4
    $region2: #{tpu_custom_call.1} parent=1 // loop_pre_header
      _
    $region3: #{tpu_custom_call.1} parent=1 // loop_header
      %s12 = sphi 0, %s16
      %p13 = scmp.ge.s32.totalorder %s12, 4
      %s19 = sphi 0, %s31
      %s20 = sphi 0, %s27
      %s21 = sphi 0, %s19
      %s22 = sphi 0, %s20
      %s23 = sphi 0, %s21
      %s24 = sphi 0, %s22
      %s34 = sphi 0, %s36
      %s37 = sphi 0, %s34
      %s38 = sphi 0, %s37
      %s54 = sphi 0, %s38
      %s60 = sphi 0, %s62
      %s63 = sphi 0, %s60
      %s64 = sphi 0, %s63
      %s80 = sphi 0, %s64
      %s86 = sphi 0, %s88
      %s89 = sphi 0, %s86
      %s90 = sphi 0, %s89
      %s106 = sphi 0, %s90
      %s114 = sphi 0, %s116
      %s117 = sphi 0, %s114
      %s118 = sphi 0, %s117
      %s134 = sphi 0, %s118
    $region4: #{tpu_custom_call.1} parent=1 // loop_header_branch
      %15 = sbr.rel (%p13) target = $region8
    $region5: #{tpu_custom_call.1} parent=1 // loop_body
      %s17 = ssub.s32 %s12, 1
      %s18 = ssub.s32 %s12, 2
      %s25 = sadd.s32 1, %s20
      %p26 = scmp.ge.s32.totalorder %s25, 2
      %s27 = scalar_select %p26, 0, %s25
      %s28 = sadd.s32 1, %s19
      %s29 = scalar_select %p26, %s28, %s19
      %p30 = scmp.ge.s32.totalorder %s29, 1
      %s31 = scalar_select %p30, 0, %s29
      %s32 = ssub.s32 %s19, %s31
      %p33 = scmp.eq.s32.totalorder %s32, 0
      %s35 = sadd.s32 %s34, 1
      %s36 = scalar_select %p33, %s34, %s35
      %p39 = pneg %p33
      %p40 = scmp.eq.s32.totalorder %s12, 1
      %p41 = por %p39, %p40
      %p42 = scmp.ne.s32.totalorder %s34, %s37
      %p43 = scmp.eq.s32.totalorder %s12, 0
      %p44 = por %p42, %p43
      %p45 = scmp.ne.s32.totalorder %s34, %s37
      %p46 = scmp.eq.s32.totalorder %s17, 1
      %p47 = por %p45, %p46
      %p48 = scmp.ne.s32.totalorder %s37, %s38
      %p49 = scmp.eq.s32.totalorder %s17, 0
      %p50 = por %p48, %p49
      %p51 = scmp.ne.s32.totalorder %s37, %s38
      %p52 = scmp.eq.s32.totalorder %s18, 1
      %p53 = por %p51, %p52
      %p55 = scmp.ne.s32.totalorder %s38, %s54
      %p56 = scmp.eq.s32.totalorder %s18, 0
      %p57 = por %p55, %p56
      %s58 = ssub.s32 %s19, %s31
      %p59 = scmp.eq.s32.totalorder %s58, 0
      %s61 = sadd.s32 %s60, 1
      %s62 = scalar_select %p59, %s60, %s61
      %p65 = pneg %p59
      %p66 = scmp.eq.s32.totalorder %s12, 1
      %p67 = por %p65, %p66
      %p68 = scmp.ne.s32.totalorder %s60, %s63
      %p69 = scmp.eq.s32.totalorder %s12, 0
      %p70 = por %p68, %p69
      %p71 = scmp.ne.s32.totalorder %s60, %s63
      %p72 = scmp.eq.s32.totalorder %s17, 1
      %p73 = por %p71, %p72
      %p74 = scmp.ne.s32.totalorder %s63, %s64
      %p75 = scmp.eq.s32.totalorder %s17, 0
      %p76 = por %p74, %p75
      %p77 = scmp.ne.s32.totalorder %s63, %s64
      %p78 = scmp.eq.s32.totalorder %s18, 1
      %p79 = por %p77, %p78
      %p81 = scmp.ne.s32.totalorder %s64, %s80
      %p82 = scmp.eq.s32.totalorder %s18, 0
      %p83 = por %p81, %p82
      %s84 = ssub.s32 %s20, %s27
      %p85 = scmp.eq.s32.totalorder %s84, 0
      %s87 = sadd.s32 %s86, 1
      %s88 = scalar_select %p85, %s86, %s87
      %p91 = pneg %p85
      %p92 = scmp.eq.s32.totalorder %s12, 1
      %p93 = por %p91, %p92
      %p94 = scmp.ne.s32.totalorder %s86, %s89
      %p95 = scmp.eq.s32.totalorder %s12, 0
      %p96 = por %p94, %p95
      %p97 = scmp.ne.s32.totalorder %s86, %s89
      %p98 = scmp.eq.s32.totalorder %s17, 1
      %p99 = por %p97, %p98
      %p100 = scmp.ne.s32.totalorder %s89, %s90
      %p101 = scmp.eq.s32.totalorder %s17, 0
      %p102 = por %p100, %p101
      %p103 = scmp.ne.s32.totalorder %s89, %s90
      %p104 = scmp.eq.s32.totalorder %s18, 1
      %p105 = por %p103, %p104
      %p107 = scmp.ne.s32.totalorder %s90, %s106
      %p108 = scmp.eq.s32.totalorder %s18, 0
      %p109 = por %p107, %p108
      %s110 = ssub.s32 %s19, %s31
      %s111 = ssub.s32 %s20, %s27
      %s112 = sor.u32 %s110, %s111
      %p113 = scmp.eq.s32.totalorder %s112, 0
      %s115 = sadd.s32 %s114, 1
      %s116 = scalar_select %p113, %s114, %s115
      %p119 = pneg %p113
      %p120 = scmp.eq.s32.totalorder %s12, 1
      %p121 = por %p119, %p120
      %p122 = scmp.ne.s32.totalorder %s114, %s117
      %p123 = scmp.eq.s32.totalorder %s12, 0
      %p124 = por %p122, %p123
      %p125 = scmp.ne.s32.totalorder %s114, %s117
      %p126 = scmp.eq.s32.totalorder %s17, 1
      %p127 = por %p125, %p126
      %p128 = scmp.ne.s32.totalorder %s117, %s118
      %p129 = scmp.eq.s32.totalorder %s17, 0
      %p130 = por %p128, %p129
      %p131 = scmp.ne.s32.totalorder %s117, %s118
      %p132 = scmp.eq.s32.totalorder %s18, 1
      %p133 = por %p131, %p132
      %p135 = scmp.ne.s32.totalorder %s118, %s134
      %p136 = scmp.eq.s32.totalorder %s18, 0
      %p137 = por %p135, %p136
      %p138 = scmp.le.s32.totalorder 1, %s12
      %p139 = scmp.lt.s32.totalorder %s12, 3
      %p140 = pnand %p138, %p139
      %p141 = pneg %p140
      // Predicated region
      $region9: #{tpu_custom_call.1} parent=5 // pred_check
        _
      $region10: #{tpu_custom_call.1} parent=5 // pred_check_branch
        %143 = sbr.rel (%p140) target = $region12
      $region11: #{tpu_custom_call.1} parent=5 // pred_region
        %s144 = ssub.s32 %s12, 1
        // Predicated region
        $region13: #{tpu_custom_call.1} parent=11 // pred_check
          %p145 = pneg %p50
        $region14: #{tpu_custom_call.1} parent=11 // pred_check_branch
          %147 = sbr.rel (%p145) target = $region16
        $region15: #{tpu_custom_call.1} parent=11 // pred_region
          %p148 = scmp.lt.s32.totalorder %s21, 0
          %s149 = scalar_select %p148, %s21, 0
          %s150 = smul.addr %s149, 256
          %s151 = smul.addr %s150, 8
          %s152 = scalar_lea.vmem %s0, %s151
        $region16: #{tpu_custom_call.1} parent=11 // pred_fallthru
          _
        // Predicated region
        $region17: #{tpu_custom_call.1} parent=11 // pred_check
          %p153 = pneg %p76
        $region18: #{tpu_custom_call.1} parent=11 // pred_check_branch
          %155 = sbr.rel (%p153) target = $region20
        $region19: #{tpu_custom_call.1} parent=11 // pred_region
          %p156 = scmp.lt.s32.totalorder %s21, 0
          %s157 = scalar_select %p156, %s21, 0
          %s158 = smul.addr %s157, 256
          %s159 = smul.addr %s158, 8
          %s160 = scalar_lea.vmem %s1, %s159
        $region20: #{tpu_custom_call.1} parent=11 // pred_fallthru
          _
      $region12: #{tpu_custom_call.1} parent=5 // pred_fallthru
        _
      %p161 = scmp.lt.s32.totalorder %s12, 2
      // Predicated region
      $region21: #{tpu_custom_call.1} parent=5 // pred_check
        %p162 = pneg %p161
      $region22: #{tpu_custom_call.1} parent=5 // pred_check_branch
        %164 = sbr.rel (%p162) target = $region24
      $region23: #{tpu_custom_call.1} parent=5 // pred_region
        // Predicated region
        $region25: #{tpu_custom_call.1} parent=23 // pred_check
          %p165 = pneg %p96
        $region26: #{tpu_custom_call.1} parent=23 // pred_check_branch
          %167 = sbr.rel (%p165) target = $region28
        $region27: #{tpu_custom_call.1} parent=23 // pred_region
          %s168 = sand.u32 %s86, 1
          %s169 = scalar_lea.sflag [#allocation4], %s168
          %s170 = sand.u32 %s86, 1
          %s171 = smul.addr %s170, 4096
          %s172 = scalar_lea.vmem [#allocation3], %s171
          %s173 = smul.u32 64, %s20
          %s175 = ssub.s32 65536, 65536
          %176 = vsyncadd %s169, %s175
          %s177 = smul.addr %s173, 8
          %s178 = smul.addr %s177, 128
          %s179 = scalar_lea.hbm %s2, %s178
          %s180 = sshll.u32 %s172, 4
          %s181 = int_to_ptr.vmem [resolvable:$true] %s180
          %186 = dma.hbm_to_vmem [thread:$0]  %s179, 65536, %s181, %s169, 1024, 1024, 64
        $region28: #{tpu_custom_call.1} parent=23 // pred_fallthru
          _
      $region24: #{tpu_custom_call.1} parent=5 // pred_fallthru
        _
      %p187 = scmp.le.s32.totalorder 1, %s12
      %p188 = scmp.lt.s32.totalorder %s12, 3
      %p189 = pnand %p187, %p188
      %p190 = pneg %p189
      // Predicated region
      $region29: #{tpu_custom_call.1} parent=5 // pred_check
        _
      $region30: #{tpu_custom_call.1} parent=5 // pred_check_branch
        %192 = sbr.rel (%p189) target = $region32
      $region31: #{tpu_custom_call.1} parent=5 // pred_region
        %s193 = ssub.s32 %s12, 1
        %s194 = sand.u32 %s89, 1
        %s195 = scalar_lea.sflag [#allocation4], %s194
        %s196 = sand.u32 %s89, 1
        %s197 = smul.addr %s196, 4096
        %s198 = scalar_lea.vmem [#allocation3], %s197
        // Predicated region
        $region33: #{tpu_custom_call.1} parent=31 // pred_check
          %p199 = pneg %p102
        $region34: #{tpu_custom_call.1} parent=31 // pred_check_branch
          %201 = sbr.rel (%p199) target = $region36
        $region35: #{tpu_custom_call.1} parent=31 // pred_region
          %202 = dma.done %s195, 65536
        $region36: #{tpu_custom_call.1} parent=31 // pred_fallthru
          _
        %p203 = scmp.lt.s32.totalorder %s21, 0
        %s204 = scalar_select %p203, %s21, 0
        %s205 = smul.addr %s204, 256
        %s206 = smul.addr %s205, 8
        %s207 = scalar_lea.vmem %s0, %s206
        %p208 = pneg %p50
        %p209 = pneg %p47
        %p210 = scmp.lt.s32.totalorder %s21, 0
        %s211 = scalar_select %p210, %s21, 0
        %s212 = smul.addr %s211, 256
        %s213 = smul.addr %s212, 8
        %s214 = scalar_lea.vmem %s1, %s213
        %p215 = pneg %p76
        %p216 = pneg %p73
        %s217 = sand.u32 %s89, 1
        %s218 = scalar_lea.sflag [#allocation4], %s217
        %s219 = sand.u32 %s89, 1
        %s220 = smul.addr %s219, 4096
        %s221 = scalar_lea.vmem [#allocation3], %s220
        %p222 = pneg %p102
        %p223 = pneg %p99
        %p224 = pneg %p130
        %p225 = pneg %p127
        %s226 = smul.u32 64, %s22
        %p227 = scmp.lt.s32.totalorder %s21, 0
        %s228 = scalar_select %p227, %s21, 0
        %p229 = scmp.lt.s32.totalorder %s226, 127
        %s230 = scalar_select %p229, %s226, 127
        %s231 = smul.addr %s230, 2
        %s232 = smul.addr %s228, 256
        %s233 = sadd.s32 %s231, %s232
        %s234 = smul.addr %s233, 8
        %s235 = scalar_lea.vmem %s3, %s234
        %p236 = scmp.lt.s32.totalorder %s21, 0
        %s237 = scalar_select %p236, %s21, 0
        %s238 = smul.addr %s237, 256
        %s239 = smul.addr %s238, 8
        %s240 = scalar_lea.vmem %s0, %s239
        %p241 = scmp.lt.s32.totalorder %s21, 0
        %s242 = scalar_select %p241, %s21, 0
        %s243 = smul.addr %s242, 256
        %s244 = smul.addr %s243, 8
        %s245 = scalar_lea.vmem %s1, %s244
        %s246 = smul.u32 64, %s22
        %s247 = smul.u32 64, %s22
        %p248 = scmp.lt.s32.totalorder %s21, 0
        %s249 = scalar_select %p248, %s21, 0
        %p250 = scmp.lt.s32.totalorder %s247, 127
        %s251 = scalar_select %p250, %s247, 127
        %s252 = smul.addr %s251, 2
        %s253 = smul.addr %s249, 256
        %s254 = sadd.s32 %s252, %s253
        %s255 = smul.addr %s254, 8
        %s256 = scalar_lea.vmem %s3, %s255
        %s257 = smul.u32 64, %s22
        %p258 = scmp.eq.s32.totalorder %s22, 0
        // Predicated region
        $region37: #{tpu_custom_call.1} parent=31 // pred_check
          %p259 = pneg %p258
        $region38: #{tpu_custom_call.1} parent=31 // pred_check_branch
          %261 = sbr.rel (%p259) target = $region40
        $region39: #{tpu_custom_call.1} parent=31 // pred_region
          %v262 = vld [vmem:[%s240] sm:$0xff]
          %v263 = vld [vmem:[%s240 + $0x8] sm:$0xff]
          %v264 = vld [vmem:[%s240 + $0x10] sm:$0xff]
          %v265 = vld [vmem:[%s240 + $0x18] sm:$0xff]
          %v266 = vld [vmem:[%s240 + $0x20] sm:$0xff]
          %v267 = vld [vmem:[%s240 + $0x28] sm:$0xff]
          %v268 = vld [vmem:[%s240 + $0x30] sm:$0xff]
          %v269 = vld [vmem:[%s240 + $0x38] sm:$0xff]
          %v270 = vld [vmem:[%s240 + $0x40] sm:$0xff]
          %v271 = vld [vmem:[%s240 + $0x48] sm:$0xff]
          %v272 = vld [vmem:[%s240 + $0x50] sm:$0xff]
          %v273 = vld [vmem:[%s240 + $0x58] sm:$0xff]
          %v274 = vld [vmem:[%s240 + $0x60] sm:$0xff]
          %v275 = vld [vmem:[%s240 + $0x68] sm:$0xff]
          %v276 = vld [vmem:[%s240 + $0x70] sm:$0xff]
          %v277 = vld [vmem:[%s240 + $0x78] sm:$0xff]
          %v278 = vld [vmem:[%s240 + $0x80] sm:$0xff]
          %v279 = vld [vmem:[%s240 + $0x88] sm:$0xff]
          %v280 = vld [vmem:[%s240 + $0x90] sm:$0xff]
          %v281 = vld [vmem:[%s240 + $0x98] sm:$0xff]
          %v282 = vld [vmem:[%s240 + $0xa0] sm:$0xff]
          %v283 = vld [vmem:[%s240 + $0xa8] sm:$0xff]
          %v284 = vld [vmem:[%s240 + $0xb0] sm:$0xff]
          %v285 = vld [vmem:[%s240 + $0xb8] sm:$0xff]
          %v286 = vld [vmem:[%s240 + $0xc0] sm:$0xff]
          %v287 = vld [vmem:[%s240 + $0xc8] sm:$0xff]
          %v288 = vld [vmem:[%s240 + $0xd0] sm:$0xff]
          %v289 = vld [vmem:[%s240 + $0xd8] sm:$0xff]
          %v290 = vld [vmem:[%s240 + $0xe0] sm:$0xff]
          %v291 = vld [vmem:[%s240 + $0xe8] sm:$0xff]
          %v292 = vld [vmem:[%s240 + $0xf0] sm:$0xff]
          %v293 = vld [vmem:[%s240 + $0xf8] sm:$0xff]
          %v294 = vld [vmem:[%s240 + $0x100] sm:$0xff]
          %v295 = vld [vmem:[%s240 + $0x108] sm:$0xff]
          %v296 = vld [vmem:[%s240 + $0x110] sm:$0xff]
          %v297 = vld [vmem:[%s240 + $0x118] sm:$0xff]
          %v298 = vld [vmem:[%s240 + $0x120] sm:$0xff]
          %v299 = vld [vmem:[%s240 + $0x128] sm:$0xff]
          %v300 = vld [vmem:[%s240 + $0x130] sm:$0xff]
          %v301 = vld [vmem:[%s240 + $0x138] sm:$0xff]
          %v302 = vld [vmem:[%s240 + $0x140] sm:$0xff]
          %v303 = vld [vmem:[%s240 + $0x148] sm:$0xff]
          %v304 = vld [vmem:[%s240 + $0x150] sm:$0xff]
          %v305 = vld [vmem:[%s240 + $0x158] sm:$0xff]
          %v306 = vld [vmem:[%s240 + $0x160] sm:$0xff]
          %v307 = vld [vmem:[%s240 + $0x168] sm:$0xff]
          %v308 = vld [vmem:[%s240 + $0x170] sm:$0xff]
          %v309 = vld [vmem:[%s240 + $0x178] sm:$0xff]
          %v310 = vld [vmem:[%s240 + $0x180] sm:$0xff]
          %v311 = vld [vmem:[%s240 + $0x188] sm:$0xff]
          %v312 = vld [vmem:[%s240 + $0x190] sm:$0xff]
          %v313 = vld [vmem:[%s240 + $0x198] sm:$0xff]
          %v314 = vld [vmem:[%s240 + $0x1a0] sm:$0xff]
          %v315 = vld [vmem:[%s240 + $0x1a8] sm:$0xff]
          %v316 = vld [vmem:[%s240 + $0x1b0] sm:$0xff]
          %v317 = vld [vmem:[%s240 + $0x1b8] sm:$0xff]
          %v318 = vld [vmem:[%s240 + $0x1c0] sm:$0xff]
          %v319 = vld [vmem:[%s240 + $0x1c8] sm:$0xff]
          %v320 = vld [vmem:[%s240 + $0x1d0] sm:$0xff]
          %v321 = vld [vmem:[%s240 + $0x1d8] sm:$0xff]
          %v322 = vld [vmem:[%s240 + $0x1e0] sm:$0xff]
          %v323 = vld [vmem:[%s240 + $0x1e8] sm:$0xff]
          %v324 = vld [vmem:[%s240 + $0x1f0] sm:$0xff]
          %v325 = vld [vmem:[%s240 + $0x1f8] sm:$0xff]
          %v326 = vld [vmem:[%s240 + $0x200] sm:$0xff]
          %v327 = vld [vmem:[%s240 + $0x208] sm:$0xff]
          %v328 = vld [vmem:[%s240 + $0x210] sm:$0xff]
          %v329 = vld [vmem:[%s240 + $0x218] sm:$0xff]
          %v330 = vld [vmem:[%s240 + $0x220] sm:$0xff]
          %v331 = vld [vmem:[%s240 + $0x228] sm:$0xff]
          %v332 = vld [vmem:[%s240 + $0x230] sm:$0xff]
          %v333 = vld [vmem:[%s240 + $0x238] sm:$0xff]
          %v334 = vld [vmem:[%s240 + $0x240] sm:$0xff]
          %v335 = vld [vmem:[%s240 + $0x248] sm:$0xff]
          %v336 = vld [vmem:[%s240 + $0x250] sm:$0xff]
          %v337 = vld [vmem:[%s240 + $0x258] sm:$0xff]
          %v338 = vld [vmem:[%s240 + $0x260] sm:$0xff]
          %v339 = vld [vmem:[%s240 + $0x268] sm:$0xff]
          %v340 = vld [vmem:[%s240 + $0x270] sm:$0xff]
          %v341 = vld [vmem:[%s240 + $0x278] sm:$0xff]
          %v342 = vld [vmem:[%s240 + $0x280] sm:$0xff]
          %v343 = vld [vmem:[%s240 + $0x288] sm:$0xff]
          %v344 = vld [vmem:[%s240 + $0x290] sm:$0xff]
          %v345 = vld [vmem:[%s240 + $0x298] sm:$0xff]
          %v346 = vld [vmem:[%s240 + $0x2a0] sm:$0xff]
          %v347 = vld [vmem:[%s240 + $0x2a8] sm:$0xff]
          %v348 = vld [vmem:[%s240 + $0x2b0] sm:$0xff]
          %v349 = vld [vmem:[%s240 + $0x2b8] sm:$0xff]
          %v350 = vld [vmem:[%s240 + $0x2c0] sm:$0xff]
          %v351 = vld [vmem:[%s240 + $0x2c8] sm:$0xff]
          %v352 = vld [vmem:[%s240 + $0x2d0] sm:$0xff]
          %v353 = vld [vmem:[%s240 + $0x2d8] sm:$0xff]
          %v354 = vld [vmem:[%s240 + $0x2e0] sm:$0xff]
          %v355 = vld [vmem:[%s240 + $0x2e8] sm:$0xff]
          %v356 = vld [vmem:[%s240 + $0x2f0] sm:$0xff]
          %v357 = vld [vmem:[%s240 + $0x2f8] sm:$0xff]
          %v358 = vld [vmem:[%s240 + $0x300] sm:$0xff]
          %v359 = vld [vmem:[%s240 + $0x308] sm:$0xff]
          %v360 = vld [vmem:[%s240 + $0x310] sm:$0xff]
          %v361 = vld [vmem:[%s240 + $0x318] sm:$0xff]
          %v362 = vld [vmem:[%s240 + $0x320] sm:$0xff]
          %v363 = vld [vmem:[%s240 + $0x328] sm:$0xff]
          %v364 = vld [vmem:[%s240 + $0x330] sm:$0xff]
          %v365 = vld [vmem:[%s240 + $0x338] sm:$0xff]
          %v366 = vld [vmem:[%s240 + $0x340] sm:$0xff]
          %v367 = vld [vmem:[%s240 + $0x348] sm:$0xff]
          %v368 = vld [vmem:[%s240 + $0x350] sm:$0xff]
          %v369 = vld [vmem:[%s240 + $0x358] sm:$0xff]
          %v370 = vld [vmem:[%s240 + $0x360] sm:$0xff]
          %v371 = vld [vmem:[%s240 + $0x368] sm:$0xff]
          %v372 = vld [vmem:[%s240 + $0x370] sm:$0xff]
          %v373 = vld [vmem:[%s240 + $0x378] sm:$0xff]
          %v374 = vld [vmem:[%s240 + $0x380] sm:$0xff]
          %v375 = vld [vmem:[%s240 + $0x388] sm:$0xff]
          %v376 = vld [vmem:[%s240 + $0x390] sm:$0xff]
          %v377 = vld [vmem:[%s240 + $0x398] sm:$0xff]
          %v378 = vld [vmem:[%s240 + $0x3a0] sm:$0xff]
          %v379 = vld [vmem:[%s240 + $0x3a8] sm:$0xff]
          %v380 = vld [vmem:[%s240 + $0x3b0] sm:$0xff]
          %v381 = vld [vmem:[%s240 + $0x3b8] sm:$0xff]
          %v382 = vld [vmem:[%s240 + $0x3c0] sm:$0xff]
          %v383 = vld [vmem:[%s240 + $0x3c8] sm:$0xff]
          %v384 = vld [vmem:[%s240 + $0x3d0] sm:$0xff]
          %v385 = vld [vmem:[%s240 + $0x3d8] sm:$0xff]
          %v386 = vld [vmem:[%s240 + $0x3e0] sm:$0xff]
          %v387 = vld [vmem:[%s240 + $0x3e8] sm:$0xff]
          %v388 = vld [vmem:[%s240 + $0x3f0] sm:$0xff]
          %v389 = vld [vmem:[%s240 + $0x3f8] sm:$0xff]
          %v390 = vld [vmem:[%s240 + $0x400] sm:$0xff]
          %v391 = vld [vmem:[%s240 + $0x408] sm:$0xff]
          %v392 = vld [vmem:[%s240 + $0x410] sm:$0xff]
          %v393 = vld [vmem:[%s240 + $0x418] sm:$0xff]
          %v394 = vld [vmem:[%s240 + $0x420] sm:$0xff]
          %v395 = vld [vmem:[%s240 + $0x428] sm:$0xff]
          %v396 = vld [vmem:[%s240 + $0x430] sm:$0xff]
          %v397 = vld [vmem:[%s240 + $0x438] sm:$0xff]
          %v398 = vld [vmem:[%s240 + $0x440] sm:$0xff]
          %v399 = vld [vmem:[%s240 + $0x448] sm:$0xff]
          %v400 = vld [vmem:[%s240 + $0x450] sm:$0xff]
          %v401 = vld [vmem:[%s240 + $0x458] sm:$0xff]
          %v402 = vld [vmem:[%s240 + $0x460] sm:$0xff]
          %v403 = vld [vmem:[%s240 + $0x468] sm:$0xff]
          %v404 = vld [vmem:[%s240 + $0x470] sm:$0xff]
          %v405 = vld [vmem:[%s240 + $0x478] sm:$0xff]
          %v406 = vld [vmem:[%s240 + $0x480] sm:$0xff]
          %v407 = vld [vmem:[%s240 + $0x488] sm:$0xff]
          %v408 = vld [vmem:[%s240 + $0x490] sm:$0xff]
          %v409 = vld [vmem:[%s240 + $0x498] sm:$0xff]
          %v410 = vld [vmem:[%s240 + $0x4a0] sm:$0xff]
          %v411 = vld [vmem:[%s240 + $0x4a8] sm:$0xff]
          %v412 = vld [vmem:[%s240 + $0x4b0] sm:$0xff]
          %v413 = vld [vmem:[%s240 + $0x4b8] sm:$0xff]
          %v414 = vld [vmem:[%s240 + $0x4c0] sm:$0xff]
          %v415 = vld [vmem:[%s240 + $0x4c8] sm:$0xff]
          %v416 = vld [vmem:[%s240 + $0x4d0] sm:$0xff]
          %v417 = vld [vmem:[%s240 + $0x4d8] sm:$0xff]
          %v418 = vld [vmem:[%s240 + $0x4e0] sm:$0xff]
          %v419 = vld [vmem:[%s240 + $0x4e8] sm:$0xff]
          %v420 = vld [vmem:[%s240 + $0x4f0] sm:$0xff]
          %v421 = vld [vmem:[%s240 + $0x4f8] sm:$0xff]
          %v422 = vld [vmem:[%s240 + $0x500] sm:$0xff]
          %v423 = vld [vmem:[%s240 + $0x508] sm:$0xff]
          %v424 = vld [vmem:[%s240 + $0x510] sm:$0xff]
          %v425 = vld [vmem:[%s240 + $0x518] sm:$0xff]
          %v426 = vld [vmem:[%s240 + $0x520] sm:$0xff]
          %v427 = vld [vmem:[%s240 + $0x528] sm:$0xff]
          %v428 = vld [vmem:[%s240 + $0x530] sm:$0xff]
          %v429 = vld [vmem:[%s240 + $0x538] sm:$0xff]
          %v430 = vld [vmem:[%s240 + $0x540] sm:$0xff]
          %v431 = vld [vmem:[%s240 + $0x548] sm:$0xff]
          %v432 = vld [vmem:[%s240 + $0x550] sm:$0xff]
          %v433 = vld [vmem:[%s240 + $0x558] sm:$0xff]
          %v434 = vld [vmem:[%s240 + $0x560] sm:$0xff]
          %v435 = vld [vmem:[%s240 + $0x568] sm:$0xff]
          %v436 = vld [vmem:[%s240 + $0x570] sm:$0xff]
          %v437 = vld [vmem:[%s240 + $0x578] sm:$0xff]
          %v438 = vld [vmem:[%s240 + $0x580] sm:$0xff]
          %v439 = vld [vmem:[%s240 + $0x588] sm:$0xff]
          %v440 = vld [vmem:[%s240 + $0x590] sm:$0xff]
          %v441 = vld [vmem:[%s240 + $0x598] sm:$0xff]
          %v442 = vld [vmem:[%s240 + $0x5a0] sm:$0xff]
          %v443 = vld [vmem:[%s240 + $0x5a8] sm:$0xff]
          %v444 = vld [vmem:[%s240 + $0x5b0] sm:$0xff]
          %v445 = vld [vmem:[%s240 + $0x5b8] sm:$0xff]
          %v446 = vld [vmem:[%s240 + $0x5c0] sm:$0xff]
          %v447 = vld [vmem:[%s240 + $0x5c8] sm:$0xff]
          %v448 = vld [vmem:[%s240 + $0x5d0] sm:$0xff]
          %v449 = vld [vmem:[%s240 + $0x5d8] sm:$0xff]
          %v450 = vld [vmem:[%s240 + $0x5e0] sm:$0xff]
          %v451 = vld [vmem:[%s240 + $0x5e8] sm:$0xff]
          %v452 = vld [vmem:[%s240 + $0x5f0] sm:$0xff]
          %v453 = vld [vmem:[%s240 + $0x5f8] sm:$0xff]
          %v454 = vld [vmem:[%s240 + $0x600] sm:$0xff]
          %v455 = vld [vmem:[%s240 + $0x608] sm:$0xff]
          %v456 = vld [vmem:[%s240 + $0x610] sm:$0xff]
          %v457 = vld [vmem:[%s240 + $0x618] sm:$0xff]
          %v458 = vld [vmem:[%s240 + $0x620] sm:$0xff]
          %v459 = vld [vmem:[%s240 + $0x628] sm:$0xff]
          %v460 = vld [vmem:[%s240 + $0x630] sm:$0xff]
          %v461 = vld [vmem:[%s240 + $0x638] sm:$0xff]
          %v462 = vld [vmem:[%s240 + $0x640] sm:$0xff]
          %v463 = vld [vmem:[%s240 + $0x648] sm:$0xff]
          %v464 = vld [vmem:[%s240 + $0x650] sm:$0xff]
          %v465 = vld [vmem:[%s240 + $0x658] sm:$0xff]
          %v466 = vld [vmem:[%s240 + $0x660] sm:$0xff]
          %v467 = vld [vmem:[%s240 + $0x668] sm:$0xff]
          %v468 = vld [vmem:[%s240 + $0x670] sm:$0xff]
          %v469 = vld [vmem:[%s240 + $0x678] sm:$0xff]
          %v470 = vld [vmem:[%s240 + $0x680] sm:$0xff]
          %v471 = vld [vmem:[%s240 + $0x688] sm:$0xff]
          %v472 = vld [vmem:[%s240 + $0x690] sm:$0xff]
          %v473 = vld [vmem:[%s240 + $0x698] sm:$0xff]
          %v474 = vld [vmem:[%s240 + $0x6a0] sm:$0xff]
          %v475 = vld [vmem:[%s240 + $0x6a8] sm:$0xff]
          %v476 = vld [vmem:[%s240 + $0x6b0] sm:$0xff]
          %v477 = vld [vmem:[%s240 + $0x6b8] sm:$0xff]
          %v478 = vld [vmem:[%s240 + $0x6c0] sm:$0xff]
          %v479 = vld [vmem:[%s240 + $0x6c8] sm:$0xff]
          %v480 = vld [vmem:[%s240 + $0x6d0] sm:$0xff]
          %v481 = vld [vmem:[%s240 + $0x6d8] sm:$0xff]
          %v482 = vld [vmem:[%s240 + $0x6e0] sm:$0xff]
          %v483 = vld [vmem:[%s240 + $0x6e8] sm:$0xff]
          %v484 = vld [vmem:[%s240 + $0x6f0] sm:$0xff]
          %v485 = vld [vmem:[%s240 + $0x6f8] sm:$0xff]
          %v486 = vld [vmem:[%s240 + $0x700] sm:$0xff]
          %v487 = vld [vmem:[%s240 + $0x708] sm:$0xff]
          %v488 = vld [vmem:[%s240 + $0x710] sm:$0xff]
          %v489 = vld [vmem:[%s240 + $0x718] sm:$0xff]
          %v490 = vld [vmem:[%s240 + $0x720] sm:$0xff]
          %v491 = vld [vmem:[%s240 + $0x728] sm:$0xff]
          %v492 = vld [vmem:[%s240 + $0x730] sm:$0xff]
          %v493 = vld [vmem:[%s240 + $0x738] sm:$0xff]
          %v494 = vld [vmem:[%s240 + $0x740] sm:$0xff]
          %v495 = vld [vmem:[%s240 + $0x748] sm:$0xff]
          %v496 = vld [vmem:[%s240 + $0x750] sm:$0xff]
          %v497 = vld [vmem:[%s240 + $0x758] sm:$0xff]
          %v498 = vld [vmem:[%s240 + $0x760] sm:$0xff]
          %v499 = vld [vmem:[%s240 + $0x768] sm:$0xff]
          %v500 = vld [vmem:[%s240 + $0x770] sm:$0xff]
          %v501 = vld [vmem:[%s240 + $0x778] sm:$0xff]
          %v502 = vld [vmem:[%s240 + $0x780] sm:$0xff]
          %v503 = vld [vmem:[%s240 + $0x788] sm:$0xff]
          %v504 = vld [vmem:[%s240 + $0x790] sm:$0xff]
          %v505 = vld [vmem:[%s240 + $0x798] sm:$0xff]
          %v506 = vld [vmem:[%s240 + $0x7a0] sm:$0xff]
          %v507 = vld [vmem:[%s240 + $0x7a8] sm:$0xff]
          %v508 = vld [vmem:[%s240 + $0x7b0] sm:$0xff]
          %v509 = vld [vmem:[%s240 + $0x7b8] sm:$0xff]
          %v510 = vld [vmem:[%s240 + $0x7c0] sm:$0xff]
          %v511 = vld [vmem:[%s240 + $0x7c8] sm:$0xff]
          %v512 = vld [vmem:[%s240 + $0x7d0] sm:$0xff]
          %v513 = vld [vmem:[%s240 + $0x7d8] sm:$0xff]
          %v514 = vld [vmem:[%s240 + $0x7e0] sm:$0xff]
          %v515 = vld [vmem:[%s240 + $0x7e8] sm:$0xff]
          %v516 = vld [vmem:[%s240 + $0x7f0] sm:$0xff]
          %v517 = vld [vmem:[%s240 + $0x7f8] sm:$0xff]
          %v518 = vld [vmem:[%s245] sm:$0xff]
          %v519 = vld [vmem:[%s245 + $0x8] sm:$0xff]
          %v520 = vld [vmem:[%s245 + $0x10] sm:$0xff]
          %v521 = vld [vmem:[%s245 + $0x18] sm:$0xff]
          %v522 = vld [vmem:[%s245 + $0x20] sm:$0xff]
          %v523 = vld [vmem:[%s245 + $0x28] sm:$0xff]
          %v524 = vld [vmem:[%s245 + $0x30] sm:$0xff]
          %v525 = vld [vmem:[%s245 + $0x38] sm:$0xff]
          %v526 = vld [vmem:[%s245 + $0x40] sm:$0xff]
          %v527 = vld [vmem:[%s245 + $0x48] sm:$0xff]
          %v528 = vld [vmem:[%s245 + $0x50] sm:$0xff]
          %v529 = vld [vmem:[%s245 + $0x58] sm:$0xff]
          %v530 = vld [vmem:[%s245 + $0x60] sm:$0xff]
          %v531 = vld [vmem:[%s245 + $0x68] sm:$0xff]
          %v532 = vld [vmem:[%s245 + $0x70] sm:$0xff]
          %v533 = vld [vmem:[%s245 + $0x78] sm:$0xff]
          %v534 = vld [vmem:[%s245 + $0x80] sm:$0xff]
          %v535 = vld [vmem:[%s245 + $0x88] sm:$0xff]
          %v536 = vld [vmem:[%s245 + $0x90] sm:$0xff]
          %v537 = vld [vmem:[%s245 + $0x98] sm:$0xff]
          %v538 = vld [vmem:[%s245 + $0xa0] sm:$0xff]
          %v539 = vld [vmem:[%s245 + $0xa8] sm:$0xff]
          %v540 = vld [vmem:[%s245 + $0xb0] sm:$0xff]
          %v541 = vld [vmem:[%s245 + $0xb8] sm:$0xff]
          %v542 = vld [vmem:[%s245 + $0xc0] sm:$0xff]
          %v543 = vld [vmem:[%s245 + $0xc8] sm:$0xff]
          %v544 = vld [vmem:[%s245 + $0xd0] sm:$0xff]
          %v545 = vld [vmem:[%s245 + $0xd8] sm:$0xff]
          %v546 = vld [vmem:[%s245 + $0xe0] sm:$0xff]
          %v547 = vld [vmem:[%s245 + $0xe8] sm:$0xff]
          %v548 = vld [vmem:[%s245 + $0xf0] sm:$0xff]
          %v549 = vld [vmem:[%s245 + $0xf8] sm:$0xff]
          %v550 = vld [vmem:[%s245 + $0x100] sm:$0xff]
          %v551 = vld [vmem:[%s245 + $0x108] sm:$0xff]
          %v552 = vld [vmem:[%s245 + $0x110] sm:$0xff]
          %v553 = vld [vmem:[%s245 + $0x118] sm:$0xff]
          %v554 = vld [vmem:[%s245 + $0x120] sm:$0xff]
          %v555 = vld [vmem:[%s245 + $0x128] sm:$0xff]
          %v556 = vld [vmem:[%s245 + $0x130] sm:$0xff]
          %v557 = vld [vmem:[%s245 + $0x138] sm:$0xff]
          %v558 = vld [vmem:[%s245 + $0x140] sm:$0xff]
          %v559 = vld [vmem:[%s245 + $0x148] sm:$0xff]
          %v560 = vld [vmem:[%s245 + $0x150] sm:$0xff]
          %v561 = vld [vmem:[%s245 + $0x158] sm:$0xff]
          %v562 = vld [vmem:[%s245 + $0x160] sm:$0xff]
          %v563 = vld [vmem:[%s245 + $0x168] sm:$0xff]
          %v564 = vld [vmem:[%s245 + $0x170] sm:$0xff]
          %v565 = vld [vmem:[%s245 + $0x178] sm:$0xff]
          %v566 = vld [vmem:[%s245 + $0x180] sm:$0xff]
          %v567 = vld [vmem:[%s245 + $0x188] sm:$0xff]
          %v568 = vld [vmem:[%s245 + $0x190] sm:$0xff]
          %v569 = vld [vmem:[%s245 + $0x198] sm:$0xff]
          %v570 = vld [vmem:[%s245 + $0x1a0] sm:$0xff]
          %v571 = vld [vmem:[%s245 + $0x1a8] sm:$0xff]
          %v572 = vld [vmem:[%s245 + $0x1b0] sm:$0xff]
          %v573 = vld [vmem:[%s245 + $0x1b8] sm:$0xff]
          %v574 = vld [vmem:[%s245 + $0x1c0] sm:$0xff]
          %v575 = vld [vmem:[%s245 + $0x1c8] sm:$0xff]
          %v576 = vld [vmem:[%s245 + $0x1d0] sm:$0xff]
          %v577 = vld [vmem:[%s245 + $0x1d8] sm:$0xff]
          %v578 = vld [vmem:[%s245 + $0x1e0] sm:$0xff]
          %v579 = vld [vmem:[%s245 + $0x1e8] sm:$0xff]
          %v580 = vld [vmem:[%s245 + $0x1f0] sm:$0xff]
          %v581 = vld [vmem:[%s245 + $0x1f8] sm:$0xff]
          %v582 = vld [vmem:[%s245 + $0x200] sm:$0xff]
          %v583 = vld [vmem:[%s245 + $0x208] sm:$0xff]
          %v584 = vld [vmem:[%s245 + $0x210] sm:$0xff]
          %v585 = vld [vmem:[%s245 + $0x218] sm:$0xff]
          %v586 = vld [vmem:[%s245 + $0x220] sm:$0xff]
          %v587 = vld [vmem:[%s245 + $0x228] sm:$0xff]
          %v588 = vld [vmem:[%s245 + $0x230] sm:$0xff]
          %v589 = vld [vmem:[%s245 + $0x238] sm:$0xff]
          %v590 = vld [vmem:[%s245 + $0x240] sm:$0xff]
          %v591 = vld [vmem:[%s245 + $0x248] sm:$0xff]
          %v592 = vld [vmem:[%s245 + $0x250] sm:$0xff]
          %v593 = vld [vmem:[%s245 + $0x258] sm:$0xff]
          %v594 = vld [vmem:[%s245 + $0x260] sm:$0xff]
          %v595 = vld [vmem:[%s245 + $0x268] sm:$0xff]
          %v596 = vld [vmem:[%s245 + $0x270] sm:$0xff]
          %v597 = vld [vmem:[%s245 + $0x278] sm:$0xff]
          %v598 = vld [vmem:[%s245 + $0x280] sm:$0xff]
          %v599 = vld [vmem:[%s245 + $0x288] sm:$0xff]
          %v600 = vld [vmem:[%s245 + $0x290] sm:$0xff]
          %v601 = vld [vmem:[%s245 + $0x298] sm:$0xff]
          %v602 = vld [vmem:[%s245 + $0x2a0] sm:$0xff]
          %v603 = vld [vmem:[%s245 + $0x2a8] sm:$0xff]
          %v604 = vld [vmem:[%s245 + $0x2b0] sm:$0xff]
          %v605 = vld [vmem:[%s245 + $0x2b8] sm:$0xff]
          %v606 = vld [vmem:[%s245 + $0x2c0] sm:$0xff]
          %v607 = vld [vmem:[%s245 + $0x2c8] sm:$0xff]
          %v608 = vld [vmem:[%s245 + $0x2d0] sm:$0xff]
          %v609 = vld [vmem:[%s245 + $0x2d8] sm:$0xff]
          %v610 = vld [vmem:[%s245 + $0x2e0] sm:$0xff]
          %v611 = vld [vmem:[%s245 + $0x2e8] sm:$0xff]
          %v612 = vld [vmem:[%s245 + $0x2f0] sm:$0xff]
          %v613 = vld [vmem:[%s245 + $0x2f8] sm:$0xff]
          %v614 = vld [vmem:[%s245 + $0x300] sm:$0xff]
          %v615 = vld [vmem:[%s245 + $0x308] sm:$0xff]
          %v616 = vld [vmem:[%s245 + $0x310] sm:$0xff]
          %v617 = vld [vmem:[%s245 + $0x318] sm:$0xff]
          %v618 = vld [vmem:[%s245 + $0x320] sm:$0xff]
          %v619 = vld [vmem:[%s245 + $0x328] sm:$0xff]
          %v620 = vld [vmem:[%s245 + $0x330] sm:$0xff]
          %v621 = vld [vmem:[%s245 + $0x338] sm:$0xff]
          %v622 = vld [vmem:[%s245 + $0x340] sm:$0xff]
          %v623 = vld [vmem:[%s245 + $0x348] sm:$0xff]
          %v624 = vld [vmem:[%s245 + $0x350] sm:$0xff]
          %v625 = vld [vmem:[%s245 + $0x358] sm:$0xff]
          %v626 = vld [vmem:[%s245 + $0x360] sm:$0xff]
          %v627 = vld [vmem:[%s245 + $0x368] sm:$0xff]
          %v628 = vld [vmem:[%s245 + $0x370] sm:$0xff]
          %v629 = vld [vmem:[%s245 + $0x378] sm:$0xff]
          %v630 = vld [vmem:[%s245 + $0x380] sm:$0xff]
          %v631 = vld [vmem:[%s245 + $0x388] sm:$0xff]
          %v632 = vld [vmem:[%s245 + $0x390] sm:$0xff]
          %v633 = vld [vmem:[%s245 + $0x398] sm:$0xff]
          %v634 = vld [vmem:[%s245 + $0x3a0] sm:$0xff]
          %v635 = vld [vmem:[%s245 + $0x3a8] sm:$0xff]
          %v636 = vld [vmem:[%s245 + $0x3b0] sm:$0xff]
          %v637 = vld [vmem:[%s245 + $0x3b8] sm:$0xff]
          %v638 = vld [vmem:[%s245 + $0x3c0] sm:$0xff]
          %v639 = vld [vmem:[%s245 + $0x3c8] sm:$0xff]
          %v640 = vld [vmem:[%s245 + $0x3d0] sm:$0xff]
          %v641 = vld [vmem:[%s245 + $0x3d8] sm:$0xff]
          %v642 = vld [vmem:[%s245 + $0x3e0] sm:$0xff]
          %v643 = vld [vmem:[%s245 + $0x3e8] sm:$0xff]
          %v644 = vld [vmem:[%s245 + $0x3f0] sm:$0xff]
          %v645 = vld [vmem:[%s245 + $0x3f8] sm:$0xff]
          %v646 = vld [vmem:[%s245 + $0x400] sm:$0xff]
          %v647 = vld [vmem:[%s245 + $0x408] sm:$0xff]
          %v648 = vld [vmem:[%s245 + $0x410] sm:$0xff]
          %v649 = vld [vmem:[%s245 + $0x418] sm:$0xff]
          %v650 = vld [vmem:[%s245 + $0x420] sm:$0xff]
          %v651 = vld [vmem:[%s245 + $0x428] sm:$0xff]
          %v652 = vld [vmem:[%s245 + $0x430] sm:$0xff]
          %v653 = vld [vmem:[%s245 + $0x438] sm:$0xff]
          %v654 = vld [vmem:[%s245 + $0x440] sm:$0xff]
          %v655 = vld [vmem:[%s245 + $0x448] sm:$0xff]
          %v656 = vld [vmem:[%s245 + $0x450] sm:$0xff]
          %v657 = vld [vmem:[%s245 + $0x458] sm:$0xff]
          %v658 = vld [vmem:[%s245 + $0x460] sm:$0xff]
          %v659 = vld [vmem:[%s245 + $0x468] sm:$0xff]
          %v660 = vld [vmem:[%s245 + $0x470] sm:$0xff]
          %v661 = vld [vmem:[%s245 + $0x478] sm:$0xff]
          %v662 = vld [vmem:[%s245 + $0x480] sm:$0xff]
          %v663 = vld [vmem:[%s245 + $0x488] sm:$0xff]
          %v664 = vld [vmem:[%s245 + $0x490] sm:$0xff]
          %v665 = vld [vmem:[%s245 + $0x498] sm:$0xff]
          %v666 = vld [vmem:[%s245 + $0x4a0] sm:$0xff]
          %v667 = vld [vmem:[%s245 + $0x4a8] sm:$0xff]
          %v668 = vld [vmem:[%s245 + $0x4b0] sm:$0xff]
          %v669 = vld [vmem:[%s245 + $0x4b8] sm:$0xff]
          %v670 = vld [vmem:[%s245 + $0x4c0] sm:$0xff]
          %v671 = vld [vmem:[%s245 + $0x4c8] sm:$0xff]
          %v672 = vld [vmem:[%s245 + $0x4d0] sm:$0xff]
          %v673 = vld [vmem:[%s245 + $0x4d8] sm:$0xff]
          %v674 = vld [vmem:[%s245 + $0x4e0] sm:$0xff]
          %v675 = vld [vmem:[%s245 + $0x4e8] sm:$0xff]
          %v676 = vld [vmem:[%s245 + $0x4f0] sm:$0xff]
          %v677 = vld [vmem:[%s245 + $0x4f8] sm:$0xff]
          %v678 = vld [vmem:[%s245 + $0x500] sm:$0xff]
          %v679 = vld [vmem:[%s245 + $0x508] sm:$0xff]
          %v680 = vld [vmem:[%s245 + $0x510] sm:$0xff]
          %v681 = vld [vmem:[%s245 + $0x518] sm:$0xff]
          %v682 = vld [vmem:[%s245 + $0x520] sm:$0xff]
          %v683 = vld [vmem:[%s245 + $0x528] sm:$0xff]
          %v684 = vld [vmem:[%s245 + $0x530] sm:$0xff]
          %v685 = vld [vmem:[%s245 + $0x538] sm:$0xff]
          %v686 = vld [vmem:[%s245 + $0x540] sm:$0xff]
          %v687 = vld [vmem:[%s245 + $0x548] sm:$0xff]
          %v688 = vld [vmem:[%s245 + $0x550] sm:$0xff]
          %v689 = vld [vmem:[%s245 + $0x558] sm:$0xff]
          %v690 = vld [vmem:[%s245 + $0x560] sm:$0xff]
          %v691 = vld [vmem:[%s245 + $0x568] sm:$0xff]
          %v692 = vld [vmem:[%s245 + $0x570] sm:$0xff]
          %v693 = vld [vmem:[%s245 + $0x578] sm:$0xff]
          %v694 = vld [vmem:[%s245 + $0x580] sm:$0xff]
          %v695 = vld [vmem:[%s245 + $0x588] sm:$0xff]
          %v696 = vld [vmem:[%s245 + $0x590] sm:$0xff]
          %v697 = vld [vmem:[%s245 + $0x598] sm:$0xff]
          %v698 = vld [vmem:[%s245 + $0x5a0] sm:$0xff]
          %v699 = vld [vmem:[%s245 + $0x5a8] sm:$0xff]
          %v700 = vld [vmem:[%s245 + $0x5b0] sm:$0xff]
          %v701 = vld [vmem:[%s245 + $0x5b8] sm:$0xff]
          %v702 = vld [vmem:[%s245 + $0x5c0] sm:$0xff]
          %v703 = vld [vmem:[%s245 + $0x5c8] sm:$0xff]
          %v704 = vld [vmem:[%s245 + $0x5d0] sm:$0xff]
          %v705 = vld [vmem:[%s245 + $0x5d8] sm:$0xff]
          %v706 = vld [vmem:[%s245 + $0x5e0] sm:$0xff]
          %v707 = vld [vmem:[%s245 + $0x5e8] sm:$0xff]
          %v708 = vld [vmem:[%s245 + $0x5f0] sm:$0xff]
          %v709 = vld [vmem:[%s245 + $0x5f8] sm:$0xff]
          %v710 = vld [vmem:[%s245 + $0x600] sm:$0xff]
          %v711 = vld [vmem:[%s245 + $0x608] sm:$0xff]
          %v712 = vld [vmem:[%s245 + $0x610] sm:$0xff]
          %v713 = vld [vmem:[%s245 + $0x618] sm:$0xff]
          %v714 = vld [vmem:[%s245 + $0x620] sm:$0xff]
          %v715 = vld [vmem:[%s245 + $0x628] sm:$0xff]
          %v716 = vld [vmem:[%s245 + $0x630] sm:$0xff]
          %v717 = vld [vmem:[%s245 + $0x638] sm:$0xff]
          %v718 = vld [vmem:[%s245 + $0x640] sm:$0xff]
          %v719 = vld [vmem:[%s245 + $0x648] sm:$0xff]
          %v720 = vld [vmem:[%s245 + $0x650] sm:$0xff]
          %v721 = vld [vmem:[%s245 + $0x658] sm:$0xff]
          %v722 = vld [vmem:[%s245 + $0x660] sm:$0xff]
          %v723 = vld [vmem:[%s245 + $0x668] sm:$0xff]
          %v724 = vld [vmem:[%s245 + $0x670] sm:$0xff]
          %v725 = vld [vmem:[%s245 + $0x678] sm:$0xff]
          %v726 = vld [vmem:[%s245 + $0x680] sm:$0xff]
          %v727 = vld [vmem:[%s245 + $0x688] sm:$0xff]
          %v728 = vld [vmem:[%s245 + $0x690] sm:$0xff]
          %v729 = vld [vmem:[%s245 + $0x698] sm:$0xff]
          %v730 = vld [vmem:[%s245 + $0x6a0] sm:$0xff]
          %v731 = vld [vmem:[%s245 + $0x6a8] sm:$0xff]
          %v732 = vld [vmem:[%s245 + $0x6b0] sm:$0xff]
          %v733 = vld [vmem:[%s245 + $0x6b8] sm:$0xff]
          %v734 = vld [vmem:[%s245 + $0x6c0] sm:$0xff]
          %v735 = vld [vmem:[%s245 + $0x6c8] sm:$0xff]
          %v736 = vld [vmem:[%s245 + $0x6d0] sm:$0xff]
          %v737 = vld [vmem:[%s245 + $0x6d8] sm:$0xff]
          %v738 = vld [vmem:[%s245 + $0x6e0] sm:$0xff]
          %v739 = vld [vmem:[%s245 + $0x6e8] sm:$0xff]
          %v740 = vld [vmem:[%s245 + $0x6f0] sm:$0xff]
          %v741 = vld [vmem:[%s245 + $0x6f8] sm:$0xff]
          %v742 = vld [vmem:[%s245 + $0x700] sm:$0xff]
          %v743 = vld [vmem:[%s245 + $0x708] sm:$0xff]
          %v744 = vld [vmem:[%s245 + $0x710] sm:$0xff]
          %v745 = vld [vmem:[%s245 + $0x718] sm:$0xff]
          %v746 = vld [vmem:[%s245 + $0x720] sm:$0xff]
          %v747 = vld [vmem:[%s245 + $0x728] sm:$0xff]
          %v748 = vld [vmem:[%s245 + $0x730] sm:$0xff]
          %v749 = vld [vmem:[%s245 + $0x738] sm:$0xff]
          %v750 = vld [vmem:[%s245 + $0x740] sm:$0xff]
          %v751 = vld [vmem:[%s245 + $0x748] sm:$0xff]
          %v752 = vld [vmem:[%s245 + $0x750] sm:$0xff]
          %v753 = vld [vmem:[%s245 + $0x758] sm:$0xff]
          %v754 = vld [vmem:[%s245 + $0x760] sm:$0xff]
          %v755 = vld [vmem:[%s245 + $0x768] sm:$0xff]
          %v756 = vld [vmem:[%s245 + $0x770] sm:$0xff]
          %v757 = vld [vmem:[%s245 + $0x778] sm:$0xff]
          %v758 = vld [vmem:[%s245 + $0x780] sm:$0xff]
          %v759 = vld [vmem:[%s245 + $0x788] sm:$0xff]
          %v760 = vld [vmem:[%s245 + $0x790] sm:$0xff]
          %v761 = vld [vmem:[%s245 + $0x798] sm:$0xff]
          %v762 = vld [vmem:[%s245 + $0x7a0] sm:$0xff]
          %v763 = vld [vmem:[%s245 + $0x7a8] sm:$0xff]
          %v764 = vld [vmem:[%s245 + $0x7b0] sm:$0xff]
          %v765 = vld [vmem:[%s245 + $0x7b8] sm:$0xff]
          %v766 = vld [vmem:[%s245 + $0x7c0] sm:$0xff]
          %v767 = vld [vmem:[%s245 + $0x7c8] sm:$0xff]
          %v768 = vld [vmem:[%s245 + $0x7d0] sm:$0xff]
          %v769 = vld [vmem:[%s245 + $0x7d8] sm:$0xff]
          %v770 = vld [vmem:[%s245 + $0x7e0] sm:$0xff]
          %v771 = vld [vmem:[%s245 + $0x7e8] sm:$0xff]
          %v772 = vld [vmem:[%s245 + $0x7f0] sm:$0xff]
          %v773 = vld [vmem:[%s245 + $0x7f8] sm:$0xff]
          %v774 = vadd.f32 %v262, %v518
          %v775 = vadd.f32 %v263, %v519
          %v776 = vadd.f32 %v264, %v520
          %v777 = vadd.f32 %v265, %v521
          %v778 = vadd.f32 %v266, %v522
          %v779 = vadd.f32 %v267, %v523
          %v780 = vadd.f32 %v268, %v524
          %v781 = vadd.f32 %v269, %v525
          %v782 = vadd.f32 %v270, %v526
          %v783 = vadd.f32 %v271, %v527
          %v784 = vadd.f32 %v272, %v528
          %v785 = vadd.f32 %v273, %v529
          %v786 = vadd.f32 %v274, %v530
          %v787 = vadd.f32 %v275, %v531
          %v788 = vadd.f32 %v276, %v532
          %v789 = vadd.f32 %v277, %v533
          %v790 = vadd.f32 %v278, %v534
          %v791 = vadd.f32 %v279, %v535
          %v792 = vadd.f32 %v280, %v536
          %v793 = vadd.f32 %v281, %v537
          %v794 = vadd.f32 %v282, %v538
          %v795 = vadd.f32 %v283, %v539
          %v796 = vadd.f32 %v284, %v540
          %v797 = vadd.f32 %v285, %v541
          %v798 = vadd.f32 %v286, %v542
          %v799 = vadd.f32 %v287, %v543
          %v800 = vadd.f32 %v288, %v544
          %v801 = vadd.f32 %v289, %v545
          %v802 = vadd.f32 %v290, %v546
          %v803 = vadd.f32 %v291, %v547
          %v804 = vadd.f32 %v292, %v548
          %v805 = vadd.f32 %v293, %v549
          %v806 = vadd.f32 %v294, %v550
          %v807 = vadd.f32 %v295, %v551
          %v808 = vadd.f32 %v296, %v552
          %v809 = vadd.f32 %v297, %v553
          %v810 = vadd.f32 %v298, %v554
          %v811 = vadd.f32 %v299, %v555
          %v812 = vadd.f32 %v300, %v556
          %v813 = vadd.f32 %v301, %v557
          %v814 = vadd.f32 %v302, %v558
          %v815 = vadd.f32 %v303, %v559
          %v816 = vadd.f32 %v304, %v560
          %v817 = vadd.f32 %v305, %v561
          %v818 = vadd.f32 %v306, %v562
          %v819 = vadd.f32 %v307, %v563
          %v820 = vadd.f32 %v308, %v564
          %v821 = vadd.f32 %v309, %v565
          %v822 = vadd.f32 %v310, %v566
          %v823 = vadd.f32 %v311, %v567
          %v824 = vadd.f32 %v312, %v568
          %v825 = vadd.f32 %v313, %v569
          %v826 = vadd.f32 %v314, %v570
          %v827 = vadd.f32 %v315, %v571
          %v828 = vadd.f32 %v316, %v572
          %v829 = vadd.f32 %v317, %v573
          %v830 = vadd.f32 %v318, %v574
          %v831 = vadd.f32 %v319, %v575
          %v832 = vadd.f32 %v320, %v576
          %v833 = vadd.f32 %v321, %v577
          %v834 = vadd.f32 %v322, %v578
          %v835 = vadd.f32 %v323, %v579
          %v836 = vadd.f32 %v324, %v580
          %v837 = vadd.f32 %v325, %v581
          %v838 = vadd.f32 %v326, %v582
          %v839 = vadd.f32 %v327, %v583
          %v840 = vadd.f32 %v328, %v584
          %v841 = vadd.f32 %v329, %v585
          %v842 = vadd.f32 %v330, %v586
          %v843 = vadd.f32 %v331, %v587
          %v844 = vadd.f32 %v332, %v588
          %v845 = vadd.f32 %v333, %v589
          %v846 = vadd.f32 %v334, %v590
          %v847 = vadd.f32 %v335, %v591
          %v848 = vadd.f32 %v336, %v592
          %v849 = vadd.f32 %v337, %v593
          %v850 = vadd.f32 %v338, %v594
          %v851 = vadd.f32 %v339, %v595
          %v852 = vadd.f32 %v340, %v596
          %v853 = vadd.f32 %v341, %v597
          %v854 = vadd.f32 %v342, %v598
          %v855 = vadd.f32 %v343, %v599
          %v856 = vadd.f32 %v344, %v600
          %v857 = vadd.f32 %v345, %v601
          %v858 = vadd.f32 %v346, %v602
          %v859 = vadd.f32 %v347, %v603
          %v860 = vadd.f32 %v348, %v604
          %v861 = vadd.f32 %v349, %v605
          %v862 = vadd.f32 %v350, %v606
          %v863 = vadd.f32 %v351, %v607
          %v864 = vadd.f32 %v352, %v608
          %v865 = vadd.f32 %v353, %v609
          %v866 = vadd.f32 %v354, %v610
          %v867 = vadd.f32 %v355, %v611
          %v868 = vadd.f32 %v356, %v612
          %v869 = vadd.f32 %v357, %v613
          %v870 = vadd.f32 %v358, %v614
          %v871 = vadd.f32 %v359, %v615
          %v872 = vadd.f32 %v360, %v616
          %v873 = vadd.f32 %v361, %v617
          %v874 = vadd.f32 %v362, %v618
          %v875 = vadd.f32 %v363, %v619
          %v876 = vadd.f32 %v364, %v620
          %v877 = vadd.f32 %v365, %v621
          %v878 = vadd.f32 %v366, %v622
          %v879 = vadd.f32 %v367, %v623
          %v880 = vadd.f32 %v368, %v624
          %v881 = vadd.f32 %v369, %v625
          %v882 = vadd.f32 %v370, %v626
          %v883 = vadd.f32 %v371, %v627
          %v884 = vadd.f32 %v372, %v628
          %v885 = vadd.f32 %v373, %v629
          %v886 = vadd.f32 %v374, %v630
          %v887 = vadd.f32 %v375, %v631
          %v888 = vadd.f32 %v376, %v632
          %v889 = vadd.f32 %v377, %v633
          %v890 = vadd.f32 %v378, %v634
          %v891 = vadd.f32 %v379, %v635
          %v892 = vadd.f32 %v380, %v636
          %v893 = vadd.f32 %v381, %v637
          %v894 = vadd.f32 %v382, %v638
          %v895 = vadd.f32 %v383, %v639
          %v896 = vadd.f32 %v384, %v640
          %v897 = vadd.f32 %v385, %v641
          %v898 = vadd.f32 %v386, %v642
          %v899 = vadd.f32 %v387, %v643
          %v900 = vadd.f32 %v388, %v644
          %v901 = vadd.f32 %v389, %v645
          %v902 = vadd.f32 %v390, %v646
          %v903 = vadd.f32 %v391, %v647
          %v904 = vadd.f32 %v392, %v648
          %v905 = vadd.f32 %v393, %v649
          %v906 = vadd.f32 %v394, %v650
          %v907 = vadd.f32 %v395, %v651
          %v908 = vadd.f32 %v396, %v652
          %v909 = vadd.f32 %v397, %v653
          %v910 = vadd.f32 %v398, %v654
          %v911 = vadd.f32 %v399, %v655
          %v912 = vadd.f32 %v400, %v656
          %v913 = vadd.f32 %v401, %v657
          %v914 = vadd.f32 %v402, %v658
          %v915 = vadd.f32 %v403, %v659
          %v916 = vadd.f32 %v404, %v660
          %v917 = vadd.f32 %v405, %v661
          %v918 = vadd.f32 %v406, %v662
          %v919 = vadd.f32 %v407, %v663
          %v920 = vadd.f32 %v408, %v664
          %v921 = vadd.f32 %v409, %v665
          %v922 = vadd.f32 %v410, %v666
          %v923 = vadd.f32 %v411, %v667
          %v924 = vadd.f32 %v412, %v668
          %v925 = vadd.f32 %v413, %v669
          %v926 = vadd.f32 %v414, %v670
          %v927 = vadd.f32 %v415, %v671
          %v928 = vadd.f32 %v416, %v672
          %v929 = vadd.f32 %v417, %v673
          %v930 = vadd.f32 %v418, %v674
          %v931 = vadd.f32 %v419, %v675
          %v932 = vadd.f32 %v420, %v676
          %v933 = vadd.f32 %v421, %v677
          %v934 = vadd.f32 %v422, %v678
          %v935 = vadd.f32 %v423, %v679
          %v936 = vadd.f32 %v424, %v680
          %v937 = vadd.f32 %v425, %v681
          %v938 = vadd.f32 %v426, %v682
          %v939 = vadd.f32 %v427, %v683
          %v940 = vadd.f32 %v428, %v684
          %v941 = vadd.f32 %v429, %v685
          %v942 = vadd.f32 %v430, %v686
          %v943 = vadd.f32 %v431, %v687
          %v944 = vadd.f32 %v432, %v688
          %v945 = vadd.f32 %v433, %v689
          %v946 = vadd.f32 %v434, %v690
          %v947 = vadd.f32 %v435, %v691
          %v948 = vadd.f32 %v436, %v692
          %v949 = vadd.f32 %v437, %v693
          %v950 = vadd.f32 %v438, %v694
          %v951 = vadd.f32 %v439, %v695
          %v952 = vadd.f32 %v440, %v696
          %v953 = vadd.f32 %v441, %v697
          %v954 = vadd.f32 %v442, %v698
          %v955 = vadd.f32 %v443, %v699
          %v956 = vadd.f32 %v444, %v700
          %v957 = vadd.f32 %v445, %v701
          %v958 = vadd.f32 %v446, %v702
          %v959 = vadd.f32 %v447, %v703
          %v960 = vadd.f32 %v448, %v704
          %v961 = vadd.f32 %v449, %v705
          %v962 = vadd.f32 %v450, %v706
          %v963 = vadd.f32 %v451, %v707
          %v964 = vadd.f32 %v452, %v708
          %v965 = vadd.f32 %v453, %v709
          %v966 = vadd.f32 %v454, %v710
          %v967 = vadd.f32 %v455, %v711
          %v968 = vadd.f32 %v456, %v712
          %v969 = vadd.f32 %v457, %v713
          %v970 = vadd.f32 %v458, %v714
          %v971 = vadd.f32 %v459, %v715
          %v972 = vadd.f32 %v460, %v716
          %v973 = vadd.f32 %v461, %v717
          %v974 = vadd.f32 %v462, %v718
          %v975 = vadd.f32 %v463, %v719
          %v976 = vadd.f32 %v464, %v720
          %v977 = vadd.f32 %v465, %v721
          %v978 = vadd.f32 %v466, %v722
          %v979 = vadd.f32 %v467, %v723
          %v980 = vadd.f32 %v468, %v724
          %v981 = vadd.f32 %v469, %v725
          %v982 = vadd.f32 %v470, %v726
          %v983 = vadd.f32 %v471, %v727
          %v984 = vadd.f32 %v472, %v728
          %v985 = vadd.f32 %v473, %v729
          %v986 = vadd.f32 %v474, %v730
          %v987 = vadd.f32 %v475, %v731
          %v988 = vadd.f32 %v476, %v732
          %v989 = vadd.f32 %v477, %v733
          %v990 = vadd.f32 %v478, %v734
          %v991 = vadd.f32 %v479, %v735
          %v992 = vadd.f32 %v480, %v736
          %v993 = vadd.f32 %v481, %v737
          %v994 = vadd.f32 %v482, %v738
          %v995 = vadd.f32 %v483, %v739
          %v996 = vadd.f32 %v484, %v740
          %v997 = vadd.f32 %v485, %v741
          %v998 = vadd.f32 %v486, %v742
          %v999 = vadd.f32 %v487, %v743
          %v1000 = vadd.f32 %v488, %v744
          %v1001 = vadd.f32 %v489, %v745
          %v1002 = vadd.f32 %v490, %v746
          %v1003 = vadd.f32 %v491, %v747
          %v1004 = vadd.f32 %v492, %v748
          %v1005 = vadd.f32 %v493, %v749
          %v1006 = vadd.f32 %v494, %v750
          %v1007 = vadd.f32 %v495, %v751
          %v1008 = vadd.f32 %v496, %v752
          %v1009 = vadd.f32 %v497, %v753
          %v1010 = vadd.f32 %v498, %v754
          %v1011 = vadd.f32 %v499, %v755
          %v1012 = vadd.f32 %v500, %v756
          %v1013 = vadd.f32 %v501, %v757
          %v1014 = vadd.f32 %v502, %v758
          %v1015 = vadd.f32 %v503, %v759
          %v1016 = vadd.f32 %v504, %v760
          %v1017 = vadd.f32 %v505, %v761
          %v1018 = vadd.f32 %v506, %v762
          %v1019 = vadd.f32 %v507, %v763
          %v1020 = vadd.f32 %v508, %v764
          %v1021 = vadd.f32 %v509, %v765
          %v1022 = vadd.f32 %v510, %v766
          %v1023 = vadd.f32 %v511, %v767
          %v1024 = vadd.f32 %v512, %v768
          %v1025 = vadd.f32 %v513, %v769
          %v1026 = vadd.f32 %v514, %v770
          %v1027 = vadd.f32 %v515, %v771
          %v1028 = vadd.f32 %v516, %v772
          %v1029 = vadd.f32 %v517, %v773
          %v1030 = vmax.f32 %v774, 0.0
          %v1031 = vmax.f32 %v775, 0.0
          %v1032 = vmax.f32 %v776, 0.0
          %v1033 = vmax.f32 %v777, 0.0
          %v1034 = vmax.f32 %v778, 0.0
          %v1035 = vmax.f32 %v779, 0.0
          %v1036 = vmax.f32 %v780, 0.0
          %v1037 = vmax.f32 %v781, 0.0
          %v1038 = vmax.f32 %v782, 0.0
          %v1039 = vmax.f32 %v783, 0.0
          %v1040 = vmax.f32 %v784, 0.0
          %v1041 = vmax.f32 %v785, 0.0
          %v1042 = vmax.f32 %v786, 0.0
          %v1043 = vmax.f32 %v787, 0.0
          %v1044 = vmax.f32 %v788, 0.0
          %v1045 = vmax.f32 %v789, 0.0
          %v1046 = vmax.f32 %v790, 0.0
          %v1047 = vmax.f32 %v791, 0.0
          %v1048 = vmax.f32 %v792, 0.0
          %v1049 = vmax.f32 %v793, 0.0
          %v1050 = vmax.f32 %v794, 0.0
          %v1051 = vmax.f32 %v795, 0.0
          %v1052 = vmax.f32 %v796, 0.0
          %v1053 = vmax.f32 %v797, 0.0
          %v1054 = vmax.f32 %v798, 0.0
          %v1055 = vmax.f32 %v799, 0.0
          %v1056 = vmax.f32 %v800, 0.0
          %v1057 = vmax.f32 %v801, 0.0
          %v1058 = vmax.f32 %v802, 0.0
          %v1059 = vmax.f32 %v803, 0.0
          %v1060 = vmax.f32 %v804, 0.0
          %v1061 = vmax.f32 %v805, 0.0
          %v1062 = vmax.f32 %v806, 0.0
          %v1063 = vmax.f32 %v807, 0.0
          %v1064 = vmax.f32 %v808, 0.0
          %v1065 = vmax.f32 %v809, 0.0
          %v1066 = vmax.f32 %v810, 0.0
          %v1067 = vmax.f32 %v811, 0.0
          %v1068 = vmax.f32 %v812, 0.0
          %v1069 = vmax.f32 %v813, 0.0
          %v1070 = vmax.f32 %v814, 0.0
          %v1071 = vmax.f32 %v815, 0.0
          %v1072 = vmax.f32 %v816, 0.0
          %v1073 = vmax.f32 %v817, 0.0
          %v1074 = vmax.f32 %v818, 0.0
          %v1075 = vmax.f32 %v819, 0.0
          %v1076 = vmax.f32 %v820, 0.0
          %v1077 = vmax.f32 %v821, 0.0
          %v1078 = vmax.f32 %v822, 0.0
          %v1079 = vmax.f32 %v823, 0.0
          %v1080 = vmax.f32 %v824, 0.0
          %v1081 = vmax.f32 %v825, 0.0
          %v1082 = vmax.f32 %v826, 0.0
          %v1083 = vmax.f32 %v827, 0.0
          %v1084 = vmax.f32 %v828, 0.0
          %v1085 = vmax.f32 %v829, 0.0
          %v1086 = vmax.f32 %v830, 0.0
          %v1087 = vmax.f32 %v831, 0.0
          %v1088 = vmax.f32 %v832, 0.0
          %v1089 = vmax.f32 %v833, 0.0
          %v1090 = vmax.f32 %v834, 0.0
          %v1091 = vmax.f32 %v835, 0.0
          %v1092 = vmax.f32 %v836, 0.0
          %v1093 = vmax.f32 %v837, 0.0
          %v1094 = vmax.f32 %v838, 0.0
          %v1095 = vmax.f32 %v839, 0.0
          %v1096 = vmax.f32 %v840, 0.0
          %v1097 = vmax.f32 %v841, 0.0
          %v1098 = vmax.f32 %v842, 0.0
          %v1099 = vmax.f32 %v843, 0.0
          %v1100 = vmax.f32 %v844, 0.0
          %v1101 = vmax.f32 %v845, 0.0
          %v1102 = vmax.f32 %v846, 0.0
          %v1103 = vmax.f32 %v847, 0.0
          %v1104 = vmax.f32 %v848, 0.0
          %v1105 = vmax.f32 %v849, 0.0
          %v1106 = vmax.f32 %v850, 0.0
          %v1107 = vmax.f32 %v851, 0.0
          %v1108 = vmax.f32 %v852, 0.0
          %v1109 = vmax.f32 %v853, 0.0
          %v1110 = vmax.f32 %v854, 0.0
          %v1111 = vmax.f32 %v855, 0.0
          %v1112 = vmax.f32 %v856, 0.0
          %v1113 = vmax.f32 %v857, 0.0
          %v1114 = vmax.f32 %v858, 0.0
          %v1115 = vmax.f32 %v859, 0.0
          %v1116 = vmax.f32 %v860, 0.0
          %v1117 = vmax.f32 %v861, 0.0
          %v1118 = vmax.f32 %v862, 0.0
          %v1119 = vmax.f32 %v863, 0.0
          %v1120 = vmax.f32 %v864, 0.0
          %v1121 = vmax.f32 %v865, 0.0
          %v1122 = vmax.f32 %v866, 0.0
          %v1123 = vmax.f32 %v867, 0.0
          %v1124 = vmax.f32 %v868, 0.0
          %v1125 = vmax.f32 %v869, 0.0
          %v1126 = vmax.f32 %v870, 0.0
          %v1127 = vmax.f32 %v871, 0.0
          %v1128 = vmax.f32 %v872, 0.0
          %v1129 = vmax.f32 %v873, 0.0
          %v1130 = vmax.f32 %v874, 0.0
          %v1131 = vmax.f32 %v875, 0.0
          %v1132 = vmax.f32 %v876, 0.0
          %v1133 = vmax.f32 %v877, 0.0
          %v1134 = vmax.f32 %v878, 0.0
          %v1135 = vmax.f32 %v879, 0.0
          %v1136 = vmax.f32 %v880, 0.0
          %v1137 = vmax.f32 %v881, 0.0
          %v1138 = vmax.f32 %v882, 0.0
          %v1139 = vmax.f32 %v883, 0.0
          %v1140 = vmax.f32 %v884, 0.0
          %v1141 = vmax.f32 %v885, 0.0
          %v1142 = vmax.f32 %v886, 0.0
          %v1143 = vmax.f32 %v887, 0.0
          %v1144 = vmax.f32 %v888, 0.0
          %v1145 = vmax.f32 %v889, 0.0
          %v1146 = vmax.f32 %v890, 0.0
          %v1147 = vmax.f32 %v891, 0.0
          %v1148 = vmax.f32 %v892, 0.0
          %v1149 = vmax.f32 %v893, 0.0
          %v1150 = vmax.f32 %v894, 0.0
          %v1151 = vmax.f32 %v895, 0.0
          %v1152 = vmax.f32 %v896, 0.0
          %v1153 = vmax.f32 %v897, 0.0
          %v1154 = vmax.f32 %v898, 0.0
          %v1155 = vmax.f32 %v899, 0.0
          %v1156 = vmax.f32 %v900, 0.0
          %v1157 = vmax.f32 %v901, 0.0
          %v1158 = vmax.f32 %v902, 0.0
          %v1159 = vmax.f32 %v903, 0.0
          %v1160 = vmax.f32 %v904, 0.0
          %v1161 = vmax.f32 %v905, 0.0
          %v1162 = vmax.f32 %v906, 0.0
          %v1163 = vmax.f32 %v907, 0.0
          %v1164 = vmax.f32 %v908, 0.0
          %v1165 = vmax.f32 %v909, 0.0
          %v1166 = vmax.f32 %v910, 0.0
          %v1167 = vmax.f32 %v911, 0.0
          %v1168 = vmax.f32 %v912, 0.0
          %v1169 = vmax.f32 %v913, 0.0
          %v1170 = vmax.f32 %v914, 0.0
          %v1171 = vmax.f32 %v915, 0.0
          %v1172 = vmax.f32 %v916, 0.0
          %v1173 = vmax.f32 %v917, 0.0
          %v1174 = vmax.f32 %v918, 0.0
          %v1175 = vmax.f32 %v919, 0.0
          %v1176 = vmax.f32 %v920, 0.0
          %v1177 = vmax.f32 %v921, 0.0
          %v1178 = vmax.f32 %v922, 0.0
          %v1179 = vmax.f32 %v923, 0.0
          %v1180 = vmax.f32 %v924, 0.0
          %v1181 = vmax.f32 %v925, 0.0
          %v1182 = vmax.f32 %v926, 0.0
          %v1183 = vmax.f32 %v927, 0.0
          %v1184 = vmax.f32 %v928, 0.0
          %v1185 = vmax.f32 %v929, 0.0
          %v1186 = vmax.f32 %v930, 0.0
          %v1187 = vmax.f32 %v931, 0.0
          %v1188 = vmax.f32 %v932, 0.0
          %v1189 = vmax.f32 %v933, 0.0
          %v1190 = vmax.f32 %v934, 0.0
          %v1191 = vmax.f32 %v935, 0.0
          %v1192 = vmax.f32 %v936, 0.0
          %v1193 = vmax.f32 %v937, 0.0
          %v1194 = vmax.f32 %v938, 0.0
          %v1195 = vmax.f32 %v939, 0.0
          %v1196 = vmax.f32 %v940, 0.0
          %v1197 = vmax.f32 %v941, 0.0
          %v1198 = vmax.f32 %v942, 0.0
          %v1199 = vmax.f32 %v943, 0.0
          %v1200 = vmax.f32 %v944, 0.0
          %v1201 = vmax.f32 %v945, 0.0
          %v1202 = vmax.f32 %v946, 0.0
          %v1203 = vmax.f32 %v947, 0.0
          %v1204 = vmax.f32 %v948, 0.0
          %v1205 = vmax.f32 %v949, 0.0
          %v1206 = vmax.f32 %v950, 0.0
          %v1207 = vmax.f32 %v951, 0.0
          %v1208 = vmax.f32 %v952, 0.0
          %v1209 = vmax.f32 %v953, 0.0
          %v1210 = vmax.f32 %v954, 0.0
          %v1211 = vmax.f32 %v955, 0.0
          %v1212 = vmax.f32 %v956, 0.0
          %v1213 = vmax.f32 %v957, 0.0
          %v1214 = vmax.f32 %v958, 0.0
          %v1215 = vmax.f32 %v959, 0.0
          %v1216 = vmax.f32 %v960, 0.0
          %v1217 = vmax.f32 %v961, 0.0
          %v1218 = vmax.f32 %v962, 0.0
          %v1219 = vmax.f32 %v963, 0.0
          %v1220 = vmax.f32 %v964, 0.0
          %v1221 = vmax.f32 %v965, 0.0
          %v1222 = vmax.f32 %v966, 0.0
          %v1223 = vmax.f32 %v967, 0.0
          %v1224 = vmax.f32 %v968, 0.0
          %v1225 = vmax.f32 %v969, 0.0
          %v1226 = vmax.f32 %v970, 0.0
          %v1227 = vmax.f32 %v971, 0.0
          %v1228 = vmax.f32 %v972, 0.0
          %v1229 = vmax.f32 %v973, 0.0
          %v1230 = vmax.f32 %v974, 0.0
          %v1231 = vmax.f32 %v975, 0.0
          %v1232 = vmax.f32 %v976, 0.0
          %v1233 = vmax.f32 %v977, 0.0
          %v1234 = vmax.f32 %v978, 0.0
          %v1235 = vmax.f32 %v979, 0.0
          %v1236 = vmax.f32 %v980, 0.0
          %v1237 = vmax.f32 %v981, 0.0
          %v1238 = vmax.f32 %v982, 0.0
          %v1239 = vmax.f32 %v983, 0.0
          %v1240 = vmax.f32 %v984, 0.0
          %v1241 = vmax.f32 %v985, 0.0
          %v1242 = vmax.f32 %v986, 0.0
          %v1243 = vmax.f32 %v987, 0.0
          %v1244 = vmax.f32 %v988, 0.0
          %v1245 = vmax.f32 %v989, 0.0
          %v1246 = vmax.f32 %v990, 0.0
          %v1247 = vmax.f32 %v991, 0.0
          %v1248 = vmax.f32 %v992, 0.0
          %v1249 = vmax.f32 %v993, 0.0
          %v1250 = vmax.f32 %v994, 0.0
          %v1251 = vmax.f32 %v995, 0.0
          %v1252 = vmax.f32 %v996, 0.0
          %v1253 = vmax.f32 %v997, 0.0
          %v1254 = vmax.f32 %v998, 0.0
          %v1255 = vmax.f32 %v999, 0.0
          %v1256 = vmax.f32 %v1000, 0.0
          %v1257 = vmax.f32 %v1001, 0.0
          %v1258 = vmax.f32 %v1002, 0.0
          %v1259 = vmax.f32 %v1003, 0.0
          %v1260 = vmax.f32 %v1004, 0.0
          %v1261 = vmax.f32 %v1005, 0.0
          %v1262 = vmax.f32 %v1006, 0.0
          %v1263 = vmax.f32 %v1007, 0.0
          %v1264 = vmax.f32 %v1008, 0.0
          %v1265 = vmax.f32 %v1009, 0.0
          %v1266 = vmax.f32 %v1010, 0.0
          %v1267 = vmax.f32 %v1011, 0.0
          %v1268 = vmax.f32 %v1012, 0.0
          %v1269 = vmax.f32 %v1013, 0.0
          %v1270 = vmax.f32 %v1014, 0.0
          %v1271 = vmax.f32 %v1015, 0.0
          %v1272 = vmax.f32 %v1016, 0.0
          %v1273 = vmax.f32 %v1017, 0.0
          %v1274 = vmax.f32 %v1018, 0.0
          %v1275 = vmax.f32 %v1019, 0.0
          %v1276 = vmax.f32 %v1020, 0.0
          %v1277 = vmax.f32 %v1021, 0.0
          %v1278 = vmax.f32 %v1022, 0.0
          %v1279 = vmax.f32 %v1023, 0.0
          %v1280 = vmax.f32 %v1024, 0.0
          %v1281 = vmax.f32 %v1025, 0.0
          %v1282 = vmax.f32 %v1026, 0.0
          %v1283 = vmax.f32 %v1027, 0.0
          %v1284 = vmax.f32 %v1028, 0.0
          %v1285 = vmax.f32 %v1029, 0.0
          %1286 = vst [vmem:[#allocation2] sm:$0xff] %v1030
          %vm1287 = vcmask 556032
          %1288 = vst.msk [vmem:[#allocation2 + $0x8] sm:$0xff] %vm1287, %v1031
          %1289 = vst [vmem:[#allocation2 + $0x10] sm:$0xff] %v1032
          %1290 = vst.msk [vmem:[#allocation2 + $0x18] sm:$0xff] %vm1287, %v1033
          %1291 = vst [vmem:[#allocation2 + $0x20] sm:$0xff] %v1034
          %1292 = vst.msk [vmem:[#allocation2 + $0x28] sm:$0xff] %vm1287, %v1035
          %1293 = vst [vmem:[#allocation2 + $0x30] sm:$0xff] %v1036
          %1294 = vst.msk [vmem:[#allocation2 + $0x38] sm:$0xff] %vm1287, %v1037
          %1295 = vst [vmem:[#allocation2 + $0x40] sm:$0xff] %v1038
          %1296 = vst.msk [vmem:[#allocation2 + $0x48] sm:$0xff] %vm1287, %v1039
          %1297 = vst [vmem:[#allocation2 + $0x50] sm:$0xff] %v1040
          %1298 = vst.msk [vmem:[#allocation2 + $0x58] sm:$0xff] %vm1287, %v1041
          %1299 = vst [vmem:[#allocation2 + $0x60] sm:$0xff] %v1042
          %1300 = vst.msk [vmem:[#allocation2 + $0x68] sm:$0xff] %vm1287, %v1043
          %1301 = vst [vmem:[#allocation2 + $0x70] sm:$0xff] %v1044
          %1302 = vst.msk [vmem:[#allocation2 + $0x78] sm:$0xff] %vm1287, %v1045
          %1303 = vst [vmem:[#allocation2 + $0x80] sm:$0xff] %v1046
          %1304 = vst.msk [vmem:[#allocation2 + $0x88] sm:$0xff] %vm1287, %v1047
          %1305 = vst [vmem:[#allocation2 + $0x90] sm:$0xff] %v1048
          %1306 = vst.msk [vmem:[#allocation2 + $0x98] sm:$0xff] %vm1287, %v1049
          %1307 = vst [vmem:[#allocation2 + $0xa0] sm:$0xff] %v1050
          %1308 = vst.msk [vmem:[#allocation2 + $0xa8] sm:$0xff] %vm1287, %v1051
          %1309 = vst [vmem:[#allocation2 + $0xb0] sm:$0xff] %v1052
          %1310 = vst.msk [vmem:[#allocation2 + $0xb8] sm:$0xff] %vm1287, %v1053
          %1311 = vst [vmem:[#allocation2 + $0xc0] sm:$0xff] %v1054
          %1312 = vst.msk [vmem:[#allocation2 + $0xc8] sm:$0xff] %vm1287, %v1055
          %1313 = vst [vmem:[#allocation2 + $0xd0] sm:$0xff] %v1056
          %1314 = vst.msk [vmem:[#allocation2 + $0xd8] sm:$0xff] %vm1287, %v1057
          %1315 = vst [vmem:[#allocation2 + $0xe0] sm:$0xff] %v1058
          %1316 = vst.msk [vmem:[#allocation2 + $0xe8] sm:$0xff] %vm1287, %v1059
          %1317 = vst [vmem:[#allocation2 + $0xf0] sm:$0xff] %v1060
          %1318 = vst.msk [vmem:[#allocation2 + $0xf8] sm:$0xff] %vm1287, %v1061
          %1319 = vst [vmem:[#allocation2 + $0x100] sm:$0xff] %v1062
          %1320 = vst.msk [vmem:[#allocation2 + $0x108] sm:$0xff] %vm1287, %v1063
          %1321 = vst [vmem:[#allocation2 + $0x110] sm:$0xff] %v1064
          %1322 = vst.msk [vmem:[#allocation2 + $0x118] sm:$0xff] %vm1287, %v1065
          %1323 = vst [vmem:[#allocation2 + $0x120] sm:$0xff] %v1066
          %1324 = vst.msk [vmem:[#allocation2 + $0x128] sm:$0xff] %vm1287, %v1067
          %1325 = vst [vmem:[#allocation2 + $0x130] sm:$0xff] %v1068
          %1326 = vst.msk [vmem:[#allocation2 + $0x138] sm:$0xff] %vm1287, %v1069
          %1327 = vst [vmem:[#allocation2 + $0x140] sm:$0xff] %v1070
          %1328 = vst.msk [vmem:[#allocation2 + $0x148] sm:$0xff] %vm1287, %v1071
          %1329 = vst [vmem:[#allocation2 + $0x150] sm:$0xff] %v1072
          %1330 = vst.msk [vmem:[#allocation2 + $0x158] sm:$0xff] %vm1287, %v1073
          %1331 = vst [vmem:[#allocation2 + $0x160] sm:$0xff] %v1074
          %1332 = vst.msk [vmem:[#allocation2 + $0x168] sm:$0xff] %vm1287, %v1075
          %1333 = vst [vmem:[#allocation2 + $0x170] sm:$0xff] %v1076
          %1334 = vst.msk [vmem:[#allocation2 + $0x178] sm:$0xff] %vm1287, %v1077
          %1335 = vst [vmem:[#allocation2 + $0x180] sm:$0xff] %v1078
          %1336 = vst.msk [vmem:[#allocation2 + $0x188] sm:$0xff] %vm1287, %v1079
          %1337 = vst [vmem:[#allocation2 + $0x190] sm:$0xff] %v1080
          %1338 = vst.msk [vmem:[#allocation2 + $0x198] sm:$0xff] %vm1287, %v1081
          %1339 = vst [vmem:[#allocation2 + $0x1a0] sm:$0xff] %v1082
          %1340 = vst.msk [vmem:[#allocation2 + $0x1a8] sm:$0xff] %vm1287, %v1083
          %1341 = vst [vmem:[#allocation2 + $0x1b0] sm:$0xff] %v1084
          %1342 = vst.msk [vmem:[#allocation2 + $0x1b8] sm:$0xff] %vm1287, %v1085
          %1343 = vst [vmem:[#allocation2 + $0x1c0] sm:$0xff] %v1086
          %1344 = vst.msk [vmem:[#allocation2 + $0x1c8] sm:$0xff] %vm1287, %v1087
          %1345 = vst [vmem:[#allocation2 + $0x1d0] sm:$0xff] %v1088
          %1346 = vst.msk [vmem:[#allocation2 + $0x1d8] sm:$0xff] %vm1287, %v1089
          %1347 = vst [vmem:[#allocation2 + $0x1e0] sm:$0xff] %v1090
          %1348 = vst.msk [vmem:[#allocation2 + $0x1e8] sm:$0xff] %vm1287, %v1091
          %1349 = vst [vmem:[#allocation2 + $0x1f0] sm:$0xff] %v1092
          %1350 = vst.msk [vmem:[#allocation2 + $0x1f8] sm:$0xff] %vm1287, %v1093
          %1351 = vst [vmem:[#allocation2 + $0x200] sm:$0xff] %v1094
          %1352 = vst.msk [vmem:[#allocation2 + $0x208] sm:$0xff] %vm1287, %v1095
          %1353 = vst [vmem:[#allocation2 + $0x210] sm:$0xff] %v1096
          %1354 = vst.msk [vmem:[#allocation2 + $0x218] sm:$0xff] %vm1287, %v1097
          %1355 = vst [vmem:[#allocation2 + $0x220] sm:$0xff] %v1098
          %1356 = vst.msk [vmem:[#allocation2 + $0x228] sm:$0xff] %vm1287, %v1099
          %1357 = vst [vmem:[#allocation2 + $0x230] sm:$0xff] %v1100
          %1358 = vst.msk [vmem:[#allocation2 + $0x238] sm:$0xff] %vm1287, %v1101
          %1359 = vst [vmem:[#allocation2 + $0x240] sm:$0xff] %v1102
          %1360 = vst.msk [vmem:[#allocation2 + $0x248] sm:$0xff] %vm1287, %v1103
          %1361 = vst [vmem:[#allocation2 + $0x250] sm:$0xff] %v1104
          %1362 = vst.msk [vmem:[#allocation2 + $0x258] sm:$0xff] %vm1287, %v1105
          %1363 = vst [vmem:[#allocation2 + $0x260] sm:$0xff] %v1106
          %1364 = vst.msk [vmem:[#allocation2 + $0x268] sm:$0xff] %vm1287, %v1107
          %1365 = vst [vmem:[#allocation2 + $0x270] sm:$0xff] %v1108
          %1366 = vst.msk [vmem:[#allocation2 + $0x278] sm:$0xff] %vm1287, %v1109
          %1367 = vst [vmem:[#allocation2 + $0x280] sm:$0xff] %v1110
          %1368 = vst.msk [vmem:[#allocation2 + $0x288] sm:$0xff] %vm1287, %v1111
          %1369 = vst [vmem:[#allocation2 + $0x290] sm:$0xff] %v1112
          %1370 = vst.msk [vmem:[#allocation2 + $0x298] sm:$0xff] %vm1287, %v1113
          %1371 = vst [vmem:[#allocation2 + $0x2a0] sm:$0xff] %v1114
          %1372 = vst.msk [vmem:[#allocation2 + $0x2a8] sm:$0xff] %vm1287, %v1115
          %1373 = vst [vmem:[#allocation2 + $0x2b0] sm:$0xff] %v1116
          %1374 = vst.msk [vmem:[#allocation2 + $0x2b8] sm:$0xff] %vm1287, %v1117
          %1375 = vst [vmem:[#allocation2 + $0x2c0] sm:$0xff] %v1118
          %1376 = vst.msk [vmem:[#allocation2 + $0x2c8] sm:$0xff] %vm1287, %v1119
          %1377 = vst [vmem:[#allocation2 + $0x2d0] sm:$0xff] %v1120
          %1378 = vst.msk [vmem:[#allocation2 + $0x2d8] sm:$0xff] %vm1287, %v1121
          %1379 = vst [vmem:[#allocation2 + $0x2e0] sm:$0xff] %v1122
          %1380 = vst.msk [vmem:[#allocation2 + $0x2e8] sm:$0xff] %vm1287, %v1123
          %1381 = vst [vmem:[#allocation2 + $0x2f0] sm:$0xff] %v1124
          %1382 = vst.msk [vmem:[#allocation2 + $0x2f8] sm:$0xff] %vm1287, %v1125
          %1383 = vst [vmem:[#allocation2 + $0x300] sm:$0xff] %v1126
          %1384 = vst.msk [vmem:[#allocation2 + $0x308] sm:$0xff] %vm1287, %v1127
          %1385 = vst [vmem:[#allocation2 + $0x310] sm:$0xff] %v1128
          %1386 = vst.msk [vmem:[#allocation2 + $0x318] sm:$0xff] %vm1287, %v1129
          %1387 = vst [vmem:[#allocation2 + $0x320] sm:$0xff] %v1130
          %1388 = vst.msk [vmem:[#allocation2 + $0x328] sm:$0xff] %vm1287, %v1131
          %1389 = vst [vmem:[#allocation2 + $0x330] sm:$0xff] %v1132
          %1390 = vst.msk [vmem:[#allocation2 + $0x338] sm:$0xff] %vm1287, %v1133
          %1391 = vst [vmem:[#allocation2 + $0x340] sm:$0xff] %v1134
          %1392 = vst.msk [vmem:[#allocation2 + $0x348] sm:$0xff] %vm1287, %v1135
          %1393 = vst [vmem:[#allocation2 + $0x350] sm:$0xff] %v1136
          %1394 = vst.msk [vmem:[#allocation2 + $0x358] sm:$0xff] %vm1287, %v1137
          %1395 = vst [vmem:[#allocation2 + $0x360] sm:$0xff] %v1138
          %1396 = vst.msk [vmem:[#allocation2 + $0x368] sm:$0xff] %vm1287, %v1139
          %1397 = vst [vmem:[#allocation2 + $0x370] sm:$0xff] %v1140
          %1398 = vst.msk [vmem:[#allocation2 + $0x378] sm:$0xff] %vm1287, %v1141
          %1399 = vst [vmem:[#allocation2 + $0x380] sm:$0xff] %v1142
          %1400 = vst.msk [vmem:[#allocation2 + $0x388] sm:$0xff] %vm1287, %v1143
          %1401 = vst [vmem:[#allocation2 + $0x390] sm:$0xff] %v1144
          %1402 = vst.msk [vmem:[#allocation2 + $0x398] sm:$0xff] %vm1287, %v1145
          %1403 = vst [vmem:[#allocation2 + $0x3a0] sm:$0xff] %v1146
          %1404 = vst.msk [vmem:[#allocation2 + $0x3a8] sm:$0xff] %vm1287, %v1147
          %1405 = vst [vmem:[#allocation2 + $0x3b0] sm:$0xff] %v1148
          %1406 = vst.msk [vmem:[#allocation2 + $0x3b8] sm:$0xff] %vm1287, %v1149
          %1407 = vst [vmem:[#allocation2 + $0x3c0] sm:$0xff] %v1150
          %1408 = vst.msk [vmem:[#allocation2 + $0x3c8] sm:$0xff] %vm1287, %v1151
          %1409 = vst [vmem:[#allocation2 + $0x3d0] sm:$0xff] %v1152
          %1410 = vst.msk [vmem:[#allocation2 + $0x3d8] sm:$0xff] %vm1287, %v1153
          %1411 = vst [vmem:[#allocation2 + $0x3e0] sm:$0xff] %v1154
          %1412 = vst.msk [vmem:[#allocation2 + $0x3e8] sm:$0xff] %vm1287, %v1155
          %1413 = vst [vmem:[#allocation2 + $0x3f0] sm:$0xff] %v1156
          %1414 = vst.msk [vmem:[#allocation2 + $0x3f8] sm:$0xff] %vm1287, %v1157
          %1415 = vst [vmem:[#allocation2 + $0x400] sm:$0xff] %v1158
          %1416 = vst.msk [vmem:[#allocation2 + $0x408] sm:$0xff] %vm1287, %v1159
          %1417 = vst [vmem:[#allocation2 + $0x410] sm:$0xff] %v1160
          %1418 = vst.msk [vmem:[#allocation2 + $0x418] sm:$0xff] %vm1287, %v1161
          %1419 = vst [vmem:[#allocation2 + $0x420] sm:$0xff] %v1162
          %1420 = vst.msk [vmem:[#allocation2 + $0x428] sm:$0xff] %vm1287, %v1163
          %1421 = vst [vmem:[#allocation2 + $0x430] sm:$0xff] %v1164
          %1422 = vst.msk [vmem:[#allocation2 + $0x438] sm:$0xff] %vm1287, %v1165
          %1423 = vst [vmem:[#allocation2 + $0x440] sm:$0xff] %v1166
          %1424 = vst.msk [vmem:[#allocation2 + $0x448] sm:$0xff] %vm1287, %v1167
          %1425 = vst [vmem:[#allocation2 + $0x450] sm:$0xff] %v1168
          %1426 = vst.msk [vmem:[#allocation2 + $0x458] sm:$0xff] %vm1287, %v1169
          %1427 = vst [vmem:[#allocation2 + $0x460] sm:$0xff] %v1170
          %1428 = vst.msk [vmem:[#allocation2 + $0x468] sm:$0xff] %vm1287, %v1171
          %1429 = vst [vmem:[#allocation2 + $0x470] sm:$0xff] %v1172
          %1430 = vst.msk [vmem:[#allocation2 + $0x478] sm:$0xff] %vm1287, %v1173
          %1431 = vst [vmem:[#allocation2 + $0x480] sm:$0xff] %v1174
          %1432 = vst.msk [vmem:[#allocation2 + $0x488] sm:$0xff] %vm1287, %v1175
          %1433 = vst [vmem:[#allocation2 + $0x490] sm:$0xff] %v1176
          %1434 = vst.msk [vmem:[#allocation2 + $0x498] sm:$0xff] %vm1287, %v1177
          %1435 = vst [vmem:[#allocation2 + $0x4a0] sm:$0xff] %v1178
          %1436 = vst.msk [vmem:[#allocation2 + $0x4a8] sm:$0xff] %vm1287, %v1179
          %1437 = vst [vmem:[#allocation2 + $0x4b0] sm:$0xff] %v1180
          %1438 = vst.msk [vmem:[#allocation2 + $0x4b8] sm:$0xff] %vm1287, %v1181
          %1439 = vst [vmem:[#allocation2 + $0x4c0] sm:$0xff] %v1182
          %1440 = vst.msk [vmem:[#allocation2 + $0x4c8] sm:$0xff] %vm1287, %v1183
          %1441 = vst [vmem:[#allocation2 + $0x4d0] sm:$0xff] %v1184
          %1442 = vst.msk [vmem:[#allocation2 + $0x4d8] sm:$0xff] %vm1287, %v1185
          %1443 = vst [vmem:[#allocation2 + $0x4e0] sm:$0xff] %v1186
          %1444 = vst.msk [vmem:[#allocation2 + $0x4e8] sm:$0xff] %vm1287, %v1187
          %1445 = vst [vmem:[#allocation2 + $0x4f0] sm:$0xff] %v1188
          %1446 = vst.msk [vmem:[#allocation2 + $0x4f8] sm:$0xff] %vm1287, %v1189
          %1447 = vst [vmem:[#allocation2 + $0x500] sm:$0xff] %v1190
          %1448 = vst.msk [vmem:[#allocation2 + $0x508] sm:$0xff] %vm1287, %v1191
          %1449 = vst [vmem:[#allocation2 + $0x510] sm:$0xff] %v1192
          %1450 = vst.msk [vmem:[#allocation2 + $0x518] sm:$0xff] %vm1287, %v1193
          %1451 = vst [vmem:[#allocation2 + $0x520] sm:$0xff] %v1194
          %1452 = vst.msk [vmem:[#allocation2 + $0x528] sm:$0xff] %vm1287, %v1195
          %1453 = vst [vmem:[#allocation2 + $0x530] sm:$0xff] %v1196
          %1454 = vst.msk [vmem:[#allocation2 + $0x538] sm:$0xff] %vm1287, %v1197
          %1455 = vst [vmem:[#allocation2 + $0x540] sm:$0xff] %v1198
          %1456 = vst.msk [vmem:[#allocation2 + $0x548] sm:$0xff] %vm1287, %v1199
          %1457 = vst [vmem:[#allocation2 + $0x550] sm:$0xff] %v1200
          %1458 = vst.msk [vmem:[#allocation2 + $0x558] sm:$0xff] %vm1287, %v1201
          %1459 = vst [vmem:[#allocation2 + $0x560] sm:$0xff] %v1202
          %1460 = vst.msk [vmem:[#allocation2 + $0x568] sm:$0xff] %vm1287, %v1203
          %1461 = vst [vmem:[#allocation2 + $0x570] sm:$0xff] %v1204
          %1462 = vst.msk [vmem:[#allocation2 + $0x578] sm:$0xff] %vm1287, %v1205
          %1463 = vst [vmem:[#allocation2 + $0x580] sm:$0xff] %v1206
          %1464 = vst.msk [vmem:[#allocation2 + $0x588] sm:$0xff] %vm1287, %v1207
          %1465 = vst [vmem:[#allocation2 + $0x590] sm:$0xff] %v1208
          %1466 = vst.msk [vmem:[#allocation2 + $0x598] sm:$0xff] %vm1287, %v1209
          %1467 = vst [vmem:[#allocation2 + $0x5a0] sm:$0xff] %v1210
          %1468 = vst.msk [vmem:[#allocation2 + $0x5a8] sm:$0xff] %vm1287, %v1211
          %1469 = vst [vmem:[#allocation2 + $0x5b0] sm:$0xff] %v1212
          %1470 = vst.msk [vmem:[#allocation2 + $0x5b8] sm:$0xff] %vm1287, %v1213
          %1471 = vst [vmem:[#allocation2 + $0x5c0] sm:$0xff] %v1214
          %1472 = vst.msk [vmem:[#allocation2 + $0x5c8] sm:$0xff] %vm1287, %v1215
          %1473 = vst [vmem:[#allocation2 + $0x5d0] sm:$0xff] %v1216
          %1474 = vst.msk [vmem:[#allocation2 + $0x5d8] sm:$0xff] %vm1287, %v1217
          %1475 = vst [vmem:[#allocation2 + $0x5e0] sm:$0xff] %v1218
          %1476 = vst.msk [vmem:[#allocation2 + $0x5e8] sm:$0xff] %vm1287, %v1219
          %1477 = vst [vmem:[#allocation2 + $0x5f0] sm:$0xff] %v1220
          %1478 = vst.msk [vmem:[#allocation2 + $0x5f8] sm:$0xff] %vm1287, %v1221
          %1479 = vst [vmem:[#allocation2 + $0x600] sm:$0xff] %v1222
          %1480 = vst.msk [vmem:[#allocation2 + $0x608] sm:$0xff] %vm1287, %v1223
          %1481 = vst [vmem:[#allocation2 + $0x610] sm:$0xff] %v1224
          %1482 = vst.msk [vmem:[#allocation2 + $0x618] sm:$0xff] %vm1287, %v1225
          %1483 = vst [vmem:[#allocation2 + $0x620] sm:$0xff] %v1226
          %1484 = vst.msk [vmem:[#allocation2 + $0x628] sm:$0xff] %vm1287, %v1227
          %1485 = vst [vmem:[#allocation2 + $0x630] sm:$0xff] %v1228
          %1486 = vst.msk [vmem:[#allocation2 + $0x638] sm:$0xff] %vm1287, %v1229
          %1487 = vst [vmem:[#allocation2 + $0x640] sm:$0xff] %v1230
          %1488 = vst.msk [vmem:[#allocation2 + $0x648] sm:$0xff] %vm1287, %v1231
          %1489 = vst [vmem:[#allocation2 + $0x650] sm:$0xff] %v1232
          %1490 = vst.msk [vmem:[#allocation2 + $0x658] sm:$0xff] %vm1287, %v1233
          %1491 = vst [vmem:[#allocation2 + $0x660] sm:$0xff] %v1234
          %1492 = vst.msk [vmem:[#allocation2 + $0x668] sm:$0xff] %vm1287, %v1235
          %1493 = vst [vmem:[#allocation2 + $0x670] sm:$0xff] %v1236
          %1494 = vst.msk [vmem:[#allocation2 + $0x678] sm:$0xff] %vm1287, %v1237
          %1495 = vst [vmem:[#allocation2 + $0x680] sm:$0xff] %v1238
          %1496 = vst.msk [vmem:[#allocation2 + $0x688] sm:$0xff] %vm1287, %v1239
          %1497 = vst [vmem:[#allocation2 + $0x690] sm:$0xff] %v1240
          %1498 = vst.msk [vmem:[#allocation2 + $0x698] sm:$0xff] %vm1287, %v1241
          %1499 = vst [vmem:[#allocation2 + $0x6a0] sm:$0xff] %v1242
          %1500 = vst.msk [vmem:[#allocation2 + $0x6a8] sm:$0xff] %vm1287, %v1243
          %1501 = vst [vmem:[#allocation2 + $0x6b0] sm:$0xff] %v1244
          %1502 = vst.msk [vmem:[#allocation2 + $0x6b8] sm:$0xff] %vm1287, %v1245
          %1503 = vst [vmem:[#allocation2 + $0x6c0] sm:$0xff] %v1246
          %1504 = vst.msk [vmem:[#allocation2 + $0x6c8] sm:$0xff] %vm1287, %v1247
          %1505 = vst [vmem:[#allocation2 + $0x6d0] sm:$0xff] %v1248
          %1506 = vst.msk [vmem:[#allocation2 + $0x6d8] sm:$0xff] %vm1287, %v1249
          %1507 = vst [vmem:[#allocation2 + $0x6e0] sm:$0xff] %v1250
          %1508 = vst.msk [vmem:[#allocation2 + $0x6e8] sm:$0xff] %vm1287, %v1251
          %1509 = vst [vmem:[#allocation2 + $0x6f0] sm:$0xff] %v1252
          %1510 = vst.msk [vmem:[#allocation2 + $0x6f8] sm:$0xff] %vm1287, %v1253
          %1511 = vst [vmem:[#allocation2 + $0x700] sm:$0xff] %v1254
          %1512 = vst.msk [vmem:[#allocation2 + $0x708] sm:$0xff] %vm1287, %v1255
          %1513 = vst [vmem:[#allocation2 + $0x710] sm:$0xff] %v1256
          %1514 = vst.msk [vmem:[#allocation2 + $0x718] sm:$0xff] %vm1287, %v1257
          %1515 = vst [vmem:[#allocation2 + $0x720] sm:$0xff] %v1258
          %1516 = vst.msk [vmem:[#allocation2 + $0x728] sm:$0xff] %vm1287, %v1259
          %1517 = vst [vmem:[#allocation2 + $0x730] sm:$0xff] %v1260
          %1518 = vst.msk [vmem:[#allocation2 + $0x738] sm:$0xff] %vm1287, %v1261
          %1519 = vst [vmem:[#allocation2 + $0x740] sm:$0xff] %v1262
          %1520 = vst.msk [vmem:[#allocation2 + $0x748] sm:$0xff] %vm1287, %v1263
          %1521 = vst [vmem:[#allocation2 + $0x750] sm:$0xff] %v1264
          %1522 = vst.msk [vmem:[#allocation2 + $0x758] sm:$0xff] %vm1287, %v1265
          %1523 = vst [vmem:[#allocation2 + $0x760] sm:$0xff] %v1266
          %1524 = vst.msk [vmem:[#allocation2 + $0x768] sm:$0xff] %vm1287, %v1267
          %1525 = vst [vmem:[#allocation2 + $0x770] sm:$0xff] %v1268
          %1526 = vst.msk [vmem:[#allocation2 + $0x778] sm:$0xff] %vm1287, %v1269
          %1527 = vst [vmem:[#allocation2 + $0x780] sm:$0xff] %v1270
          %1528 = vst.msk [vmem:[#allocation2 + $0x788] sm:$0xff] %vm1287, %v1271
          %1529 = vst [vmem:[#allocation2 + $0x790] sm:$0xff] %v1272
          %1530 = vst.msk [vmem:[#allocation2 + $0x798] sm:$0xff] %vm1287, %v1273
          %1531 = vst [vmem:[#allocation2 + $0x7a0] sm:$0xff] %v1274
          %1532 = vst.msk [vmem:[#allocation2 + $0x7a8] sm:$0xff] %vm1287, %v1275
          %1533 = vst [vmem:[#allocation2 + $0x7b0] sm:$0xff] %v1276
          %1534 = vst.msk [vmem:[#allocation2 + $0x7b8] sm:$0xff] %vm1287, %v1277
          %1535 = vst [vmem:[#allocation2 + $0x7c0] sm:$0xff] %v1278
          %1536 = vst.msk [vmem:[#allocation2 + $0x7c8] sm:$0xff] %vm1287, %v1279
          %1537 = vst [vmem:[#allocation2 + $0x7d0] sm:$0xff] %v1280
          %1538 = vst.msk [vmem:[#allocation2 + $0x7d8] sm:$0xff] %vm1287, %v1281
          %1539 = vst [vmem:[#allocation2 + $0x7e0] sm:$0xff] %v1282
          %1540 = vst.msk [vmem:[#allocation2 + $0x7e8] sm:$0xff] %vm1287, %v1283
          %1541 = vst [vmem:[#allocation2 + $0x7f0] sm:$0xff] %v1284
          %1542 = vst.msk [vmem:[#allocation2 + $0x7f8] sm:$0xff] %vm1287, %v1285
        $region40: #{tpu_custom_call.1} parent=31 // pred_fallthru
          _
        %v1543 = vld [vmem:[%s198] sm:$0xff]
        %v1544 = vld [vmem:[%s198 + $0x8] sm:$0xff]
        %v1545 = vld [vmem:[%s198 + $0x10] sm:$0xff]
        %v1546 = vld [vmem:[%s198 + $0x18] sm:$0xff]
        %v1547 = vld [vmem:[%s198 + $0x20] sm:$0xff]
        %v1548 = vld [vmem:[%s198 + $0x28] sm:$0xff]
        %v1549 = vld [vmem:[%s198 + $0x30] sm:$0xff]
        %v1550 = vld [vmem:[%s198 + $0x38] sm:$0xff]
        %v1551 = vld [vmem:[%s198 + $0x40] sm:$0xff]
        %v1552 = vld [vmem:[%s198 + $0x48] sm:$0xff]
        %v1553 = vld [vmem:[%s198 + $0x50] sm:$0xff]
        %v1554 = vld [vmem:[%s198 + $0x58] sm:$0xff]
        %v1555 = vld [vmem:[%s198 + $0x60] sm:$0xff]
        %v1556 = vld [vmem:[%s198 + $0x68] sm:$0xff]
        %v1557 = vld [vmem:[%s198 + $0x70] sm:$0xff]
        %v1558 = vld [vmem:[%s198 + $0x78] sm:$0xff]
        %v1559 = vld [vmem:[%s198 + $0x80] sm:$0xff]
        %v1560 = vld [vmem:[%s198 + $0x88] sm:$0xff]
        %v1561 = vld [vmem:[%s198 + $0x90] sm:$0xff]
        %v1562 = vld [vmem:[%s198 + $0x98] sm:$0xff]
        %v1563 = vld [vmem:[%s198 + $0xa0] sm:$0xff]
        %v1564 = vld [vmem:[%s198 + $0xa8] sm:$0xff]
        %v1565 = vld [vmem:[%s198 + $0xb0] sm:$0xff]
        %v1566 = vld [vmem:[%s198 + $0xb8] sm:$0xff]
        %v1567 = vld [vmem:[%s198 + $0xc0] sm:$0xff]
        %v1568 = vld [vmem:[%s198 + $0xc8] sm:$0xff]
        %v1569 = vld [vmem:[%s198 + $0xd0] sm:$0xff]
        %v1570 = vld [vmem:[%s198 + $0xd8] sm:$0xff]
        %v1571 = vld [vmem:[%s198 + $0xe0] sm:$0xff]
        %v1572 = vld [vmem:[%s198 + $0xe8] sm:$0xff]
        %v1573 = vld [vmem:[%s198 + $0xf0] sm:$0xff]
        %v1574 = vld [vmem:[%s198 + $0xf8] sm:$0xff]
        %v1575 = vld [vmem:[%s198 + $0x100] sm:$0xff]
        %v1576 = vld [vmem:[%s198 + $0x108] sm:$0xff]
        %v1577 = vld [vmem:[%s198 + $0x110] sm:$0xff]
        %v1578 = vld [vmem:[%s198 + $0x118] sm:$0xff]
        %v1579 = vld [vmem:[%s198 + $0x120] sm:$0xff]
        %v1580 = vld [vmem:[%s198 + $0x128] sm:$0xff]
        %v1581 = vld [vmem:[%s198 + $0x130] sm:$0xff]
        %v1582 = vld [vmem:[%s198 + $0x138] sm:$0xff]
        %v1583 = vld [vmem:[%s198 + $0x140] sm:$0xff]
        %v1584 = vld [vmem:[%s198 + $0x148] sm:$0xff]
        %v1585 = vld [vmem:[%s198 + $0x150] sm:$0xff]
        %v1586 = vld [vmem:[%s198 + $0x158] sm:$0xff]
        %v1587 = vld [vmem:[%s198 + $0x160] sm:$0xff]
        %v1588 = vld [vmem:[%s198 + $0x168] sm:$0xff]
        %v1589 = vld [vmem:[%s198 + $0x170] sm:$0xff]
        %v1590 = vld [vmem:[%s198 + $0x178] sm:$0xff]
        %v1591 = vld [vmem:[%s198 + $0x180] sm:$0xff]
        %v1592 = vld [vmem:[%s198 + $0x188] sm:$0xff]
        %v1593 = vld [vmem:[%s198 + $0x190] sm:$0xff]
        %v1594 = vld [vmem:[%s198 + $0x198] sm:$0xff]
        %v1595 = vld [vmem:[%s198 + $0x1a0] sm:$0xff]
        %v1596 = vld [vmem:[%s198 + $0x1a8] sm:$0xff]
        %v1597 = vld [vmem:[%s198 + $0x1b0] sm:$0xff]
        %v1598 = vld [vmem:[%s198 + $0x1b8] sm:$0xff]
        %v1599 = vld [vmem:[%s198 + $0x1c0] sm:$0xff]
        %v1600 = vld [vmem:[%s198 + $0x1c8] sm:$0xff]
        %v1601 = vld [vmem:[%s198 + $0x1d0] sm:$0xff]
        %v1602 = vld [vmem:[%s198 + $0x1d8] sm:$0xff]
        %v1603 = vld [vmem:[%s198 + $0x1e0] sm:$0xff]
        %v1604 = vld [vmem:[%s198 + $0x1e8] sm:$0xff]
        %v1605 = vld [vmem:[%s198 + $0x1f0] sm:$0xff]
        %v1606 = vld [vmem:[%s198 + $0x1f8] sm:$0xff]
        %v1607 = vld [vmem:[%s198 + $0x200] sm:$0xff]
        %v1608 = vld [vmem:[%s198 + $0x208] sm:$0xff]
        %v1609 = vld [vmem:[%s198 + $0x210] sm:$0xff]
        %v1610 = vld [vmem:[%s198 + $0x218] sm:$0xff]
        %v1611 = vld [vmem:[%s198 + $0x220] sm:$0xff]
        %v1612 = vld [vmem:[%s198 + $0x228] sm:$0xff]
        %v1613 = vld [vmem:[%s198 + $0x230] sm:$0xff]
        %v1614 = vld [vmem:[%s198 + $0x238] sm:$0xff]
        %v1615 = vld [vmem:[%s198 + $0x240] sm:$0xff]
        %v1616 = vld [vmem:[%s198 + $0x248] sm:$0xff]
        %v1617 = vld [vmem:[%s198 + $0x250] sm:$0xff]
        %v1618 = vld [vmem:[%s198 + $0x258] sm:$0xff]
        %v1619 = vld [vmem:[%s198 + $0x260] sm:$0xff]
        %v1620 = vld [vmem:[%s198 + $0x268] sm:$0xff]
        %v1621 = vld [vmem:[%s198 + $0x270] sm:$0xff]
        %v1622 = vld [vmem:[%s198 + $0x278] sm:$0xff]
        %v1623 = vld [vmem:[%s198 + $0x280] sm:$0xff]
        %v1624 = vld [vmem:[%s198 + $0x288] sm:$0xff]
        %v1625 = vld [vmem:[%s198 + $0x290] sm:$0xff]
        %v1626 = vld [vmem:[%s198 + $0x298] sm:$0xff]
        %v1627 = vld [vmem:[%s198 + $0x2a0] sm:$0xff]
        %v1628 = vld [vmem:[%s198 + $0x2a8] sm:$0xff]
        %v1629 = vld [vmem:[%s198 + $0x2b0] sm:$0xff]
        %v1630 = vld [vmem:[%s198 + $0x2b8] sm:$0xff]
        %v1631 = vld [vmem:[%s198 + $0x2c0] sm:$0xff]
        %v1632 = vld [vmem:[%s198 + $0x2c8] sm:$0xff]
        %v1633 = vld [vmem:[%s198 + $0x2d0] sm:$0xff]
        %v1634 = vld [vmem:[%s198 + $0x2d8] sm:$0xff]
        %v1635 = vld [vmem:[%s198 + $0x2e0] sm:$0xff]
        %v1636 = vld [vmem:[%s198 + $0x2e8] sm:$0xff]
        %v1637 = vld [vmem:[%s198 + $0x2f0] sm:$0xff]
        %v1638 = vld [vmem:[%s198 + $0x2f8] sm:$0xff]
        %v1639 = vld [vmem:[%s198 + $0x300] sm:$0xff]
        %v1640 = vld [vmem:[%s198 + $0x308] sm:$0xff]
        %v1641 = vld [vmem:[%s198 + $0x310] sm:$0xff]
        %v1642 = vld [vmem:[%s198 + $0x318] sm:$0xff]
        %v1643 = vld [vmem:[%s198 + $0x320] sm:$0xff]
        %v1644 = vld [vmem:[%s198 + $0x328] sm:$0xff]
        %v1645 = vld [vmem:[%s198 + $0x330] sm:$0xff]
        %v1646 = vld [vmem:[%s198 + $0x338] sm:$0xff]
        %v1647 = vld [vmem:[%s198 + $0x340] sm:$0xff]
        %v1648 = vld [vmem:[%s198 + $0x348] sm:$0xff]
        %v1649 = vld [vmem:[%s198 + $0x350] sm:$0xff]
        %v1650 = vld [vmem:[%s198 + $0x358] sm:$0xff]
        %v1651 = vld [vmem:[%s198 + $0x360] sm:$0xff]
        %v1652 = vld [vmem:[%s198 + $0x368] sm:$0xff]
        %v1653 = vld [vmem:[%s198 + $0x370] sm:$0xff]
        %v1654 = vld [vmem:[%s198 + $0x378] sm:$0xff]
        %v1655 = vld [vmem:[%s198 + $0x380] sm:$0xff]
        %v1656 = vld [vmem:[%s198 + $0x388] sm:$0xff]
        %v1657 = vld [vmem:[%s198 + $0x390] sm:$0xff]
        %v1658 = vld [vmem:[%s198 + $0x398] sm:$0xff]
        %v1659 = vld [vmem:[%s198 + $0x3a0] sm:$0xff]
        %v1660 = vld [vmem:[%s198 + $0x3a8] sm:$0xff]
        %v1661 = vld [vmem:[%s198 + $0x3b0] sm:$0xff]
        %v1662 = vld [vmem:[%s198 + $0x3b8] sm:$0xff]
        %v1663 = vld [vmem:[%s198 + $0x3c0] sm:$0xff]
        %v1664 = vld [vmem:[%s198 + $0x3c8] sm:$0xff]
        %v1665 = vld [vmem:[%s198 + $0x3d0] sm:$0xff]
        %v1666 = vld [vmem:[%s198 + $0x3d8] sm:$0xff]
        %v1667 = vld [vmem:[%s198 + $0x3e0] sm:$0xff]
        %v1668 = vld [vmem:[%s198 + $0x3e8] sm:$0xff]
        %v1669 = vld [vmem:[%s198 + $0x3f0] sm:$0xff]
        %v1670 = vld [vmem:[%s198 + $0x3f8] sm:$0xff]
        %v1671 = vld [vmem:[%s198 + $0x400] sm:$0xff]
        %v1672 = vld [vmem:[%s198 + $0x408] sm:$0xff]
        %v1673 = vld [vmem:[%s198 + $0x410] sm:$0xff]
        %v1674 = vld [vmem:[%s198 + $0x418] sm:$0xff]
        %v1675 = vld [vmem:[%s198 + $0x420] sm:$0xff]
        %v1676 = vld [vmem:[%s198 + $0x428] sm:$0xff]
        %v1677 = vld [vmem:[%s198 + $0x430] sm:$0xff]
        %v1678 = vld [vmem:[%s198 + $0x438] sm:$0xff]
        %v1679 = vld [vmem:[%s198 + $0x440] sm:$0xff]
        %v1680 = vld [vmem:[%s198 + $0x448] sm:$0xff]
        %v1681 = vld [vmem:[%s198 + $0x450] sm:$0xff]
        %v1682 = vld [vmem:[%s198 + $0x458] sm:$0xff]
        %v1683 = vld [vmem:[%s198 + $0x460] sm:$0xff]
        %v1684 = vld [vmem:[%s198 + $0x468] sm:$0xff]
        %v1685 = vld [vmem:[%s198 + $0x470] sm:$0xff]
        %v1686 = vld [vmem:[%s198 + $0x478] sm:$0xff]
        %v1687 = vld [vmem:[%s198 + $0x480] sm:$0xff]
        %v1688 = vld [vmem:[%s198 + $0x488] sm:$0xff]
        %v1689 = vld [vmem:[%s198 + $0x490] sm:$0xff]
        %v1690 = vld [vmem:[%s198 + $0x498] sm:$0xff]
        %v1691 = vld [vmem:[%s198 + $0x4a0] sm:$0xff]
        %v1692 = vld [vmem:[%s198 + $0x4a8] sm:$0xff]
        %v1693 = vld [vmem:[%s198 + $0x4b0] sm:$0xff]
        %v1694 = vld [vmem:[%s198 + $0x4b8] sm:$0xff]
        %v1695 = vld [vmem:[%s198 + $0x4c0] sm:$0xff]
        %v1696 = vld [vmem:[%s198 + $0x4c8] sm:$0xff]
        %v1697 = vld [vmem:[%s198 + $0x4d0] sm:$0xff]
        %v1698 = vld [vmem:[%s198 + $0x4d8] sm:$0xff]
        %v1699 = vld [vmem:[%s198 + $0x4e0] sm:$0xff]
        %v1700 = vld [vmem:[%s198 + $0x4e8] sm:$0xff]
        %v1701 = vld [vmem:[%s198 + $0x4f0] sm:$0xff]
        %v1702 = vld [vmem:[%s198 + $0x4f8] sm:$0xff]
        %v1703 = vld [vmem:[%s198 + $0x500] sm:$0xff]
        %v1704 = vld [vmem:[%s198 + $0x508] sm:$0xff]
        %v1705 = vld [vmem:[%s198 + $0x510] sm:$0xff]
        %v1706 = vld [vmem:[%s198 + $0x518] sm:$0xff]
        %v1707 = vld [vmem:[%s198 + $0x520] sm:$0xff]
        %v1708 = vld [vmem:[%s198 + $0x528] sm:$0xff]
        %v1709 = vld [vmem:[%s198 + $0x530] sm:$0xff]
        %v1710 = vld [vmem:[%s198 + $0x538] sm:$0xff]
        %v1711 = vld [vmem:[%s198 + $0x540] sm:$0xff]
        %v1712 = vld [vmem:[%s198 + $0x548] sm:$0xff]
        %v1713 = vld [vmem:[%s198 + $0x550] sm:$0xff]
        %v1714 = vld [vmem:[%s198 + $0x558] sm:$0xff]
        %v1715 = vld [vmem:[%s198 + $0x560] sm:$0xff]
        %v1716 = vld [vmem:[%s198 + $0x568] sm:$0xff]
        %v1717 = vld [vmem:[%s198 + $0x570] sm:$0xff]
        %v1718 = vld [vmem:[%s198 + $0x578] sm:$0xff]
        %v1719 = vld [vmem:[%s198 + $0x580] sm:$0xff]
        %v1720 = vld [vmem:[%s198 + $0x588] sm:$0xff]
        %v1721 = vld [vmem:[%s198 + $0x590] sm:$0xff]
        %v1722 = vld [vmem:[%s198 + $0x598] sm:$0xff]
        %v1723 = vld [vmem:[%s198 + $0x5a0] sm:$0xff]
        %v1724 = vld [vmem:[%s198 + $0x5a8] sm:$0xff]
        %v1725 = vld [vmem:[%s198 + $0x5b0] sm:$0xff]
        %v1726 = vld [vmem:[%s198 + $0x5b8] sm:$0xff]
        %v1727 = vld [vmem:[%s198 + $0x5c0] sm:$0xff]
        %v1728 = vld [vmem:[%s198 + $0x5c8] sm:$0xff]
        %v1729 = vld [vmem:[%s198 + $0x5d0] sm:$0xff]
        %v1730 = vld [vmem:[%s198 + $0x5d8] sm:$0xff]
        %v1731 = vld [vmem:[%s198 + $0x5e0] sm:$0xff]
        %v1732 = vld [vmem:[%s198 + $0x5e8] sm:$0xff]
        %v1733 = vld [vmem:[%s198 + $0x5f0] sm:$0xff]
        %v1734 = vld [vmem:[%s198 + $0x5f8] sm:$0xff]
        %v1735 = vld [vmem:[%s198 + $0x600] sm:$0xff]
        %v1736 = vld [vmem:[%s198 + $0x608] sm:$0xff]
        %v1737 = vld [vmem:[%s198 + $0x610] sm:$0xff]
        %v1738 = vld [vmem:[%s198 + $0x618] sm:$0xff]
        %v1739 = vld [vmem:[%s198 + $0x620] sm:$0xff]
        %v1740 = vld [vmem:[%s198 + $0x628] sm:$0xff]
        %v1741 = vld [vmem:[%s198 + $0x630] sm:$0xff]
        %v1742 = vld [vmem:[%s198 + $0x638] sm:$0xff]
        %v1743 = vld [vmem:[%s198 + $0x640] sm:$0xff]
        %v1744 = vld [vmem:[%s198 + $0x648] sm:$0xff]
        %v1745 = vld [vmem:[%s198 + $0x650] sm:$0xff]
        %v1746 = vld [vmem:[%s198 + $0x658] sm:$0xff]
        %v1747 = vld [vmem:[%s198 + $0x660] sm:$0xff]
        %v1748 = vld [vmem:[%s198 + $0x668] sm:$0xff]
        %v1749 = vld [vmem:[%s198 + $0x670] sm:$0xff]
        %v1750 = vld [vmem:[%s198 + $0x678] sm:$0xff]
        %v1751 = vld [vmem:[%s198 + $0x680] sm:$0xff]
        %v1752 = vld [vmem:[%s198 + $0x688] sm:$0xff]
        %v1753 = vld [vmem:[%s198 + $0x690] sm:$0xff]
        %v1754 = vld [vmem:[%s198 + $0x698] sm:$0xff]
        %v1755 = vld [vmem:[%s198 + $0x6a0] sm:$0xff]
        %v1756 = vld [vmem:[%s198 + $0x6a8] sm:$0xff]
        %v1757 = vld [vmem:[%s198 + $0x6b0] sm:$0xff]
        %v1758 = vld [vmem:[%s198 + $0x6b8] sm:$0xff]
        %v1759 = vld [vmem:[%s198 + $0x6c0] sm:$0xff]
        %v1760 = vld [vmem:[%s198 + $0x6c8] sm:$0xff]
        %v1761 = vld [vmem:[%s198 + $0x6d0] sm:$0xff]
        %v1762 = vld [vmem:[%s198 + $0x6d8] sm:$0xff]
        %v1763 = vld [vmem:[%s198 + $0x6e0] sm:$0xff]
        %v1764 = vld [vmem:[%s198 + $0x6e8] sm:$0xff]
        %v1765 = vld [vmem:[%s198 + $0x6f0] sm:$0xff]
        %v1766 = vld [vmem:[%s198 + $0x6f8] sm:$0xff]
        %v1767 = vld [vmem:[%s198 + $0x700] sm:$0xff]
        %v1768 = vld [vmem:[%s198 + $0x708] sm:$0xff]
        %v1769 = vld [vmem:[%s198 + $0x710] sm:$0xff]
        %v1770 = vld [vmem:[%s198 + $0x718] sm:$0xff]
        %v1771 = vld [vmem:[%s198 + $0x720] sm:$0xff]
        %v1772 = vld [vmem:[%s198 + $0x728] sm:$0xff]
        %v1773 = vld [vmem:[%s198 + $0x730] sm:$0xff]
        %v1774 = vld [vmem:[%s198 + $0x738] sm:$0xff]
        %v1775 = vld [vmem:[%s198 + $0x740] sm:$0xff]
        %v1776 = vld [vmem:[%s198 + $0x748] sm:$0xff]
        %v1777 = vld [vmem:[%s198 + $0x750] sm:$0xff]
        %v1778 = vld [vmem:[%s198 + $0x758] sm:$0xff]
        %v1779 = vld [vmem:[%s198 + $0x760] sm:$0xff]
        %v1780 = vld [vmem:[%s198 + $0x768] sm:$0xff]
        %v1781 = vld [vmem:[%s198 + $0x770] sm:$0xff]
        %v1782 = vld [vmem:[%s198 + $0x778] sm:$0xff]
        %v1783 = vld [vmem:[%s198 + $0x780] sm:$0xff]
        %v1784 = vld [vmem:[%s198 + $0x788] sm:$0xff]
        %v1785 = vld [vmem:[%s198 + $0x790] sm:$0xff]
        %v1786 = vld [vmem:[%s198 + $0x798] sm:$0xff]
        %v1787 = vld [vmem:[%s198 + $0x7a0] sm:$0xff]
        %v1788 = vld [vmem:[%s198 + $0x7a8] sm:$0xff]
        %v1789 = vld [vmem:[%s198 + $0x7b0] sm:$0xff]
        %v1790 = vld [vmem:[%s198 + $0x7b8] sm:$0xff]
        %v1791 = vld [vmem:[%s198 + $0x7c0] sm:$0xff]
        %v1792 = vld [vmem:[%s198 + $0x7c8] sm:$0xff]
        %v1793 = vld [vmem:[%s198 + $0x7d0] sm:$0xff]
        %v1794 = vld [vmem:[%s198 + $0x7d8] sm:$0xff]
        %v1795 = vld [vmem:[%s198 + $0x7e0] sm:$0xff]
        %v1796 = vld [vmem:[%s198 + $0x7e8] sm:$0xff]
        %v1797 = vld [vmem:[%s198 + $0x7f0] sm:$0xff]
        %v1798 = vld [vmem:[%s198 + $0x7f8] sm:$0xff]
        %v1799 = vld [vmem:[%s198 + $0x800] sm:$0xff]
        %v1800 = vld [vmem:[%s198 + $0x808] sm:$0xff]
        %v1801 = vld [vmem:[%s198 + $0x810] sm:$0xff]
        %v1802 = vld [vmem:[%s198 + $0x818] sm:$0xff]
        %v1803 = vld [vmem:[%s198 + $0x820] sm:$0xff]
        %v1804 = vld [vmem:[%s198 + $0x828] sm:$0xff]
        %v1805 = vld [vmem:[%s198 + $0x830] sm:$0xff]
        %v1806 = vld [vmem:[%s198 + $0x838] sm:$0xff]
        %v1807 = vld [vmem:[%s198 + $0x840] sm:$0xff]
        %v1808 = vld [vmem:[%s198 + $0x848] sm:$0xff]
        %v1809 = vld [vmem:[%s198 + $0x850] sm:$0xff]
        %v1810 = vld [vmem:[%s198 + $0x858] sm:$0xff]
        %v1811 = vld [vmem:[%s198 + $0x860] sm:$0xff]
        %v1812 = vld [vmem:[%s198 + $0x868] sm:$0xff]
        %v1813 = vld [vmem:[%s198 + $0x870] sm:$0xff]
        %v1814 = vld [vmem:[%s198 + $0x878] sm:$0xff]
        %v1815 = vld [vmem:[%s198 + $0x880] sm:$0xff]
        %v1816 = vld [vmem:[%s198 + $0x888] sm:$0xff]
        %v1817 = vld [vmem:[%s198 + $0x890] sm:$0xff]
        %v1818 = vld [vmem:[%s198 + $0x898] sm:$0xff]
        %v1819 = vld [vmem:[%s198 + $0x8a0] sm:$0xff]
        %v1820 = vld [vmem:[%s198 + $0x8a8] sm:$0xff]
        %v1821 = vld [vmem:[%s198 + $0x8b0] sm:$0xff]
        %v1822 = vld [vmem:[%s198 + $0x8b8] sm:$0xff]
        %v1823 = vld [vmem:[%s198 + $0x8c0] sm:$0xff]
        %v1824 = vld [vmem:[%s198 + $0x8c8] sm:$0xff]
        %v1825 = vld [vmem:[%s198 + $0x8d0] sm:$0xff]
        %v1826 = vld [vmem:[%s198 + $0x8d8] sm:$0xff]
        %v1827 = vld [vmem:[%s198 + $0x8e0] sm:$0xff]
        %v1828 = vld [vmem:[%s198 + $0x8e8] sm:$0xff]
        %v1829 = vld [vmem:[%s198 + $0x8f0] sm:$0xff]
        %v1830 = vld [vmem:[%s198 + $0x8f8] sm:$0xff]
        %v1831 = vld [vmem:[%s198 + $0x900] sm:$0xff]
        %v1832 = vld [vmem:[%s198 + $0x908] sm:$0xff]
        %v1833 = vld [vmem:[%s198 + $0x910] sm:$0xff]
        %v1834 = vld [vmem:[%s198 + $0x918] sm:$0xff]
        %v1835 = vld [vmem:[%s198 + $0x920] sm:$0xff]
        %v1836 = vld [vmem:[%s198 + $0x928] sm:$0xff]
        %v1837 = vld [vmem:[%s198 + $0x930] sm:$0xff]
        %v1838 = vld [vmem:[%s198 + $0x938] sm:$0xff]
        %v1839 = vld [vmem:[%s198 + $0x940] sm:$0xff]
        %v1840 = vld [vmem:[%s198 + $0x948] sm:$0xff]
        %v1841 = vld [vmem:[%s198 + $0x950] sm:$0xff]
        %v1842 = vld [vmem:[%s198 + $0x958] sm:$0xff]
        %v1843 = vld [vmem:[%s198 + $0x960] sm:$0xff]
        %v1844 = vld [vmem:[%s198 + $0x968] sm:$0xff]
        %v1845 = vld [vmem:[%s198 + $0x970] sm:$0xff]
        %v1846 = vld [vmem:[%s198 + $0x978] sm:$0xff]
        %v1847 = vld [vmem:[%s198 + $0x980] sm:$0xff]
        %v1848 = vld [vmem:[%s198 + $0x988] sm:$0xff]
        %v1849 = vld [vmem:[%s198 + $0x990] sm:$0xff]
        %v1850 = vld [vmem:[%s198 + $0x998] sm:$0xff]
        %v1851 = vld [vmem:[%s198 + $0x9a0] sm:$0xff]
        %v1852 = vld [vmem:[%s198 + $0x9a8] sm:$0xff]
        %v1853 = vld [vmem:[%s198 + $0x9b0] sm:$0xff]
        %v1854 = vld [vmem:[%s198 + $0x9b8] sm:$0xff]
        %v1855 = vld [vmem:[%s198 + $0x9c0] sm:$0xff]
        %v1856 = vld [vmem:[%s198 + $0x9c8] sm:$0xff]
        %v1857 = vld [vmem:[%s198 + $0x9d0] sm:$0xff]
        %v1858 = vld [vmem:[%s198 + $0x9d8] sm:$0xff]
        %v1859 = vld [vmem:[%s198 + $0x9e0] sm:$0xff]
        %v1860 = vld [vmem:[%s198 + $0x9e8] sm:$0xff]
        %v1861 = vld [vmem:[%s198 + $0x9f0] sm:$0xff]
        %v1862 = vld [vmem:[%s198 + $0x9f8] sm:$0xff]
        %v1863 = vld [vmem:[%s198 + $0xa00] sm:$0xff]
        %v1864 = vld [vmem:[%s198 + $0xa08] sm:$0xff]
        %v1865 = vld [vmem:[%s198 + $0xa10] sm:$0xff]
        %v1866 = vld [vmem:[%s198 + $0xa18] sm:$0xff]
        %v1867 = vld [vmem:[%s198 + $0xa20] sm:$0xff]
        %v1868 = vld [vmem:[%s198 + $0xa28] sm:$0xff]
        %v1869 = vld [vmem:[%s198 + $0xa30] sm:$0xff]
        %v1870 = vld [vmem:[%s198 + $0xa38] sm:$0xff]
        %v1871 = vld [vmem:[%s198 + $0xa40] sm:$0xff]
        %v1872 = vld [vmem:[%s198 + $0xa48] sm:$0xff]
        %v1873 = vld [vmem:[%s198 + $0xa50] sm:$0xff]
        %v1874 = vld [vmem:[%s198 + $0xa58] sm:$0xff]
        %v1875 = vld [vmem:[%s198 + $0xa60] sm:$0xff]
        %v1876 = vld [vmem:[%s198 + $0xa68] sm:$0xff]
        %v1877 = vld [vmem:[%s198 + $0xa70] sm:$0xff]
        %v1878 = vld [vmem:[%s198 + $0xa78] sm:$0xff]
        %v1879 = vld [vmem:[%s198 + $0xa80] sm:$0xff]
        %v1880 = vld [vmem:[%s198 + $0xa88] sm:$0xff]
        %v1881 = vld [vmem:[%s198 + $0xa90] sm:$0xff]
        %v1882 = vld [vmem:[%s198 + $0xa98] sm:$0xff]
        %v1883 = vld [vmem:[%s198 + $0xaa0] sm:$0xff]
        %v1884 = vld [vmem:[%s198 + $0xaa8] sm:$0xff]
        %v1885 = vld [vmem:[%s198 + $0xab0] sm:$0xff]
        %v1886 = vld [vmem:[%s198 + $0xab8] sm:$0xff]
        %v1887 = vld [vmem:[%s198 + $0xac0] sm:$0xff]
        %v1888 = vld [vmem:[%s198 + $0xac8] sm:$0xff]
        %v1889 = vld [vmem:[%s198 + $0xad0] sm:$0xff]
        %v1890 = vld [vmem:[%s198 + $0xad8] sm:$0xff]
        %v1891 = vld [vmem:[%s198 + $0xae0] sm:$0xff]
        %v1892 = vld [vmem:[%s198 + $0xae8] sm:$0xff]
        %v1893 = vld [vmem:[%s198 + $0xaf0] sm:$0xff]
        %v1894 = vld [vmem:[%s198 + $0xaf8] sm:$0xff]
        %v1895 = vld [vmem:[%s198 + $0xb00] sm:$0xff]
        %v1896 = vld [vmem:[%s198 + $0xb08] sm:$0xff]
        %v1897 = vld [vmem:[%s198 + $0xb10] sm:$0xff]
        %v1898 = vld [vmem:[%s198 + $0xb18] sm:$0xff]
        %v1899 = vld [vmem:[%s198 + $0xb20] sm:$0xff]
        %v1900 = vld [vmem:[%s198 + $0xb28] sm:$0xff]
        %v1901 = vld [vmem:[%s198 + $0xb30] sm:$0xff]
        %v1902 = vld [vmem:[%s198 + $0xb38] sm:$0xff]
        %v1903 = vld [vmem:[%s198 + $0xb40] sm:$0xff]
        %v1904 = vld [vmem:[%s198 + $0xb48] sm:$0xff]
        %v1905 = vld [vmem:[%s198 + $0xb50] sm:$0xff]
        %v1906 = vld [vmem:[%s198 + $0xb58] sm:$0xff]
        %v1907 = vld [vmem:[%s198 + $0xb60] sm:$0xff]
        %v1908 = vld [vmem:[%s198 + $0xb68] sm:$0xff]
        %v1909 = vld [vmem:[%s198 + $0xb70] sm:$0xff]
        %v1910 = vld [vmem:[%s198 + $0xb78] sm:$0xff]
        %v1911 = vld [vmem:[%s198 + $0xb80] sm:$0xff]
        %v1912 = vld [vmem:[%s198 + $0xb88] sm:$0xff]
        %v1913 = vld [vmem:[%s198 + $0xb90] sm:$0xff]
        %v1914 = vld [vmem:[%s198 + $0xb98] sm:$0xff]
        %v1915 = vld [vmem:[%s198 + $0xba0] sm:$0xff]
        %v1916 = vld [vmem:[%s198 + $0xba8] sm:$0xff]
        %v1917 = vld [vmem:[%s198 + $0xbb0] sm:$0xff]
        %v1918 = vld [vmem:[%s198 + $0xbb8] sm:$0xff]
        %v1919 = vld [vmem:[%s198 + $0xbc0] sm:$0xff]
        %v1920 = vld [vmem:[%s198 + $0xbc8] sm:$0xff]
        %v1921 = vld [vmem:[%s198 + $0xbd0] sm:$0xff]
        %v1922 = vld [vmem:[%s198 + $0xbd8] sm:$0xff]
        %v1923 = vld [vmem:[%s198 + $0xbe0] sm:$0xff]
        %v1924 = vld [vmem:[%s198 + $0xbe8] sm:$0xff]
        %v1925 = vld [vmem:[%s198 + $0xbf0] sm:$0xff]
        %v1926 = vld [vmem:[%s198 + $0xbf8] sm:$0xff]
        %v1927 = vld [vmem:[%s198 + $0xc00] sm:$0xff]
        %v1928 = vld [vmem:[%s198 + $0xc08] sm:$0xff]
        %v1929 = vld [vmem:[%s198 + $0xc10] sm:$0xff]
        %v1930 = vld [vmem:[%s198 + $0xc18] sm:$0xff]
        %v1931 = vld [vmem:[%s198 + $0xc20] sm:$0xff]
        %v1932 = vld [vmem:[%s198 + $0xc28] sm:$0xff]
        %v1933 = vld [vmem:[%s198 + $0xc30] sm:$0xff]
        %v1934 = vld [vmem:[%s198 + $0xc38] sm:$0xff]
        %v1935 = vld [vmem:[%s198 + $0xc40] sm:$0xff]
        %v1936 = vld [vmem:[%s198 + $0xc48] sm:$0xff]
        %v1937 = vld [vmem:[%s198 + $0xc50] sm:$0xff]
        %v1938 = vld [vmem:[%s198 + $0xc58] sm:$0xff]
        %v1939 = vld [vmem:[%s198 + $0xc60] sm:$0xff]
        %v1940 = vld [vmem:[%s198 + $0xc68] sm:$0xff]
        %v1941 = vld [vmem:[%s198 + $0xc70] sm:$0xff]
        %v1942 = vld [vmem:[%s198 + $0xc78] sm:$0xff]
        %v1943 = vld [vmem:[%s198 + $0xc80] sm:$0xff]
        %v1944 = vld [vmem:[%s198 + $0xc88] sm:$0xff]
        %v1945 = vld [vmem:[%s198 + $0xc90] sm:$0xff]
        %v1946 = vld [vmem:[%s198 + $0xc98] sm:$0xff]
        %v1947 = vld [vmem:[%s198 + $0xca0] sm:$0xff]
        %v1948 = vld [vmem:[%s198 + $0xca8] sm:$0xff]
        %v1949 = vld [vmem:[%s198 + $0xcb0] sm:$0xff]
        %v1950 = vld [vmem:[%s198 + $0xcb8] sm:$0xff]
        %v1951 = vld [vmem:[%s198 + $0xcc0] sm:$0xff]
        %v1952 = vld [vmem:[%s198 + $0xcc8] sm:$0xff]
        %v1953 = vld [vmem:[%s198 + $0xcd0] sm:$0xff]
        %v1954 = vld [vmem:[%s198 + $0xcd8] sm:$0xff]
        %v1955 = vld [vmem:[%s198 + $0xce0] sm:$0xff]
        %v1956 = vld [vmem:[%s198 + $0xce8] sm:$0xff]
        %v1957 = vld [vmem:[%s198 + $0xcf0] sm:$0xff]
        %v1958 = vld [vmem:[%s198 + $0xcf8] sm:$0xff]
        %v1959 = vld [vmem:[%s198 + $0xd00] sm:$0xff]
        %v1960 = vld [vmem:[%s198 + $0xd08] sm:$0xff]
        %v1961 = vld [vmem:[%s198 + $0xd10] sm:$0xff]
        %v1962 = vld [vmem:[%s198 + $0xd18] sm:$0xff]
        %v1963 = vld [vmem:[%s198 + $0xd20] sm:$0xff]
        %v1964 = vld [vmem:[%s198 + $0xd28] sm:$0xff]
        %v1965 = vld [vmem:[%s198 + $0xd30] sm:$0xff]
        %v1966 = vld [vmem:[%s198 + $0xd38] sm:$0xff]
        %v1967 = vld [vmem:[%s198 + $0xd40] sm:$0xff]
        %v1968 = vld [vmem:[%s198 + $0xd48] sm:$0xff]
        %v1969 = vld [vmem:[%s198 + $0xd50] sm:$0xff]
        %v1970 = vld [vmem:[%s198 + $0xd58] sm:$0xff]
        %v1971 = vld [vmem:[%s198 + $0xd60] sm:$0xff]
        %v1972 = vld [vmem:[%s198 + $0xd68] sm:$0xff]
        %v1973 = vld [vmem:[%s198 + $0xd70] sm:$0xff]
        %v1974 = vld [vmem:[%s198 + $0xd78] sm:$0xff]
        %v1975 = vld [vmem:[%s198 + $0xd80] sm:$0xff]
        %v1976 = vld [vmem:[%s198 + $0xd88] sm:$0xff]
        %v1977 = vld [vmem:[%s198 + $0xd90] sm:$0xff]
        %v1978 = vld [vmem:[%s198 + $0xd98] sm:$0xff]
        %v1979 = vld [vmem:[%s198 + $0xda0] sm:$0xff]
        %v1980 = vld [vmem:[%s198 + $0xda8] sm:$0xff]
        %v1981 = vld [vmem:[%s198 + $0xdb0] sm:$0xff]
        %v1982 = vld [vmem:[%s198 + $0xdb8] sm:$0xff]
        %v1983 = vld [vmem:[%s198 + $0xdc0] sm:$0xff]
        %v1984 = vld [vmem:[%s198 + $0xdc8] sm:$0xff]
        %v1985 = vld [vmem:[%s198 + $0xdd0] sm:$0xff]
        %v1986 = vld [vmem:[%s198 + $0xdd8] sm:$0xff]
        %v1987 = vld [vmem:[%s198 + $0xde0] sm:$0xff]
        %v1988 = vld [vmem:[%s198 + $0xde8] sm:$0xff]
        %v1989 = vld [vmem:[%s198 + $0xdf0] sm:$0xff]
        %v1990 = vld [vmem:[%s198 + $0xdf8] sm:$0xff]
        %v1991 = vld [vmem:[%s198 + $0xe00] sm:$0xff]
        %v1992 = vld [vmem:[%s198 + $0xe08] sm:$0xff]
        %v1993 = vld [vmem:[%s198 + $0xe10] sm:$0xff]
        %v1994 = vld [vmem:[%s198 + $0xe18] sm:$0xff]
        %v1995 = vld [vmem:[%s198 + $0xe20] sm:$0xff]
        %v1996 = vld [vmem:[%s198 + $0xe28] sm:$0xff]
        %v1997 = vld [vmem:[%s198 + $0xe30] sm:$0xff]
        %v1998 = vld [vmem:[%s198 + $0xe38] sm:$0xff]
        %v1999 = vld [vmem:[%s198 + $0xe40] sm:$0xff]
        %v2000 = vld [vmem:[%s198 + $0xe48] sm:$0xff]
        %v2001 = vld [vmem:[%s198 + $0xe50] sm:$0xff]
        %v2002 = vld [vmem:[%s198 + $0xe58] sm:$0xff]
        %v2003 = vld [vmem:[%s198 + $0xe60] sm:$0xff]
        %v2004 = vld [vmem:[%s198 + $0xe68] sm:$0xff]
        %v2005 = vld [vmem:[%s198 + $0xe70] sm:$0xff]
        %v2006 = vld [vmem:[%s198 + $0xe78] sm:$0xff]
        %v2007 = vld [vmem:[%s198 + $0xe80] sm:$0xff]
        %v2008 = vld [vmem:[%s198 + $0xe88] sm:$0xff]
        %v2009 = vld [vmem:[%s198 + $0xe90] sm:$0xff]
        %v2010 = vld [vmem:[%s198 + $0xe98] sm:$0xff]
        %v2011 = vld [vmem:[%s198 + $0xea0] sm:$0xff]
        %v2012 = vld [vmem:[%s198 + $0xea8] sm:$0xff]
        %v2013 = vld [vmem:[%s198 + $0xeb0] sm:$0xff]
        %v2014 = vld [vmem:[%s198 + $0xeb8] sm:$0xff]
        %v2015 = vld [vmem:[%s198 + $0xec0] sm:$0xff]
        %v2016 = vld [vmem:[%s198 + $0xec8] sm:$0xff]
        %v2017 = vld [vmem:[%s198 + $0xed0] sm:$0xff]
        %v2018 = vld [vmem:[%s198 + $0xed8] sm:$0xff]
        %v2019 = vld [vmem:[%s198 + $0xee0] sm:$0xff]
        %v2020 = vld [vmem:[%s198 + $0xee8] sm:$0xff]
        %v2021 = vld [vmem:[%s198 + $0xef0] sm:$0xff]
        %v2022 = vld [vmem:[%s198 + $0xef8] sm:$0xff]
        %v2023 = vld [vmem:[%s198 + $0xf00] sm:$0xff]
        %v2024 = vld [vmem:[%s198 + $0xf08] sm:$0xff]
        %v2025 = vld [vmem:[%s198 + $0xf10] sm:$0xff]
        %v2026 = vld [vmem:[%s198 + $0xf18] sm:$0xff]
        %v2027 = vld [vmem:[%s198 + $0xf20] sm:$0xff]
        %v2028 = vld [vmem:[%s198 + $0xf28] sm:$0xff]
        %v2029 = vld [vmem:[%s198 + $0xf30] sm:$0xff]
        %v2030 = vld [vmem:[%s198 + $0xf38] sm:$0xff]
        %v2031 = vld [vmem:[%s198 + $0xf40] sm:$0xff]
        %v2032 = vld [vmem:[%s198 + $0xf48] sm:$0xff]
        %v2033 = vld [vmem:[%s198 + $0xf50] sm:$0xff]
        %v2034 = vld [vmem:[%s198 + $0xf58] sm:$0xff]
        %v2035 = vld [vmem:[%s198 + $0xf60] sm:$0xff]
        %v2036 = vld [vmem:[%s198 + $0xf68] sm:$0xff]
        %v2037 = vld [vmem:[%s198 + $0xf70] sm:$0xff]
        %v2038 = vld [vmem:[%s198 + $0xf78] sm:$0xff]
        %v2039 = vld [vmem:[%s198 + $0xf80] sm:$0xff]
        %v2040 = vld [vmem:[%s198 + $0xf88] sm:$0xff]
        %v2041 = vld [vmem:[%s198 + $0xf90] sm:$0xff]
        %v2042 = vld [vmem:[%s198 + $0xf98] sm:$0xff]
        %v2043 = vld [vmem:[%s198 + $0xfa0] sm:$0xff]
        %v2044 = vld [vmem:[%s198 + $0xfa8] sm:$0xff]
        %v2045 = vld [vmem:[%s198 + $0xfb0] sm:$0xff]
        %v2046 = vld [vmem:[%s198 + $0xfb8] sm:$0xff]
        %v2047 = vld [vmem:[%s198 + $0xfc0] sm:$0xff]
        %v2048 = vld [vmem:[%s198 + $0xfc8] sm:$0xff]
        %v2049 = vld [vmem:[%s198 + $0xfd0] sm:$0xff]
        %v2050 = vld [vmem:[%s198 + $0xfd8] sm:$0xff]
        %v2051 = vld [vmem:[%s198 + $0xfe0] sm:$0xff]
        %v2052 = vld [vmem:[%s198 + $0xfe8] sm:$0xff]
        %v2053 = vld [vmem:[%s198 + $0xff0] sm:$0xff]
        %v2054 = vld [vmem:[%s198 + $0xff8] sm:$0xff]
        %v2055 = vld [vmem:[#allocation2] sm:$0xff]
        %v2056 = vld [vmem:[#allocation2 + $0x8] sm:$0xff]
        %v2057 = vld [vmem:[#allocation2 + $0x10] sm:$0xff]
        %v2058 = vld [vmem:[#allocation2 + $0x18] sm:$0xff]
        %v2059 = vld [vmem:[#allocation2 + $0x20] sm:$0xff]
        %v2060 = vld [vmem:[#allocation2 + $0x28] sm:$0xff]
        %v2061 = vld [vmem:[#allocation2 + $0x30] sm:$0xff]
        %v2062 = vld [vmem:[#allocation2 + $0x38] sm:$0xff]
        %v2063 = vld [vmem:[#allocation2 + $0x40] sm:$0xff]
        %v2064 = vld [vmem:[#allocation2 + $0x48] sm:$0xff]
        %v2065 = vld [vmem:[#allocation2 + $0x50] sm:$0xff]
        %v2066 = vld [vmem:[#allocation2 + $0x58] sm:$0xff]
        %v2067 = vld [vmem:[#allocation2 + $0x60] sm:$0xff]
        %v2068 = vld [vmem:[#allocation2 + $0x68] sm:$0xff]
        %v2069 = vld [vmem:[#allocation2 + $0x70] sm:$0xff]
        %v2070 = vld [vmem:[#allocation2 + $0x78] sm:$0xff]
        %v2071 = vld [vmem:[#allocation2 + $0x80] sm:$0xff]
        %v2072 = vld [vmem:[#allocation2 + $0x88] sm:$0xff]
        %v2073 = vld [vmem:[#allocation2 + $0x90] sm:$0xff]
        %v2074 = vld [vmem:[#allocation2 + $0x98] sm:$0xff]
        %v2075 = vld [vmem:[#allocation2 + $0xa0] sm:$0xff]
        %v2076 = vld [vmem:[#allocation2 + $0xa8] sm:$0xff]
        %v2077 = vld [vmem:[#allocation2 + $0xb0] sm:$0xff]
        %v2078 = vld [vmem:[#allocation2 + $0xb8] sm:$0xff]
        %v2079 = vld [vmem:[#allocation2 + $0xc0] sm:$0xff]
        %v2080 = vld [vmem:[#allocation2 + $0xc8] sm:$0xff]
        %v2081 = vld [vmem:[#allocation2 + $0xd0] sm:$0xff]
        %v2082 = vld [vmem:[#allocation2 + $0xd8] sm:$0xff]
        %v2083 = vld [vmem:[#allocation2 + $0xe0] sm:$0xff]
        %v2084 = vld [vmem:[#allocation2 + $0xe8] sm:$0xff]
        %v2085 = vld [vmem:[#allocation2 + $0xf0] sm:$0xff]
        %v2086 = vld [vmem:[#allocation2 + $0xf8] sm:$0xff]
        %v2087 = vld [vmem:[#allocation2 + $0x100] sm:$0xff]
        %v2088 = vld [vmem:[#allocation2 + $0x108] sm:$0xff]
        %v2089 = vld [vmem:[#allocation2 + $0x110] sm:$0xff]
        %v2090 = vld [vmem:[#allocation2 + $0x118] sm:$0xff]
        %v2091 = vld [vmem:[#allocation2 + $0x120] sm:$0xff]
        %v2092 = vld [vmem:[#allocation2 + $0x128] sm:$0xff]
        %v2093 = vld [vmem:[#allocation2 + $0x130] sm:$0xff]
        %v2094 = vld [vmem:[#allocation2 + $0x138] sm:$0xff]
        %v2095 = vld [vmem:[#allocation2 + $0x140] sm:$0xff]
        %v2096 = vld [vmem:[#allocation2 + $0x148] sm:$0xff]
        %v2097 = vld [vmem:[#allocation2 + $0x150] sm:$0xff]
        %v2098 = vld [vmem:[#allocation2 + $0x158] sm:$0xff]
        %v2099 = vld [vmem:[#allocation2 + $0x160] sm:$0xff]
        %v2100 = vld [vmem:[#allocation2 + $0x168] sm:$0xff]
        %v2101 = vld [vmem:[#allocation2 + $0x170] sm:$0xff]
        %v2102 = vld [vmem:[#allocation2 + $0x178] sm:$0xff]
        %v2103 = vld [vmem:[#allocation2 + $0x180] sm:$0xff]
        %v2104 = vld [vmem:[#allocation2 + $0x188] sm:$0xff]
        %v2105 = vld [vmem:[#allocation2 + $0x190] sm:$0xff]
        %v2106 = vld [vmem:[#allocation2 + $0x198] sm:$0xff]
        %v2107 = vld [vmem:[#allocation2 + $0x1a0] sm:$0xff]
        %v2108 = vld [vmem:[#allocation2 + $0x1a8] sm:$0xff]
        %v2109 = vld [vmem:[#allocation2 + $0x1b0] sm:$0xff]
        %v2110 = vld [vmem:[#allocation2 + $0x1b8] sm:$0xff]
        %v2111 = vld [vmem:[#allocation2 + $0x1c0] sm:$0xff]
        %v2112 = vld [vmem:[#allocation2 + $0x1c8] sm:$0xff]
        %v2113 = vld [vmem:[#allocation2 + $0x1d0] sm:$0xff]
        %v2114 = vld [vmem:[#allocation2 + $0x1d8] sm:$0xff]
        %v2115 = vld [vmem:[#allocation2 + $0x1e0] sm:$0xff]
        %v2116 = vld [vmem:[#allocation2 + $0x1e8] sm:$0xff]
        %v2117 = vld [vmem:[#allocation2 + $0x1f0] sm:$0xff]
        %v2118 = vld [vmem:[#allocation2 + $0x1f8] sm:$0xff]
        %v2119 = vld [vmem:[#allocation2 + $0x200] sm:$0xff]
        %v2120 = vld [vmem:[#allocation2 + $0x208] sm:$0xff]
        %v2121 = vld [vmem:[#allocation2 + $0x210] sm:$0xff]
        %v2122 = vld [vmem:[#allocation2 + $0x218] sm:$0xff]
        %v2123 = vld [vmem:[#allocation2 + $0x220] sm:$0xff]
        %v2124 = vld [vmem:[#allocation2 + $0x228] sm:$0xff]
        %v2125 = vld [vmem:[#allocation2 + $0x230] sm:$0xff]
        %v2126 = vld [vmem:[#allocation2 + $0x238] sm:$0xff]
        %v2127 = vld [vmem:[#allocation2 + $0x240] sm:$0xff]
        %v2128 = vld [vmem:[#allocation2 + $0x248] sm:$0xff]
        %v2129 = vld [vmem:[#allocation2 + $0x250] sm:$0xff]
        %v2130 = vld [vmem:[#allocation2 + $0x258] sm:$0xff]
        %v2131 = vld [vmem:[#allocation2 + $0x260] sm:$0xff]
        %v2132 = vld [vmem:[#allocation2 + $0x268] sm:$0xff]
        %v2133 = vld [vmem:[#allocation2 + $0x270] sm:$0xff]
        %v2134 = vld [vmem:[#allocation2 + $0x278] sm:$0xff]
        %v2135 = vld [vmem:[#allocation2 + $0x280] sm:$0xff]
        %v2136 = vld [vmem:[#allocation2 + $0x288] sm:$0xff]
        %v2137 = vld [vmem:[#allocation2 + $0x290] sm:$0xff]
        %v2138 = vld [vmem:[#allocation2 + $0x298] sm:$0xff]
        %v2139 = vld [vmem:[#allocation2 + $0x2a0] sm:$0xff]
        %v2140 = vld [vmem:[#allocation2 + $0x2a8] sm:$0xff]
        %v2141 = vld [vmem:[#allocation2 + $0x2b0] sm:$0xff]
        %v2142 = vld [vmem:[#allocation2 + $0x2b8] sm:$0xff]
        %v2143 = vld [vmem:[#allocation2 + $0x2c0] sm:$0xff]
        %v2144 = vld [vmem:[#allocation2 + $0x2c8] sm:$0xff]
        %v2145 = vld [vmem:[#allocation2 + $0x2d0] sm:$0xff]
        %v2146 = vld [vmem:[#allocation2 + $0x2d8] sm:$0xff]
        %v2147 = vld [vmem:[#allocation2 + $0x2e0] sm:$0xff]
        %v2148 = vld [vmem:[#allocation2 + $0x2e8] sm:$0xff]
        %v2149 = vld [vmem:[#allocation2 + $0x2f0] sm:$0xff]
        %v2150 = vld [vmem:[#allocation2 + $0x2f8] sm:$0xff]
        %v2151 = vld [vmem:[#allocation2 + $0x300] sm:$0xff]
        %v2152 = vld [vmem:[#allocation2 + $0x308] sm:$0xff]
        %v2153 = vld [vmem:[#allocation2 + $0x310] sm:$0xff]
        %v2154 = vld [vmem:[#allocation2 + $0x318] sm:$0xff]
        %v2155 = vld [vmem:[#allocation2 + $0x320] sm:$0xff]
        %v2156 = vld [vmem:[#allocation2 + $0x328] sm:$0xff]
        %v2157 = vld [vmem:[#allocation2 + $0x330] sm:$0xff]
        %v2158 = vld [vmem:[#allocation2 + $0x338] sm:$0xff]
        %v2159 = vld [vmem:[#allocation2 + $0x340] sm:$0xff]
        %v2160 = vld [vmem:[#allocation2 + $0x348] sm:$0xff]
        %v2161 = vld [vmem:[#allocation2 + $0x350] sm:$0xff]
        %v2162 = vld [vmem:[#allocation2 + $0x358] sm:$0xff]
        %v2163 = vld [vmem:[#allocation2 + $0x360] sm:$0xff]
        %v2164 = vld [vmem:[#allocation2 + $0x368] sm:$0xff]
        %v2165 = vld [vmem:[#allocation2 + $0x370] sm:$0xff]
        %v2166 = vld [vmem:[#allocation2 + $0x378] sm:$0xff]
        %v2167 = vld [vmem:[#allocation2 + $0x380] sm:$0xff]
        %v2168 = vld [vmem:[#allocation2 + $0x388] sm:$0xff]
        %v2169 = vld [vmem:[#allocation2 + $0x390] sm:$0xff]
        %v2170 = vld [vmem:[#allocation2 + $0x398] sm:$0xff]
        %v2171 = vld [vmem:[#allocation2 + $0x3a0] sm:$0xff]
        %v2172 = vld [vmem:[#allocation2 + $0x3a8] sm:$0xff]
        %v2173 = vld [vmem:[#allocation2 + $0x3b0] sm:$0xff]
        %v2174 = vld [vmem:[#allocation2 + $0x3b8] sm:$0xff]
        %v2175 = vld [vmem:[#allocation2 + $0x3c0] sm:$0xff]
        %v2176 = vld [vmem:[#allocation2 + $0x3c8] sm:$0xff]
        %v2177 = vld [vmem:[#allocation2 + $0x3d0] sm:$0xff]
        %v2178 = vld [vmem:[#allocation2 + $0x3d8] sm:$0xff]
        %v2179 = vld [vmem:[#allocation2 + $0x3e0] sm:$0xff]
        %v2180 = vld [vmem:[#allocation2 + $0x3e8] sm:$0xff]
        %v2181 = vld [vmem:[#allocation2 + $0x3f0] sm:$0xff]
        %v2182 = vld [vmem:[#allocation2 + $0x3f8] sm:$0xff]
        %v2183 = vld [vmem:[#allocation2 + $0x400] sm:$0xff]
        %v2184 = vld [vmem:[#allocation2 + $0x408] sm:$0xff]
        %v2185 = vld [vmem:[#allocation2 + $0x410] sm:$0xff]
        %v2186 = vld [vmem:[#allocation2 + $0x418] sm:$0xff]
        %v2187 = vld [vmem:[#allocation2 + $0x420] sm:$0xff]
        %v2188 = vld [vmem:[#allocation2 + $0x428] sm:$0xff]
        %v2189 = vld [vmem:[#allocation2 + $0x430] sm:$0xff]
        %v2190 = vld [vmem:[#allocation2 + $0x438] sm:$0xff]
        %v2191 = vld [vmem:[#allocation2 + $0x440] sm:$0xff]
        %v2192 = vld [vmem:[#allocation2 + $0x448] sm:$0xff]
        %v2193 = vld [vmem:[#allocation2 + $0x450] sm:$0xff]
        %v2194 = vld [vmem:[#allocation2 + $0x458] sm:$0xff]
        %v2195 = vld [vmem:[#allocation2 + $0x460] sm:$0xff]
        %v2196 = vld [vmem:[#allocation2 + $0x468] sm:$0xff]
        %v2197 = vld [vmem:[#allocation2 + $0x470] sm:$0xff]
        %v2198 = vld [vmem:[#allocation2 + $0x478] sm:$0xff]
        %v2199 = vld [vmem:[#allocation2 + $0x480] sm:$0xff]
        %v2200 = vld [vmem:[#allocation2 + $0x488] sm:$0xff]
        %v2201 = vld [vmem:[#allocation2 + $0x490] sm:$0xff]
        %v2202 = vld [vmem:[#allocation2 + $0x498] sm:$0xff]
        %v2203 = vld [vmem:[#allocation2 + $0x4a0] sm:$0xff]
        %v2204 = vld [vmem:[#allocation2 + $0x4a8] sm:$0xff]
        %v2205 = vld [vmem:[#allocation2 + $0x4b0] sm:$0xff]
        %v2206 = vld [vmem:[#allocation2 + $0x4b8] sm:$0xff]
        %v2207 = vld [vmem:[#allocation2 + $0x4c0] sm:$0xff]
        %v2208 = vld [vmem:[#allocation2 + $0x4c8] sm:$0xff]
        %v2209 = vld [vmem:[#allocation2 + $0x4d0] sm:$0xff]
        %v2210 = vld [vmem:[#allocation2 + $0x4d8] sm:$0xff]
        %v2211 = vld [vmem:[#allocation2 + $0x4e0] sm:$0xff]
        %v2212 = vld [vmem:[#allocation2 + $0x4e8] sm:$0xff]
        %v2213 = vld [vmem:[#allocation2 + $0x4f0] sm:$0xff]
        %v2214 = vld [vmem:[#allocation2 + $0x4f8] sm:$0xff]
        %v2215 = vld [vmem:[#allocation2 + $0x500] sm:$0xff]
        %v2216 = vld [vmem:[#allocation2 + $0x508] sm:$0xff]
        %v2217 = vld [vmem:[#allocation2 + $0x510] sm:$0xff]
        %v2218 = vld [vmem:[#allocation2 + $0x518] sm:$0xff]
        %v2219 = vld [vmem:[#allocation2 + $0x520] sm:$0xff]
        %v2220 = vld [vmem:[#allocation2 + $0x528] sm:$0xff]
        %v2221 = vld [vmem:[#allocation2 + $0x530] sm:$0xff]
        %v2222 = vld [vmem:[#allocation2 + $0x538] sm:$0xff]
        %v2223 = vld [vmem:[#allocation2 + $0x540] sm:$0xff]
        %v2224 = vld [vmem:[#allocation2 + $0x548] sm:$0xff]
        %v2225 = vld [vmem:[#allocation2 + $0x550] sm:$0xff]
        %v2226 = vld [vmem:[#allocation2 + $0x558] sm:$0xff]
        %v2227 = vld [vmem:[#allocation2 + $0x560] sm:$0xff]
        %v2228 = vld [vmem:[#allocation2 + $0x568] sm:$0xff]
        %v2229 = vld [vmem:[#allocation2 + $0x570] sm:$0xff]
        %v2230 = vld [vmem:[#allocation2 + $0x578] sm:$0xff]
        %v2231 = vld [vmem:[#allocation2 + $0x580] sm:$0xff]
        %v2232 = vld [vmem:[#allocation2 + $0x588] sm:$0xff]
        %v2233 = vld [vmem:[#allocation2 + $0x590] sm:$0xff]
        %v2234 = vld [vmem:[#allocation2 + $0x598] sm:$0xff]
        %v2235 = vld [vmem:[#allocation2 + $0x5a0] sm:$0xff]
        %v2236 = vld [vmem:[#allocation2 + $0x5a8] sm:$0xff]
        %v2237 = vld [vmem:[#allocation2 + $0x5b0] sm:$0xff]
        %v2238 = vld [vmem:[#allocation2 + $0x5b8] sm:$0xff]
        %v2239 = vld [vmem:[#allocation2 + $0x5c0] sm:$0xff]
        %v2240 = vld [vmem:[#allocation2 + $0x5c8] sm:$0xff]
        %v2241 = vld [vmem:[#allocation2 + $0x5d0] sm:$0xff]
        %v2242 = vld [vmem:[#allocation2 + $0x5d8] sm:$0xff]
        %v2243 = vld [vmem:[#allocation2 + $0x5e0] sm:$0xff]
        %v2244 = vld [vmem:[#allocation2 + $0x5e8] sm:$0xff]
        %v2245 = vld [vmem:[#allocation2 + $0x5f0] sm:$0xff]
        %v2246 = vld [vmem:[#allocation2 + $0x5f8] sm:$0xff]
        %v2247 = vld [vmem:[#allocation2 + $0x600] sm:$0xff]
        %v2248 = vld [vmem:[#allocation2 + $0x608] sm:$0xff]
        %v2249 = vld [vmem:[#allocation2 + $0x610] sm:$0xff]
        %v2250 = vld [vmem:[#allocation2 + $0x618] sm:$0xff]
        %v2251 = vld [vmem:[#allocation2 + $0x620] sm:$0xff]
        %v2252 = vld [vmem:[#allocation2 + $0x628] sm:$0xff]
        %v2253 = vld [vmem:[#allocation2 + $0x630] sm:$0xff]
        %v2254 = vld [vmem:[#allocation2 + $0x638] sm:$0xff]
        %v2255 = vld [vmem:[#allocation2 + $0x640] sm:$0xff]
        %v2256 = vld [vmem:[#allocation2 + $0x648] sm:$0xff]
        %v2257 = vld [vmem:[#allocation2 + $0x650] sm:$0xff]
        %v2258 = vld [vmem:[#allocation2 + $0x658] sm:$0xff]
        %v2259 = vld [vmem:[#allocation2 + $0x660] sm:$0xff]
        %v2260 = vld [vmem:[#allocation2 + $0x668] sm:$0xff]
        %v2261 = vld [vmem:[#allocation2 + $0x670] sm:$0xff]
        %v2262 = vld [vmem:[#allocation2 + $0x678] sm:$0xff]
        %v2263 = vld [vmem:[#allocation2 + $0x680] sm:$0xff]
        %v2264 = vld [vmem:[#allocation2 + $0x688] sm:$0xff]
        %v2265 = vld [vmem:[#allocation2 + $0x690] sm:$0xff]
        %v2266 = vld [vmem:[#allocation2 + $0x698] sm:$0xff]
        %v2267 = vld [vmem:[#allocation2 + $0x6a0] sm:$0xff]
        %v2268 = vld [vmem:[#allocation2 + $0x6a8] sm:$0xff]
        %v2269 = vld [vmem:[#allocation2 + $0x6b0] sm:$0xff]
        %v2270 = vld [vmem:[#allocation2 + $0x6b8] sm:$0xff]
        %v2271 = vld [vmem:[#allocation2 + $0x6c0] sm:$0xff]
        %v2272 = vld [vmem:[#allocation2 + $0x6c8] sm:$0xff]
        %v2273 = vld [vmem:[#allocation2 + $0x6d0] sm:$0xff]
        %v2274 = vld [vmem:[#allocation2 + $0x6d8] sm:$0xff]
        %v2275 = vld [vmem:[#allocation2 + $0x6e0] sm:$0xff]
        %v2276 = vld [vmem:[#allocation2 + $0x6e8] sm:$0xff]
        %v2277 = vld [vmem:[#allocation2 + $0x6f0] sm:$0xff]
        %v2278 = vld [vmem:[#allocation2 + $0x6f8] sm:$0xff]
        %v2279 = vld [vmem:[#allocation2 + $0x700] sm:$0xff]
        %v2280 = vld [vmem:[#allocation2 + $0x708] sm:$0xff]
        %v2281 = vld [vmem:[#allocation2 + $0x710] sm:$0xff]
        %v2282 = vld [vmem:[#allocation2 + $0x718] sm:$0xff]
        %v2283 = vld [vmem:[#allocation2 + $0x720] sm:$0xff]
        %v2284 = vld [vmem:[#allocation2 + $0x728] sm:$0xff]
        %v2285 = vld [vmem:[#allocation2 + $0x730] sm:$0xff]
        %v2286 = vld [vmem:[#allocation2 + $0x738] sm:$0xff]
        %v2287 = vld [vmem:[#allocation2 + $0x740] sm:$0xff]
        %v2288 = vld [vmem:[#allocation2 + $0x748] sm:$0xff]
        %v2289 = vld [vmem:[#allocation2 + $0x750] sm:$0xff]
        %v2290 = vld [vmem:[#allocation2 + $0x758] sm:$0xff]
        %v2291 = vld [vmem:[#allocation2 + $0x760] sm:$0xff]
        %v2292 = vld [vmem:[#allocation2 + $0x768] sm:$0xff]
        %v2293 = vld [vmem:[#allocation2 + $0x770] sm:$0xff]
        %v2294 = vld [vmem:[#allocation2 + $0x778] sm:$0xff]
        %v2295 = vld [vmem:[#allocation2 + $0x780] sm:$0xff]
        %v2296 = vld [vmem:[#allocation2 + $0x788] sm:$0xff]
        %v2297 = vld [vmem:[#allocation2 + $0x790] sm:$0xff]
        %v2298 = vld [vmem:[#allocation2 + $0x798] sm:$0xff]
        %v2299 = vld [vmem:[#allocation2 + $0x7a0] sm:$0xff]
        %v2300 = vld [vmem:[#allocation2 + $0x7a8] sm:$0xff]
        %v2301 = vld [vmem:[#allocation2 + $0x7b0] sm:$0xff]
        %v2302 = vld [vmem:[#allocation2 + $0x7b8] sm:$0xff]
        %v2303 = vld [vmem:[#allocation2 + $0x7c0] sm:$0xff]
        %v2304 = vld [vmem:[#allocation2 + $0x7c8] sm:$0xff]
        %v2305 = vld [vmem:[#allocation2 + $0x7d0] sm:$0xff]
        %v2306 = vld [vmem:[#allocation2 + $0x7d8] sm:$0xff]
        %v2307 = vld [vmem:[#allocation2 + $0x7e0] sm:$0xff]
        %v2308 = vld [vmem:[#allocation2 + $0x7e8] sm:$0xff]
        %v2309 = vld [vmem:[#allocation2 + $0x7f0] sm:$0xff]
        %v2310 = vld [vmem:[#allocation2 + $0x7f8] sm:$0xff]
        %2311 = vmatprep.subr.mxu0 %v2086
        %2312 = vmatpush1.msra.mxu0 %v2085
        %2313 = vmatprep.subr.mxu0 %v2084
        %2314 = vmatpush1.msra.mxu0 %v2083
        %2315 = vmatprep.subr.mxu0 %v2082
        %2316 = vmatpush1.msra.mxu0 %v2081
        %2317 = vmatprep.subr.mxu0 %v2080
        %2318 = vmatpush1.msra.mxu0 %v2079
        %2319 = vmatprep.subr.mxu0 %v2078
        %2320 = vmatpush1.msra.mxu0 %v2077
        %2321 = vmatprep.subr.mxu0 %v2076
        %2322 = vmatpush1.msra.mxu0 %v2075
        %2323 = vmatprep.subr.mxu0 %v2074
        %2324 = vmatpush1.msra.mxu0 %v2073
        %2325 = vmatprep.subr.mxu0 %v2072
        %2326 = vmatpush1.msra.mxu0 %v2071
        %2327 = vmatprep.subr.mxu0 %v2070
        %2328 = vmatpush1.msra.mxu0 %v2069
        %2329 = vmatprep.subr.mxu0 %v2068
        %2330 = vmatpush1.msra.mxu0 %v2067
        %2331 = vmatprep.subr.mxu0 %v2066
        %2332 = vmatpush1.msra.mxu0 %v2065
        %2333 = vmatprep.subr.mxu0 %v2064
        %2334 = vmatpush1.msra.mxu0 %v2063
        %2335 = vmatprep.subr.mxu0 %v2062
        %2336 = vmatpush1.msra.mxu0 %v2061
        %2337 = vmatprep.subr.mxu0 %v2060
        %2338 = vmatpush1.msra.mxu0 %v2059
        %2339 = vmatprep.subr.mxu0 %v2058
        %2340 = vmatpush1.msra.mxu0 %v2057
        %2341 = vmatprep.subr.mxu0 %v2056
        %2342 = vmatpush1.msra.mxu0 %v2055
        %2343 = vmatprep.subr.mxu0 %v2118
        %2344 = vmatpush2.msra.mxu0 %v2117
        %2345 = vmatprep.subr.mxu0 %v2116
        %2346 = vmatpush2.msra.mxu0 %v2115
        %2347 = vmatprep.subr.mxu0 %v2114
        %2348 = vmatpush2.msra.mxu0 %v2113
        %2349 = vmatprep.subr.mxu0 %v2112
        %2350 = vmatpush2.msra.mxu0 %v2111
        %2351 = vmatprep.subr.mxu0 %v2110
        %2352 = vmatpush2.msra.mxu0 %v2109
        %2353 = vmatprep.subr.mxu0 %v2108
        %2354 = vmatpush2.msra.mxu0 %v2107
        %2355 = vmatprep.subr.mxu0 %v2106
        %2356 = vmatpush2.msra.mxu0 %v2105
        %2357 = vmatprep.subr.mxu0 %v2104
        %2358 = vmatpush2.msra.mxu0 %v2103
        %2359 = vmatprep.subr.mxu0 %v2102
        %2360 = vmatpush2.msra.mxu0 %v2101
        %2361 = vmatprep.subr.mxu0 %v2100
        %2362 = vmatpush2.msra.mxu0 %v2099
        %2363 = vmatprep.subr.mxu0 %v2098
        %2364 = vmatpush2.msra.mxu0 %v2097
        %2365 = vmatprep.subr.mxu0 %v2096
        %2366 = vmatpush2.msra.mxu0 %v2095
        %2367 = vmatprep.subr.mxu0 %v2094
        %2368 = vmatpush2.msra.mxu0 %v2093
        %2369 = vmatprep.subr.mxu0 %v2092
        %2370 = vmatpush2.msra.mxu0 %v2091
        %2371 = vmatprep.subr.mxu0 %v2090
        %2372 = vmatpush2.msra.mxu0 %v2089
        %2373 = vmatprep.subr.mxu0 %v2088
        %2374 = vmatpush2.msra.mxu0 %v2087
        %2375 = vmatprep.mubr.f32.mxu0 %v1544
        %2376 = vmatmul.mubr.f32.gmra.mxu0 %v1543
        %v2377 = vpop.f32.mrf.mxu0
        %v2378 = vadd.f32 0.0, %v2377
        %v2379 = vpop.f32.mrf.mxu0
        %v2380 = vadd.f32 0.0, %v2379
        %2381 = vmatprep.mubr.f32.mxu0 %v1552
        %2382 = vmatmul.mubr.f32.gmra.mxu0 %v1551
        %v2383 = vpop.f32.mrf.mxu0
        %v2384 = vadd.f32 0.0, %v2383
        %v2385 = vpop.f32.mrf.mxu0
        %v2386 = vadd.f32 0.0, %v2385
        %2387 = vmatprep.mubr.f32.mxu0 %v1560
        %2388 = vmatmul.mubr.f32.gmra.mxu0 %v1559
        %v2389 = vpop.f32.mrf.mxu0
        %v2390 = vadd.f32 0.0, %v2389
        %v2391 = vpop.f32.mrf.mxu0
        %v2392 = vadd.f32 0.0, %v2391
        %2393 = vmatprep.mubr.f32.mxu0 %v1568
        %2394 = vmatmul.mubr.f32.gmra.mxu0 %v1567
        %v2395 = vpop.f32.mrf.mxu0
        %v2396 = vadd.f32 0.0, %v2395
        %v2397 = vpop.f32.mrf.mxu0
        %v2398 = vadd.f32 0.0, %v2397
        %2399 = vmatprep.mubr.f32.mxu0 %v1576
        %2400 = vmatmul.mubr.f32.gmra.mxu0 %v1575
        %v2401 = vpop.f32.mrf.mxu0
        %v2402 = vadd.f32 0.0, %v2401
        %v2403 = vpop.f32.mrf.mxu0
        %v2404 = vadd.f32 0.0, %v2403
        %2405 = vmatprep.mubr.f32.mxu0 %v1584
        %2406 = vmatmul.mubr.f32.gmra.mxu0 %v1583
        %v2407 = vpop.f32.mrf.mxu0
        %v2408 = vadd.f32 0.0, %v2407
        %v2409 = vpop.f32.mrf.mxu0
        %v2410 = vadd.f32 0.0, %v2409
        %2411 = vmatprep.mubr.f32.mxu0 %v1592
        %2412 = vmatmul.mubr.f32.gmra.mxu0 %v1591
        %v2413 = vpop.f32.mrf.mxu0
        %v2414 = vadd.f32 0.0, %v2413
        %v2415 = vpop.f32.mrf.mxu0
        %v2416 = vadd.f32 0.0, %v2415
        %2417 = vmatprep.mubr.f32.mxu0 %v1600
        %2418 = vmatmul.mubr.f32.gmra.mxu0 %v1599
        %v2419 = vpop.f32.mrf.mxu0
        %v2420 = vadd.f32 0.0, %v2419
        %v2421 = vpop.f32.mrf.mxu0
        %v2422 = vadd.f32 0.0, %v2421
        %2423 = vmatprep.mubr.f32.mxu0 %v1608
        %2424 = vmatmul.mubr.f32.gmra.mxu0 %v1607
        %v2425 = vpop.f32.mrf.mxu0
        %v2426 = vadd.f32 0.0, %v2425
        %v2427 = vpop.f32.mrf.mxu0
        %v2428 = vadd.f32 0.0, %v2427
        %2429 = vmatprep.mubr.f32.mxu0 %v1616
        %2430 = vmatmul.mubr.f32.gmra.mxu0 %v1615
        %v2431 = vpop.f32.mrf.mxu0
        %v2432 = vadd.f32 0.0, %v2431
        %v2433 = vpop.f32.mrf.mxu0
        %v2434 = vadd.f32 0.0, %v2433
        %2435 = vmatprep.mubr.f32.mxu0 %v1624
        %2436 = vmatmul.mubr.f32.gmra.mxu0 %v1623
        %v2437 = vpop.f32.mrf.mxu0
        %v2438 = vadd.f32 0.0, %v2437
        %v2439 = vpop.f32.mrf.mxu0
        %v2440 = vadd.f32 0.0, %v2439
        %2441 = vmatprep.mubr.f32.mxu0 %v1632
        %2442 = vmatmul.mubr.f32.gmra.mxu0 %v1631
        %v2443 = vpop.f32.mrf.mxu0
        %v2444 = vadd.f32 0.0, %v2443
        %v2445 = vpop.f32.mrf.mxu0
        %v2446 = vadd.f32 0.0, %v2445
        %2447 = vmatprep.mubr.f32.mxu0 %v1640
        %2448 = vmatmul.mubr.f32.gmra.mxu0 %v1639
        %v2449 = vpop.f32.mrf.mxu0
        %v2450 = vadd.f32 0.0, %v2449
        %v2451 = vpop.f32.mrf.mxu0
        %v2452 = vadd.f32 0.0, %v2451
        %2453 = vmatprep.mubr.f32.mxu0 %v1648
        %2454 = vmatmul.mubr.f32.gmra.mxu0 %v1647
        %v2455 = vpop.f32.mrf.mxu0
        %v2456 = vadd.f32 0.0, %v2455
        %v2457 = vpop.f32.mrf.mxu0
        %v2458 = vadd.f32 0.0, %v2457
        %2459 = vmatprep.mubr.f32.mxu0 %v1656
        %2460 = vmatmul.mubr.f32.gmra.mxu0 %v1655
        %v2461 = vpop.f32.mrf.mxu0
        %v2462 = vadd.f32 0.0, %v2461
        %v2463 = vpop.f32.mrf.mxu0
        %v2464 = vadd.f32 0.0, %v2463
        %2465 = vmatprep.mubr.f32.mxu0 %v1664
        %2466 = vmatmul.mubr.f32.gmra.mxu0 %v1663
        %v2467 = vpop.f32.mrf.mxu0
        %v2468 = vadd.f32 0.0, %v2467
        %v2469 = vpop.f32.mrf.mxu0
        %v2470 = vadd.f32 0.0, %v2469
        %2471 = vmatprep.mubr.f32.mxu0 %v1672
        %2472 = vmatmul.mubr.f32.gmra.mxu0 %v1671
        %v2473 = vpop.f32.mrf.mxu0
        %v2474 = vadd.f32 0.0, %v2473
        %v2475 = vpop.f32.mrf.mxu0
        %v2476 = vadd.f32 0.0, %v2475
        %2477 = vmatprep.mubr.f32.mxu0 %v1680
        %2478 = vmatmul.mubr.f32.gmra.mxu0 %v1679
        %v2479 = vpop.f32.mrf.mxu0
        %v2480 = vadd.f32 0.0, %v2479
        %v2481 = vpop.f32.mrf.mxu0
        %v2482 = vadd.f32 0.0, %v2481
        %2483 = vmatprep.mubr.f32.mxu0 %v1688
        %2484 = vmatmul.mubr.f32.gmra.mxu0 %v1687
        %v2485 = vpop.f32.mrf.mxu0
        %v2486 = vadd.f32 0.0, %v2485
        %v2487 = vpop.f32.mrf.mxu0
        %v2488 = vadd.f32 0.0, %v2487
        %2489 = vmatprep.mubr.f32.mxu0 %v1696
        %2490 = vmatmul.mubr.f32.gmra.mxu0 %v1695
        %v2491 = vpop.f32.mrf.mxu0
        %v2492 = vadd.f32 0.0, %v2491
        %v2493 = vpop.f32.mrf.mxu0
        %v2494 = vadd.f32 0.0, %v2493
        %2495 = vmatprep.mubr.f32.mxu0 %v1704
        %2496 = vmatmul.mubr.f32.gmra.mxu0 %v1703
        %v2497 = vpop.f32.mrf.mxu0
        %v2498 = vadd.f32 0.0, %v2497
        %v2499 = vpop.f32.mrf.mxu0
        %v2500 = vadd.f32 0.0, %v2499
        %2501 = vmatprep.mubr.f32.mxu0 %v1712
        %2502 = vmatmul.mubr.f32.gmra.mxu0 %v1711
        %v2503 = vpop.f32.mrf.mxu0
        %v2504 = vadd.f32 0.0, %v2503
        %v2505 = vpop.f32.mrf.mxu0
        %v2506 = vadd.f32 0.0, %v2505
        %2507 = vmatprep.mubr.f32.mxu0 %v1720
        %2508 = vmatmul.mubr.f32.gmra.mxu0 %v1719
        %v2509 = vpop.f32.mrf.mxu0
        %v2510 = vadd.f32 0.0, %v2509
        %v2511 = vpop.f32.mrf.mxu0
        %v2512 = vadd.f32 0.0, %v2511
        %2513 = vmatprep.mubr.f32.mxu0 %v1728
        %2514 = vmatmul.mubr.f32.gmra.mxu0 %v1727
        %v2515 = vpop.f32.mrf.mxu0
        %v2516 = vadd.f32 0.0, %v2515
        %v2517 = vpop.f32.mrf.mxu0
        %v2518 = vadd.f32 0.0, %v2517
        %2519 = vmatprep.mubr.f32.mxu0 %v1736
        %2520 = vmatmul.mubr.f32.gmra.mxu0 %v1735
        %v2521 = vpop.f32.mrf.mxu0
        %v2522 = vadd.f32 0.0, %v2521
        %v2523 = vpop.f32.mrf.mxu0
        %v2524 = vadd.f32 0.0, %v2523
        %2525 = vmatprep.mubr.f32.mxu0 %v1744
        %2526 = vmatmul.mubr.f32.gmra.mxu0 %v1743
        %v2527 = vpop.f32.mrf.mxu0
        %v2528 = vadd.f32 0.0, %v2527
        %v2529 = vpop.f32.mrf.mxu0
        %v2530 = vadd.f32 0.0, %v2529
        %2531 = vmatprep.mubr.f32.mxu0 %v1752
        %2532 = vmatmul.mubr.f32.gmra.mxu0 %v1751
        %v2533 = vpop.f32.mrf.mxu0
        %v2534 = vadd.f32 0.0, %v2533
        %v2535 = vpop.f32.mrf.mxu0
        %v2536 = vadd.f32 0.0, %v2535
        %2537 = vmatprep.mubr.f32.mxu0 %v1760
        %2538 = vmatmul.mubr.f32.gmra.mxu0 %v1759
        %v2539 = vpop.f32.mrf.mxu0
        %v2540 = vadd.f32 0.0, %v2539
        %v2541 = vpop.f32.mrf.mxu0
        %v2542 = vadd.f32 0.0, %v2541
        %2543 = vmatprep.mubr.f32.mxu0 %v1768
        %2544 = vmatmul.mubr.f32.gmra.mxu0 %v1767
        %v2545 = vpop.f32.mrf.mxu0
        %v2546 = vadd.f32 0.0, %v2545
        %v2547 = vpop.f32.mrf.mxu0
        %v2548 = vadd.f32 0.0, %v2547
        %2549 = vmatprep.mubr.f32.mxu0 %v1776
        %2550 = vmatmul.mubr.f32.gmra.mxu0 %v1775
        %v2551 = vpop.f32.mrf.mxu0
        %v2552 = vadd.f32 0.0, %v2551
        %v2553 = vpop.f32.mrf.mxu0
        %v2554 = vadd.f32 0.0, %v2553
        %2555 = vmatprep.mubr.f32.mxu0 %v1784
        %2556 = vmatmul.mubr.f32.gmra.mxu0 %v1783
        %v2557 = vpop.f32.mrf.mxu0
        %v2558 = vadd.f32 0.0, %v2557
        %v2559 = vpop.f32.mrf.mxu0
        %v2560 = vadd.f32 0.0, %v2559
        %2561 = vmatprep.mubr.f32.mxu0 %v1792
        %2562 = vmatmul.mubr.f32.gmra.mxu0 %v1791
        %v2563 = vpop.f32.mrf.mxu0
        %v2564 = vadd.f32 0.0, %v2563
        %v2565 = vpop.f32.mrf.mxu0
        %v2566 = vadd.f32 0.0, %v2565
        %2567 = vmatprep.mubr.f32.mxu0 %v1800
        %2568 = vmatmul.mubr.f32.gmra.mxu0 %v1799
        %v2569 = vpop.f32.mrf.mxu0
        %v2570 = vadd.f32 0.0, %v2569
        %v2571 = vpop.f32.mrf.mxu0
        %v2572 = vadd.f32 0.0, %v2571
        %2573 = vmatprep.mubr.f32.mxu0 %v1808
        %2574 = vmatmul.mubr.f32.gmra.mxu0 %v1807
        %v2575 = vpop.f32.mrf.mxu0
        %v2576 = vadd.f32 0.0, %v2575
        %v2577 = vpop.f32.mrf.mxu0
        %v2578 = vadd.f32 0.0, %v2577
        %2579 = vmatprep.mubr.f32.mxu0 %v1816
        %2580 = vmatmul.mubr.f32.gmra.mxu0 %v1815
        %v2581 = vpop.f32.mrf.mxu0
        %v2582 = vadd.f32 0.0, %v2581
        %v2583 = vpop.f32.mrf.mxu0
        %v2584 = vadd.f32 0.0, %v2583
        %2585 = vmatprep.mubr.f32.mxu0 %v1824
        %2586 = vmatmul.mubr.f32.gmra.mxu0 %v1823
        %v2587 = vpop.f32.mrf.mxu0
        %v2588 = vadd.f32 0.0, %v2587
        %v2589 = vpop.f32.mrf.mxu0
        %v2590 = vadd.f32 0.0, %v2589
        %2591 = vmatprep.mubr.f32.mxu0 %v1832
        %2592 = vmatmul.mubr.f32.gmra.mxu0 %v1831
        %v2593 = vpop.f32.mrf.mxu0
        %v2594 = vadd.f32 0.0, %v2593
        %v2595 = vpop.f32.mrf.mxu0
        %v2596 = vadd.f32 0.0, %v2595
        %2597 = vmatprep.mubr.f32.mxu0 %v1840
        %2598 = vmatmul.mubr.f32.gmra.mxu0 %v1839
        %v2599 = vpop.f32.mrf.mxu0
        %v2600 = vadd.f32 0.0, %v2599
        %v2601 = vpop.f32.mrf.mxu0
        %v2602 = vadd.f32 0.0, %v2601
        %2603 = vmatprep.mubr.f32.mxu0 %v1848
        %2604 = vmatmul.mubr.f32.gmra.mxu0 %v1847
        %v2605 = vpop.f32.mrf.mxu0
        %v2606 = vadd.f32 0.0, %v2605
        %v2607 = vpop.f32.mrf.mxu0
        %v2608 = vadd.f32 0.0, %v2607
        %2609 = vmatprep.mubr.f32.mxu0 %v1856
        %2610 = vmatmul.mubr.f32.gmra.mxu0 %v1855
        %v2611 = vpop.f32.mrf.mxu0
        %v2612 = vadd.f32 0.0, %v2611
        %v2613 = vpop.f32.mrf.mxu0
        %v2614 = vadd.f32 0.0, %v2613
        %2615 = vmatprep.mubr.f32.mxu0 %v1864
        %2616 = vmatmul.mubr.f32.gmra.mxu0 %v1863
        %v2617 = vpop.f32.mrf.mxu0
        %v2618 = vadd.f32 0.0, %v2617
        %v2619 = vpop.f32.mrf.mxu0
        %v2620 = vadd.f32 0.0, %v2619
        %2621 = vmatprep.mubr.f32.mxu0 %v1872
        %2622 = vmatmul.mubr.f32.gmra.mxu0 %v1871
        %v2623 = vpop.f32.mrf.mxu0
        %v2624 = vadd.f32 0.0, %v2623
        %v2625 = vpop.f32.mrf.mxu0
        %v2626 = vadd.f32 0.0, %v2625
        %2627 = vmatprep.mubr.f32.mxu0 %v1880
        %2628 = vmatmul.mubr.f32.gmra.mxu0 %v1879
        %v2629 = vpop.f32.mrf.mxu0
        %v2630 = vadd.f32 0.0, %v2629
        %v2631 = vpop.f32.mrf.mxu0
        %v2632 = vadd.f32 0.0, %v2631
        %2633 = vmatprep.mubr.f32.mxu0 %v1888
        %2634 = vmatmul.mubr.f32.gmra.mxu0 %v1887
        %v2635 = vpop.f32.mrf.mxu0
        %v2636 = vadd.f32 0.0, %v2635
        %v2637 = vpop.f32.mrf.mxu0
        %v2638 = vadd.f32 0.0, %v2637
        %2639 = vmatprep.mubr.f32.mxu0 %v1896
        %2640 = vmatmul.mubr.f32.gmra.mxu0 %v1895
        %v2641 = vpop.f32.mrf.mxu0
        %v2642 = vadd.f32 0.0, %v2641
        %v2643 = vpop.f32.mrf.mxu0
        %v2644 = vadd.f32 0.0, %v2643
        %2645 = vmatprep.mubr.f32.mxu0 %v1904
        %2646 = vmatmul.mubr.f32.gmra.mxu0 %v1903
        %v2647 = vpop.f32.mrf.mxu0
        %v2648 = vadd.f32 0.0, %v2647
        %v2649 = vpop.f32.mrf.mxu0
        %v2650 = vadd.f32 0.0, %v2649
        %2651 = vmatprep.mubr.f32.mxu0 %v1912
        %2652 = vmatmul.mubr.f32.gmra.mxu0 %v1911
        %v2653 = vpop.f32.mrf.mxu0
        %v2654 = vadd.f32 0.0, %v2653
        %v2655 = vpop.f32.mrf.mxu0
        %v2656 = vadd.f32 0.0, %v2655
        %2657 = vmatprep.mubr.f32.mxu0 %v1920
        %2658 = vmatmul.mubr.f32.gmra.mxu0 %v1919
        %v2659 = vpop.f32.mrf.mxu0
        %v2660 = vadd.f32 0.0, %v2659
        %v2661 = vpop.f32.mrf.mxu0
        %v2662 = vadd.f32 0.0, %v2661
        %2663 = vmatprep.mubr.f32.mxu0 %v1928
        %2664 = vmatmul.mubr.f32.gmra.mxu0 %v1927
        %v2665 = vpop.f32.mrf.mxu0
        %v2666 = vadd.f32 0.0, %v2665
        %v2667 = vpop.f32.mrf.mxu0
        %v2668 = vadd.f32 0.0, %v2667
        %2669 = vmatprep.mubr.f32.mxu0 %v1936
        %2670 = vmatmul.mubr.f32.gmra.mxu0 %v1935
        %v2671 = vpop.f32.mrf.mxu0
        %v2672 = vadd.f32 0.0, %v2671
        %v2673 = vpop.f32.mrf.mxu0
        %v2674 = vadd.f32 0.0, %v2673
        %2675 = vmatprep.mubr.f32.mxu0 %v1944
        %2676 = vmatmul.mubr.f32.gmra.mxu0 %v1943
        %v2677 = vpop.f32.mrf.mxu0
        %v2678 = vadd.f32 0.0, %v2677
        %v2679 = vpop.f32.mrf.mxu0
        %v2680 = vadd.f32 0.0, %v2679
        %2681 = vmatprep.mubr.f32.mxu0 %v1952
        %2682 = vmatmul.mubr.f32.gmra.mxu0 %v1951
        %v2683 = vpop.f32.mrf.mxu0
        %v2684 = vadd.f32 0.0, %v2683
        %v2685 = vpop.f32.mrf.mxu0
        %v2686 = vadd.f32 0.0, %v2685
        %2687 = vmatprep.mubr.f32.mxu0 %v1960
        %2688 = vmatmul.mubr.f32.gmra.mxu0 %v1959
        %v2689 = vpop.f32.mrf.mxu0
        %v2690 = vadd.f32 0.0, %v2689
        %v2691 = vpop.f32.mrf.mxu0
        %v2692 = vadd.f32 0.0, %v2691
        %2693 = vmatprep.mubr.f32.mxu0 %v1968
        %2694 = vmatmul.mubr.f32.gmra.mxu0 %v1967
        %v2695 = vpop.f32.mrf.mxu0
        %v2696 = vadd.f32 0.0, %v2695
        %v2697 = vpop.f32.mrf.mxu0
        %v2698 = vadd.f32 0.0, %v2697
        %2699 = vmatprep.mubr.f32.mxu0 %v1976
        %2700 = vmatmul.mubr.f32.gmra.mxu0 %v1975
        %v2701 = vpop.f32.mrf.mxu0
        %v2702 = vadd.f32 0.0, %v2701
        %v2703 = vpop.f32.mrf.mxu0
        %v2704 = vadd.f32 0.0, %v2703
        %2705 = vmatprep.mubr.f32.mxu0 %v1984
        %2706 = vmatmul.mubr.f32.gmra.mxu0 %v1983
        %v2707 = vpop.f32.mrf.mxu0
        %v2708 = vadd.f32 0.0, %v2707
        %v2709 = vpop.f32.mrf.mxu0
        %v2710 = vadd.f32 0.0, %v2709
        %2711 = vmatprep.mubr.f32.mxu0 %v1992
        %2712 = vmatmul.mubr.f32.gmra.mxu0 %v1991
        %v2713 = vpop.f32.mrf.mxu0
        %v2714 = vadd.f32 0.0, %v2713
        %v2715 = vpop.f32.mrf.mxu0
        %v2716 = vadd.f32 0.0, %v2715
        %2717 = vmatprep.mubr.f32.mxu0 %v2000
        %2718 = vmatmul.mubr.f32.gmra.mxu0 %v1999
        %v2719 = vpop.f32.mrf.mxu0
        %v2720 = vadd.f32 0.0, %v2719
        %v2721 = vpop.f32.mrf.mxu0
        %v2722 = vadd.f32 0.0, %v2721
        %2723 = vmatprep.mubr.f32.mxu0 %v2008
        %2724 = vmatmul.mubr.f32.gmra.mxu0 %v2007
        %v2725 = vpop.f32.mrf.mxu0
        %v2726 = vadd.f32 0.0, %v2725
        %v2727 = vpop.f32.mrf.mxu0
        %v2728 = vadd.f32 0.0, %v2727
        %2729 = vmatprep.mubr.f32.mxu0 %v2016
        %2730 = vmatmul.mubr.f32.gmra.mxu0 %v2015
        %v2731 = vpop.f32.mrf.mxu0
        %v2732 = vadd.f32 0.0, %v2731
        %v2733 = vpop.f32.mrf.mxu0
        %v2734 = vadd.f32 0.0, %v2733
        %2735 = vmatprep.mubr.f32.mxu0 %v2024
        %2736 = vmatmul.mubr.f32.gmra.mxu0 %v2023
        %v2737 = vpop.f32.mrf.mxu0
        %v2738 = vadd.f32 0.0, %v2737
        %v2739 = vpop.f32.mrf.mxu0
        %v2740 = vadd.f32 0.0, %v2739
        %2741 = vmatprep.mubr.f32.mxu0 %v2032
        %2742 = vmatmul.mubr.f32.gmra.mxu0 %v2031
        %v2743 = vpop.f32.mrf.mxu0
        %v2744 = vadd.f32 0.0, %v2743
        %v2745 = vpop.f32.mrf.mxu0
        %v2746 = vadd.f32 0.0, %v2745
        %2747 = vmatprep.mubr.f32.mxu0 %v2040
        %2748 = vmatmul.mubr.f32.gmra.mxu0 %v2039
        %v2749 = vpop.f32.mrf.mxu0
        %v2750 = vadd.f32 0.0, %v2749
        %v2751 = vpop.f32.mrf.mxu0
        %v2752 = vadd.f32 0.0, %v2751
        %2753 = vmatprep.mubr.f32.mxu0 %v2048
        %2754 = vmatmul.mubr.f32.gmra.mxu0 %v2047
        %v2755 = vpop.f32.mrf.mxu0
        %v2756 = vadd.f32 0.0, %v2755
        %v2757 = vpop.f32.mrf.mxu0
        %v2758 = vadd.f32 0.0, %v2757
        %2759 = vdwg.mxu0
        %2760 = vmatprep.subr.mxu0 %v2150
        %2761 = vmatpush1.msra.mxu0 %v2149
        %2762 = vmatprep.subr.mxu0 %v2148
        %2763 = vmatpush1.msra.mxu0 %v2147
        %2764 = vmatprep.subr.mxu0 %v2146
        %2765 = vmatpush1.msra.mxu0 %v2145
        %2766 = vmatprep.subr.mxu0 %v2144
        %2767 = vmatpush1.msra.mxu0 %v2143
        %2768 = vmatprep.subr.mxu0 %v2142
        %2769 = vmatpush1.msra.mxu0 %v2141
        %2770 = vmatprep.subr.mxu0 %v2140
        %2771 = vmatpush1.msra.mxu0 %v2139
        %2772 = vmatprep.subr.mxu0 %v2138
        %2773 = vmatpush1.msra.mxu0 %v2137
        %2774 = vmatprep.subr.mxu0 %v2136
        %2775 = vmatpush1.msra.mxu0 %v2135
        %2776 = vmatprep.subr.mxu0 %v2134
        %2777 = vmatpush1.msra.mxu0 %v2133
        %2778 = vmatprep.subr.mxu0 %v2132
        %2779 = vmatpush1.msra.mxu0 %v2131
        %2780 = vmatprep.subr.mxu0 %v2130
        %2781 = vmatpush1.msra.mxu0 %v2129
        %2782 = vmatprep.subr.mxu0 %v2128
        %2783 = vmatpush1.msra.mxu0 %v2127
        %2784 = vmatprep.subr.mxu0 %v2126
        %2785 = vmatpush1.msra.mxu0 %v2125
        %2786 = vmatprep.subr.mxu0 %v2124
        %2787 = vmatpush1.msra.mxu0 %v2123
        %2788 = vmatprep.subr.mxu0 %v2122
        %2789 = vmatpush1.msra.mxu0 %v2121
        %2790 = vmatprep.subr.mxu0 %v2120
        %2791 = vmatpush1.msra.mxu0 %v2119
        %2792 = vmatprep.subr.mxu0 %v2182
        %2793 = vmatpush2.msra.mxu0 %v2181
        %2794 = vmatprep.subr.mxu0 %v2180
        %2795 = vmatpush2.msra.mxu0 %v2179
        %2796 = vmatprep.subr.mxu0 %v2178
        %2797 = vmatpush2.msra.mxu0 %v2177
        %2798 = vmatprep.subr.mxu0 %v2176
        %2799 = vmatpush2.msra.mxu0 %v2175
        %2800 = vmatprep.subr.mxu0 %v2174
        %2801 = vmatpush2.msra.mxu0 %v2173
        %2802 = vmatprep.subr.mxu0 %v2172
        %2803 = vmatpush2.msra.mxu0 %v2171
        %2804 = vmatprep.subr.mxu0 %v2170
        %2805 = vmatpush2.msra.mxu0 %v2169
        %2806 = vmatprep.subr.mxu0 %v2168
        %2807 = vmatpush2.msra.mxu0 %v2167
        %2808 = vmatprep.subr.mxu0 %v2166
        %2809 = vmatpush2.msra.mxu0 %v2165
        %2810 = vmatprep.subr.mxu0 %v2164
        %2811 = vmatpush2.msra.mxu0 %v2163
        %2812 = vmatprep.subr.mxu0 %v2162
        %2813 = vmatpush2.msra.mxu0 %v2161
        %2814 = vmatprep.subr.mxu0 %v2160
        %2815 = vmatpush2.msra.mxu0 %v2159
        %2816 = vmatprep.subr.mxu0 %v2158
        %2817 = vmatpush2.msra.mxu0 %v2157
        %2818 = vmatprep.subr.mxu0 %v2156
        %2819 = vmatpush2.msra.mxu0 %v2155
        %2820 = vmatprep.subr.mxu0 %v2154
        %2821 = vmatpush2.msra.mxu0 %v2153
        %2822 = vmatprep.subr.mxu0 %v2152
        %2823 = vmatpush2.msra.mxu0 %v2151
        %2824 = vmatprep.mubr.f32.mxu0 %v1546
        %2825 = vmatmul.mubr.f32.gmra.mxu0 %v1545
        %v2826 = vpop.f32.mrf.mxu0
        %v2827 = vadd.f32 %v2378, %v2826
        %v2828 = vpop.f32.mrf.mxu0
        %v2829 = vadd.f32 %v2380, %v2828
        %2830 = vmatprep.mubr.f32.mxu0 %v1554
        %2831 = vmatmul.mubr.f32.gmra.mxu0 %v1553
        %v2832 = vpop.f32.mrf.mxu0
        %v2833 = vadd.f32 %v2384, %v2832
        %v2834 = vpop.f32.mrf.mxu0
        %v2835 = vadd.f32 %v2386, %v2834
        %2836 = vmatprep.mubr.f32.mxu0 %v1562
        %2837 = vmatmul.mubr.f32.gmra.mxu0 %v1561
        %v2838 = vpop.f32.mrf.mxu0
        %v2839 = vadd.f32 %v2390, %v2838
        %v2840 = vpop.f32.mrf.mxu0
        %v2841 = vadd.f32 %v2392, %v2840
        %2842 = vmatprep.mubr.f32.mxu0 %v1570
        %2843 = vmatmul.mubr.f32.gmra.mxu0 %v1569
        %v2844 = vpop.f32.mrf.mxu0
        %v2845 = vadd.f32 %v2396, %v2844
        %v2846 = vpop.f32.mrf.mxu0
        %v2847 = vadd.f32 %v2398, %v2846
        %2848 = vmatprep.mubr.f32.mxu0 %v1578
        %2849 = vmatmul.mubr.f32.gmra.mxu0 %v1577
        %v2850 = vpop.f32.mrf.mxu0
        %v2851 = vadd.f32 %v2402, %v2850
        %v2852 = vpop.f32.mrf.mxu0
        %v2853 = vadd.f32 %v2404, %v2852
        %2854 = vmatprep.mubr.f32.mxu0 %v1586
        %2855 = vmatmul.mubr.f32.gmra.mxu0 %v1585
        %v2856 = vpop.f32.mrf.mxu0
        %v2857 = vadd.f32 %v2408, %v2856
        %v2858 = vpop.f32.mrf.mxu0
        %v2859 = vadd.f32 %v2410, %v2858
        %2860 = vmatprep.mubr.f32.mxu0 %v1594
        %2861 = vmatmul.mubr.f32.gmra.mxu0 %v1593
        %v2862 = vpop.f32.mrf.mxu0
        %v2863 = vadd.f32 %v2414, %v2862
        %v2864 = vpop.f32.mrf.mxu0
        %v2865 = vadd.f32 %v2416, %v2864
        %2866 = vmatprep.mubr.f32.mxu0 %v1602
        %2867 = vmatmul.mubr.f32.gmra.mxu0 %v1601
        %v2868 = vpop.f32.mrf.mxu0
        %v2869 = vadd.f32 %v2420, %v2868
        %v2870 = vpop.f32.mrf.mxu0
        %v2871 = vadd.f32 %v2422, %v2870
        %2872 = vmatprep.mubr.f32.mxu0 %v1610
        %2873 = vmatmul.mubr.f32.gmra.mxu0 %v1609
        %v2874 = vpop.f32.mrf.mxu0
        %v2875 = vadd.f32 %v2426, %v2874
        %v2876 = vpop.f32.mrf.mxu0
        %v2877 = vadd.f32 %v2428, %v2876
        %2878 = vmatprep.mubr.f32.mxu0 %v1618
        %2879 = vmatmul.mubr.f32.gmra.mxu0 %v1617
        %v2880 = vpop.f32.mrf.mxu0
        %v2881 = vadd.f32 %v2432, %v2880
        %v2882 = vpop.f32.mrf.mxu0
        %v2883 = vadd.f32 %v2434, %v2882
        %2884 = vmatprep.mubr.f32.mxu0 %v1626
        %2885 = vmatmul.mubr.f32.gmra.mxu0 %v1625
        %v2886 = vpop.f32.mrf.mxu0
        %v2887 = vadd.f32 %v2438, %v2886
        %v2888 = vpop.f32.mrf.mxu0
        %v2889 = vadd.f32 %v2440, %v2888
        %2890 = vmatprep.mubr.f32.mxu0 %v1634
        %2891 = vmatmul.mubr.f32.gmra.mxu0 %v1633
        %v2892 = vpop.f32.mrf.mxu0
        %v2893 = vadd.f32 %v2444, %v2892
        %v2894 = vpop.f32.mrf.mxu0
        %v2895 = vadd.f32 %v2446, %v2894
        %2896 = vmatprep.mubr.f32.mxu0 %v1642
        %2897 = vmatmul.mubr.f32.gmra.mxu0 %v1641
        %v2898 = vpop.f32.mrf.mxu0
        %v2899 = vadd.f32 %v2450, %v2898
        %v2900 = vpop.f32.mrf.mxu0
        %v2901 = vadd.f32 %v2452, %v2900
        %2902 = vmatprep.mubr.f32.mxu0 %v1650
        %2903 = vmatmul.mubr.f32.gmra.mxu0 %v1649
        %v2904 = vpop.f32.mrf.mxu0
        %v2905 = vadd.f32 %v2456, %v2904
        %v2906 = vpop.f32.mrf.mxu0
        %v2907 = vadd.f32 %v2458, %v2906
        %2908 = vmatprep.mubr.f32.mxu0 %v1658
        %2909 = vmatmul.mubr.f32.gmra.mxu0 %v1657
        %v2910 = vpop.f32.mrf.mxu0
        %v2911 = vadd.f32 %v2462, %v2910
        %v2912 = vpop.f32.mrf.mxu0
        %v2913 = vadd.f32 %v2464, %v2912
        %2914 = vmatprep.mubr.f32.mxu0 %v1666
        %2915 = vmatmul.mubr.f32.gmra.mxu0 %v1665
        %v2916 = vpop.f32.mrf.mxu0
        %v2917 = vadd.f32 %v2468, %v2916
        %v2918 = vpop.f32.mrf.mxu0
        %v2919 = vadd.f32 %v2470, %v2918
        %2920 = vmatprep.mubr.f32.mxu0 %v1674
        %2921 = vmatmul.mubr.f32.gmra.mxu0 %v1673
        %v2922 = vpop.f32.mrf.mxu0
        %v2923 = vadd.f32 %v2474, %v2922
        %v2924 = vpop.f32.mrf.mxu0
        %v2925 = vadd.f32 %v2476, %v2924
        %2926 = vmatprep.mubr.f32.mxu0 %v1682
        %2927 = vmatmul.mubr.f32.gmra.mxu0 %v1681
        %v2928 = vpop.f32.mrf.mxu0
        %v2929 = vadd.f32 %v2480, %v2928
        %v2930 = vpop.f32.mrf.mxu0
        %v2931 = vadd.f32 %v2482, %v2930
        %2932 = vmatprep.mubr.f32.mxu0 %v1690
        %2933 = vmatmul.mubr.f32.gmra.mxu0 %v1689
        %v2934 = vpop.f32.mrf.mxu0
        %v2935 = vadd.f32 %v2486, %v2934
        %v2936 = vpop.f32.mrf.mxu0
        %v2937 = vadd.f32 %v2488, %v2936
        %2938 = vmatprep.mubr.f32.mxu0 %v1698
        %2939 = vmatmul.mubr.f32.gmra.mxu0 %v1697
        %v2940 = vpop.f32.mrf.mxu0
        %v2941 = vadd.f32 %v2492, %v2940
        %v2942 = vpop.f32.mrf.mxu0
        %v2943 = vadd.f32 %v2494, %v2942
        %2944 = vmatprep.mubr.f32.mxu0 %v1706
        %2945 = vmatmul.mubr.f32.gmra.mxu0 %v1705
        %v2946 = vpop.f32.mrf.mxu0
        %v2947 = vadd.f32 %v2498, %v2946
        %v2948 = vpop.f32.mrf.mxu0
        %v2949 = vadd.f32 %v2500, %v2948
        %2950 = vmatprep.mubr.f32.mxu0 %v1714
        %2951 = vmatmul.mubr.f32.gmra.mxu0 %v1713
        %v2952 = vpop.f32.mrf.mxu0
        %v2953 = vadd.f32 %v2504, %v2952
        %v2954 = vpop.f32.mrf.mxu0
        %v2955 = vadd.f32 %v2506, %v2954
        %2956 = vmatprep.mubr.f32.mxu0 %v1722
        %2957 = vmatmul.mubr.f32.gmra.mxu0 %v1721
        %v2958 = vpop.f32.mrf.mxu0
        %v2959 = vadd.f32 %v2510, %v2958
        %v2960 = vpop.f32.mrf.mxu0
        %v2961 = vadd.f32 %v2512, %v2960
        %2962 = vmatprep.mubr.f32.mxu0 %v1730
        %2963 = vmatmul.mubr.f32.gmra.mxu0 %v1729
        %v2964 = vpop.f32.mrf.mxu0
        %v2965 = vadd.f32 %v2516, %v2964
        %v2966 = vpop.f32.mrf.mxu0
        %v2967 = vadd.f32 %v2518, %v2966
        %2968 = vmatprep.mubr.f32.mxu0 %v1738
        %2969 = vmatmul.mubr.f32.gmra.mxu0 %v1737
        %v2970 = vpop.f32.mrf.mxu0
        %v2971 = vadd.f32 %v2522, %v2970
        %v2972 = vpop.f32.mrf.mxu0
        %v2973 = vadd.f32 %v2524, %v2972
        %2974 = vmatprep.mubr.f32.mxu0 %v1746
        %2975 = vmatmul.mubr.f32.gmra.mxu0 %v1745
        %v2976 = vpop.f32.mrf.mxu0
        %v2977 = vadd.f32 %v2528, %v2976
        %v2978 = vpop.f32.mrf.mxu0
        %v2979 = vadd.f32 %v2530, %v2978
        %2980 = vmatprep.mubr.f32.mxu0 %v1754
        %2981 = vmatmul.mubr.f32.gmra.mxu0 %v1753
        %v2982 = vpop.f32.mrf.mxu0
        %v2983 = vadd.f32 %v2534, %v2982
        %v2984 = vpop.f32.mrf.mxu0
        %v2985 = vadd.f32 %v2536, %v2984
        %2986 = vmatprep.mubr.f32.mxu0 %v1762
        %2987 = vmatmul.mubr.f32.gmra.mxu0 %v1761
        %v2988 = vpop.f32.mrf.mxu0
        %v2989 = vadd.f32 %v2540, %v2988
        %v2990 = vpop.f32.mrf.mxu0
        %v2991 = vadd.f32 %v2542, %v2990
        %2992 = vmatprep.mubr.f32.mxu0 %v1770
        %2993 = vmatmul.mubr.f32.gmra.mxu0 %v1769
        %v2994 = vpop.f32.mrf.mxu0
        %v2995 = vadd.f32 %v2546, %v2994
        %v2996 = vpop.f32.mrf.mxu0
        %v2997 = vadd.f32 %v2548, %v2996
        %2998 = vmatprep.mubr.f32.mxu0 %v1778
        %2999 = vmatmul.mubr.f32.gmra.mxu0 %v1777
        %v3000 = vpop.f32.mrf.mxu0
        %v3001 = vadd.f32 %v2552, %v3000
        %v3002 = vpop.f32.mrf.mxu0
        %v3003 = vadd.f32 %v2554, %v3002
        %3004 = vmatprep.mubr.f32.mxu0 %v1786
        %3005 = vmatmul.mubr.f32.gmra.mxu0 %v1785
        %v3006 = vpop.f32.mrf.mxu0
        %v3007 = vadd.f32 %v2558, %v3006
        %v3008 = vpop.f32.mrf.mxu0
        %v3009 = vadd.f32 %v2560, %v3008
        %3010 = vmatprep.mubr.f32.mxu0 %v1794
        %3011 = vmatmul.mubr.f32.gmra.mxu0 %v1793
        %v3012 = vpop.f32.mrf.mxu0
        %v3013 = vadd.f32 %v2564, %v3012
        %v3014 = vpop.f32.mrf.mxu0
        %v3015 = vadd.f32 %v2566, %v3014
        %3016 = vmatprep.mubr.f32.mxu0 %v1802
        %3017 = vmatmul.mubr.f32.gmra.mxu0 %v1801
        %v3018 = vpop.f32.mrf.mxu0
        %v3019 = vadd.f32 %v2570, %v3018
        %v3020 = vpop.f32.mrf.mxu0
        %v3021 = vadd.f32 %v2572, %v3020
        %3022 = vmatprep.mubr.f32.mxu0 %v1810
        %3023 = vmatmul.mubr.f32.gmra.mxu0 %v1809
        %v3024 = vpop.f32.mrf.mxu0
        %v3025 = vadd.f32 %v2576, %v3024
        %v3026 = vpop.f32.mrf.mxu0
        %v3027 = vadd.f32 %v2578, %v3026
        %3028 = vmatprep.mubr.f32.mxu0 %v1818
        %3029 = vmatmul.mubr.f32.gmra.mxu0 %v1817
        %v3030 = vpop.f32.mrf.mxu0
        %v3031 = vadd.f32 %v2582, %v3030
        %v3032 = vpop.f32.mrf.mxu0
        %v3033 = vadd.f32 %v2584, %v3032
        %3034 = vmatprep.mubr.f32.mxu0 %v1826
        %3035 = vmatmul.mubr.f32.gmra.mxu0 %v1825
        %v3036 = vpop.f32.mrf.mxu0
        %v3037 = vadd.f32 %v2588, %v3036
        %v3038 = vpop.f32.mrf.mxu0
        %v3039 = vadd.f32 %v2590, %v3038
        %3040 = vmatprep.mubr.f32.mxu0 %v1834
        %3041 = vmatmul.mubr.f32.gmra.mxu0 %v1833
        %v3042 = vpop.f32.mrf.mxu0
        %v3043 = vadd.f32 %v2594, %v3042
        %v3044 = vpop.f32.mrf.mxu0
        %v3045 = vadd.f32 %v2596, %v3044
        %3046 = vmatprep.mubr.f32.mxu0 %v1842
        %3047 = vmatmul.mubr.f32.gmra.mxu0 %v1841
        %v3048 = vpop.f32.mrf.mxu0
        %v3049 = vadd.f32 %v2600, %v3048
        %v3050 = vpop.f32.mrf.mxu0
        %v3051 = vadd.f32 %v2602, %v3050
        %3052 = vmatprep.mubr.f32.mxu0 %v1850
        %3053 = vmatmul.mubr.f32.gmra.mxu0 %v1849
        %v3054 = vpop.f32.mrf.mxu0
        %v3055 = vadd.f32 %v2606, %v3054
        %v3056 = vpop.f32.mrf.mxu0
        %v3057 = vadd.f32 %v2608, %v3056
        %3058 = vmatprep.mubr.f32.mxu0 %v1858
        %3059 = vmatmul.mubr.f32.gmra.mxu0 %v1857
        %v3060 = vpop.f32.mrf.mxu0
        %v3061 = vadd.f32 %v2612, %v3060
        %v3062 = vpop.f32.mrf.mxu0
        %v3063 = vadd.f32 %v2614, %v3062
        %3064 = vmatprep.mubr.f32.mxu0 %v1866
        %3065 = vmatmul.mubr.f32.gmra.mxu0 %v1865
        %v3066 = vpop.f32.mrf.mxu0
        %v3067 = vadd.f32 %v2618, %v3066
        %v3068 = vpop.f32.mrf.mxu0
        %v3069 = vadd.f32 %v2620, %v3068
        %3070 = vmatprep.mubr.f32.mxu0 %v1874
        %3071 = vmatmul.mubr.f32.gmra.mxu0 %v1873
        %v3072 = vpop.f32.mrf.mxu0
        %v3073 = vadd.f32 %v2624, %v3072
        %v3074 = vpop.f32.mrf.mxu0
        %v3075 = vadd.f32 %v2626, %v3074
        %3076 = vmatprep.mubr.f32.mxu0 %v1882
        %3077 = vmatmul.mubr.f32.gmra.mxu0 %v1881
        %v3078 = vpop.f32.mrf.mxu0
        %v3079 = vadd.f32 %v2630, %v3078
        %v3080 = vpop.f32.mrf.mxu0
        %v3081 = vadd.f32 %v2632, %v3080
        %3082 = vmatprep.mubr.f32.mxu0 %v1890
        %3083 = vmatmul.mubr.f32.gmra.mxu0 %v1889
        %v3084 = vpop.f32.mrf.mxu0
        %v3085 = vadd.f32 %v2636, %v3084
        %v3086 = vpop.f32.mrf.mxu0
        %v3087 = vadd.f32 %v2638, %v3086
        %3088 = vmatprep.mubr.f32.mxu0 %v1898
        %3089 = vmatmul.mubr.f32.gmra.mxu0 %v1897
        %v3090 = vpop.f32.mrf.mxu0
        %v3091 = vadd.f32 %v2642, %v3090
        %v3092 = vpop.f32.mrf.mxu0
        %v3093 = vadd.f32 %v2644, %v3092
        %3094 = vmatprep.mubr.f32.mxu0 %v1906
        %3095 = vmatmul.mubr.f32.gmra.mxu0 %v1905
        %v3096 = vpop.f32.mrf.mxu0
        %v3097 = vadd.f32 %v2648, %v3096
        %v3098 = vpop.f32.mrf.mxu0
        %v3099 = vadd.f32 %v2650, %v3098
        %3100 = vmatprep.mubr.f32.mxu0 %v1914
        %3101 = vmatmul.mubr.f32.gmra.mxu0 %v1913
        %v3102 = vpop.f32.mrf.mxu0
        %v3103 = vadd.f32 %v2654, %v3102
        %v3104 = vpop.f32.mrf.mxu0
        %v3105 = vadd.f32 %v2656, %v3104
        %3106 = vmatprep.mubr.f32.mxu0 %v1922
        %3107 = vmatmul.mubr.f32.gmra.mxu0 %v1921
        %v3108 = vpop.f32.mrf.mxu0
        %v3109 = vadd.f32 %v2660, %v3108
        %v3110 = vpop.f32.mrf.mxu0
        %v3111 = vadd.f32 %v2662, %v3110
        %3112 = vmatprep.mubr.f32.mxu0 %v1930
        %3113 = vmatmul.mubr.f32.gmra.mxu0 %v1929
        %v3114 = vpop.f32.mrf.mxu0
        %v3115 = vadd.f32 %v2666, %v3114
        %v3116 = vpop.f32.mrf.mxu0
        %v3117 = vadd.f32 %v2668, %v3116
        %3118 = vmatprep.mubr.f32.mxu0 %v1938
        %3119 = vmatmul.mubr.f32.gmra.mxu0 %v1937
        %v3120 = vpop.f32.mrf.mxu0
        %v3121 = vadd.f32 %v2672, %v3120
        %v3122 = vpop.f32.mrf.mxu0
        %v3123 = vadd.f32 %v2674, %v3122
        %3124 = vmatprep.mubr.f32.mxu0 %v1946
        %3125 = vmatmul.mubr.f32.gmra.mxu0 %v1945
        %v3126 = vpop.f32.mrf.mxu0
        %v3127 = vadd.f32 %v2678, %v3126
        %v3128 = vpop.f32.mrf.mxu0
        %v3129 = vadd.f32 %v2680, %v3128
        %3130 = vmatprep.mubr.f32.mxu0 %v1954
        %3131 = vmatmul.mubr.f32.gmra.mxu0 %v1953
        %v3132 = vpop.f32.mrf.mxu0
        %v3133 = vadd.f32 %v2684, %v3132
        %v3134 = vpop.f32.mrf.mxu0
        %v3135 = vadd.f32 %v2686, %v3134
        %3136 = vmatprep.mubr.f32.mxu0 %v1962
        %3137 = vmatmul.mubr.f32.gmra.mxu0 %v1961
        %v3138 = vpop.f32.mrf.mxu0
        %v3139 = vadd.f32 %v2690, %v3138
        %v3140 = vpop.f32.mrf.mxu0
        %v3141 = vadd.f32 %v2692, %v3140
        %3142 = vmatprep.mubr.f32.mxu0 %v1970
        %3143 = vmatmul.mubr.f32.gmra.mxu0 %v1969
        %v3144 = vpop.f32.mrf.mxu0
        %v3145 = vadd.f32 %v2696, %v3144
        %v3146 = vpop.f32.mrf.mxu0
        %v3147 = vadd.f32 %v2698, %v3146
        %3148 = vmatprep.mubr.f32.mxu0 %v1978
        %3149 = vmatmul.mubr.f32.gmra.mxu0 %v1977
        %v3150 = vpop.f32.mrf.mxu0
        %v3151 = vadd.f32 %v2702, %v3150
        %v3152 = vpop.f32.mrf.mxu0
        %v3153 = vadd.f32 %v2704, %v3152
        %3154 = vmatprep.mubr.f32.mxu0 %v1986
        %3155 = vmatmul.mubr.f32.gmra.mxu0 %v1985
        %v3156 = vpop.f32.mrf.mxu0
        %v3157 = vadd.f32 %v2708, %v3156
        %v3158 = vpop.f32.mrf.mxu0
        %v3159 = vadd.f32 %v2710, %v3158
        %3160 = vmatprep.mubr.f32.mxu0 %v1994
        %3161 = vmatmul.mubr.f32.gmra.mxu0 %v1993
        %v3162 = vpop.f32.mrf.mxu0
        %v3163 = vadd.f32 %v2714, %v3162
        %v3164 = vpop.f32.mrf.mxu0
        %v3165 = vadd.f32 %v2716, %v3164
        %3166 = vmatprep.mubr.f32.mxu0 %v2002
        %3167 = vmatmul.mubr.f32.gmra.mxu0 %v2001
        %v3168 = vpop.f32.mrf.mxu0
        %v3169 = vadd.f32 %v2720, %v3168
        %v3170 = vpop.f32.mrf.mxu0
        %v3171 = vadd.f32 %v2722, %v3170
        %3172 = vmatprep.mubr.f32.mxu0 %v2010
        %3173 = vmatmul.mubr.f32.gmra.mxu0 %v2009
        %v3174 = vpop.f32.mrf.mxu0
        %v3175 = vadd.f32 %v2726, %v3174
        %v3176 = vpop.f32.mrf.mxu0
        %v3177 = vadd.f32 %v2728, %v3176
        %3178 = vmatprep.mubr.f32.mxu0 %v2018
        %3179 = vmatmul.mubr.f32.gmra.mxu0 %v2017
        %v3180 = vpop.f32.mrf.mxu0
        %v3181 = vadd.f32 %v2732, %v3180
        %v3182 = vpop.f32.mrf.mxu0
        %v3183 = vadd.f32 %v2734, %v3182
        %3184 = vmatprep.mubr.f32.mxu0 %v2026
        %3185 = vmatmul.mubr.f32.gmra.mxu0 %v2025
        %v3186 = vpop.f32.mrf.mxu0
        %v3187 = vadd.f32 %v2738, %v3186
        %v3188 = vpop.f32.mrf.mxu0
        %v3189 = vadd.f32 %v2740, %v3188
        %3190 = vmatprep.mubr.f32.mxu0 %v2034
        %3191 = vmatmul.mubr.f32.gmra.mxu0 %v2033
        %v3192 = vpop.f32.mrf.mxu0
        %v3193 = vadd.f32 %v2744, %v3192
        %v3194 = vpop.f32.mrf.mxu0
        %v3195 = vadd.f32 %v2746, %v3194
        %3196 = vmatprep.mubr.f32.mxu0 %v2042
        %3197 = vmatmul.mubr.f32.gmra.mxu0 %v2041
        %v3198 = vpop.f32.mrf.mxu0
        %v3199 = vadd.f32 %v2750, %v3198
        %v3200 = vpop.f32.mrf.mxu0
        %v3201 = vadd.f32 %v2752, %v3200
        %3202 = vmatprep.mubr.f32.mxu0 %v2050
        %3203 = vmatmul.mubr.f32.gmra.mxu0 %v2049
        %v3204 = vpop.f32.mrf.mxu0
        %v3205 = vadd.f32 %v2756, %v3204
        %v3206 = vpop.f32.mrf.mxu0
        %v3207 = vadd.f32 %v2758, %v3206
        %3208 = vdwg.mxu0
        %3209 = vmatprep.subr.mxu0 %v2214
        %3210 = vmatpush1.msra.mxu0 %v2213
        %3211 = vmatprep.subr.mxu0 %v2212
        %3212 = vmatpush1.msra.mxu0 %v2211
        %3213 = vmatprep.subr.mxu0 %v2210
        %3214 = vmatpush1.msra.mxu0 %v2209
        %3215 = vmatprep.subr.mxu0 %v2208
        %3216 = vmatpush1.msra.mxu0 %v2207
        %3217 = vmatprep.subr.mxu0 %v2206
        %3218 = vmatpush1.msra.mxu0 %v2205
        %3219 = vmatprep.subr.mxu0 %v2204
        %3220 = vmatpush1.msra.mxu0 %v2203
        %3221 = vmatprep.subr.mxu0 %v2202
        %3222 = vmatpush1.msra.mxu0 %v2201
        %3223 = vmatprep.subr.mxu0 %v2200
        %3224 = vmatpush1.msra.mxu0 %v2199
        %3225 = vmatprep.subr.mxu0 %v2198
        %3226 = vmatpush1.msra.mxu0 %v2197
        %3227 = vmatprep.subr.mxu0 %v2196
        %3228 = vmatpush1.msra.mxu0 %v2195
        %3229 = vmatprep.subr.mxu0 %v2194
        %3230 = vmatpush1.msra.mxu0 %v2193
        %3231 = vmatprep.subr.mxu0 %v2192
        %3232 = vmatpush1.msra.mxu0 %v2191
        %3233 = vmatprep.subr.mxu0 %v2190
        %3234 = vmatpush1.msra.mxu0 %v2189
        %3235 = vmatprep.subr.mxu0 %v2188
        %3236 = vmatpush1.msra.mxu0 %v2187
        %3237 = vmatprep.subr.mxu0 %v2186
        %3238 = vmatpush1.msra.mxu0 %v2185
        %3239 = vmatprep.subr.mxu0 %v2184
        %3240 = vmatpush1.msra.mxu0 %v2183
        %3241 = vmatprep.subr.mxu0 %v2246
        %3242 = vmatpush2.msra.mxu0 %v2245
        %3243 = vmatprep.subr.mxu0 %v2244
        %3244 = vmatpush2.msra.mxu0 %v2243
        %3245 = vmatprep.subr.mxu0 %v2242
        %3246 = vmatpush2.msra.mxu0 %v2241
        %3247 = vmatprep.subr.mxu0 %v2240
        %3248 = vmatpush2.msra.mxu0 %v2239
        %3249 = vmatprep.subr.mxu0 %v2238
        %3250 = vmatpush2.msra.mxu0 %v2237
        %3251 = vmatprep.subr.mxu0 %v2236
        %3252 = vmatpush2.msra.mxu0 %v2235
        %3253 = vmatprep.subr.mxu0 %v2234
        %3254 = vmatpush2.msra.mxu0 %v2233
        %3255 = vmatprep.subr.mxu0 %v2232
        %3256 = vmatpush2.msra.mxu0 %v2231
        %3257 = vmatprep.subr.mxu0 %v2230
        %3258 = vmatpush2.msra.mxu0 %v2229
        %3259 = vmatprep.subr.mxu0 %v2228
        %3260 = vmatpush2.msra.mxu0 %v2227
        %3261 = vmatprep.subr.mxu0 %v2226
        %3262 = vmatpush2.msra.mxu0 %v2225
        %3263 = vmatprep.subr.mxu0 %v2224
        %3264 = vmatpush2.msra.mxu0 %v2223
        %3265 = vmatprep.subr.mxu0 %v2222
        %3266 = vmatpush2.msra.mxu0 %v2221
        %3267 = vmatprep.subr.mxu0 %v2220
        %3268 = vmatpush2.msra.mxu0 %v2219
        %3269 = vmatprep.subr.mxu0 %v2218
        %3270 = vmatpush2.msra.mxu0 %v2217
        %3271 = vmatprep.subr.mxu0 %v2216
        %3272 = vmatpush2.msra.mxu0 %v2215
        %3273 = vmatprep.mubr.f32.mxu0 %v1548
        %3274 = vmatmul.mubr.f32.gmra.mxu0 %v1547
        %v3275 = vpop.f32.mrf.mxu0
        %v3276 = vadd.f32 %v2827, %v3275
        %v3277 = vpop.f32.mrf.mxu0
        %v3278 = vadd.f32 %v2829, %v3277
        %3279 = vmatprep.mubr.f32.mxu0 %v1556
        %3280 = vmatmul.mubr.f32.gmra.mxu0 %v1555
        %v3281 = vpop.f32.mrf.mxu0
        %v3282 = vadd.f32 %v2833, %v3281
        %v3283 = vpop.f32.mrf.mxu0
        %v3284 = vadd.f32 %v2835, %v3283
        %3285 = vmatprep.mubr.f32.mxu0 %v1564
        %3286 = vmatmul.mubr.f32.gmra.mxu0 %v1563
        %v3287 = vpop.f32.mrf.mxu0
        %v3288 = vadd.f32 %v2839, %v3287
        %v3289 = vpop.f32.mrf.mxu0
        %v3290 = vadd.f32 %v2841, %v3289
        %3291 = vmatprep.mubr.f32.mxu0 %v1572
        %3292 = vmatmul.mubr.f32.gmra.mxu0 %v1571
        %v3293 = vpop.f32.mrf.mxu0
        %v3294 = vadd.f32 %v2845, %v3293
        %v3295 = vpop.f32.mrf.mxu0
        %v3296 = vadd.f32 %v2847, %v3295
        %3297 = vmatprep.mubr.f32.mxu0 %v1580
        %3298 = vmatmul.mubr.f32.gmra.mxu0 %v1579
        %v3299 = vpop.f32.mrf.mxu0
        %v3300 = vadd.f32 %v2851, %v3299
        %v3301 = vpop.f32.mrf.mxu0
        %v3302 = vadd.f32 %v2853, %v3301
        %3303 = vmatprep.mubr.f32.mxu0 %v1588
        %3304 = vmatmul.mubr.f32.gmra.mxu0 %v1587
        %v3305 = vpop.f32.mrf.mxu0
        %v3306 = vadd.f32 %v2857, %v3305
        %v3307 = vpop.f32.mrf.mxu0
        %v3308 = vadd.f32 %v2859, %v3307
        %3309 = vmatprep.mubr.f32.mxu0 %v1596
        %3310 = vmatmul.mubr.f32.gmra.mxu0 %v1595
        %v3311 = vpop.f32.mrf.mxu0
        %v3312 = vadd.f32 %v2863, %v3311
        %v3313 = vpop.f32.mrf.mxu0
        %v3314 = vadd.f32 %v2865, %v3313
        %3315 = vmatprep.mubr.f32.mxu0 %v1604
        %3316 = vmatmul.mubr.f32.gmra.mxu0 %v1603
        %v3317 = vpop.f32.mrf.mxu0
        %v3318 = vadd.f32 %v2869, %v3317
        %v3319 = vpop.f32.mrf.mxu0
        %v3320 = vadd.f32 %v2871, %v3319
        %3321 = vmatprep.mubr.f32.mxu0 %v1612
        %3322 = vmatmul.mubr.f32.gmra.mxu0 %v1611
        %v3323 = vpop.f32.mrf.mxu0
        %v3324 = vadd.f32 %v2875, %v3323
        %v3325 = vpop.f32.mrf.mxu0
        %v3326 = vadd.f32 %v2877, %v3325
        %3327 = vmatprep.mubr.f32.mxu0 %v1620
        %3328 = vmatmul.mubr.f32.gmra.mxu0 %v1619
        %v3329 = vpop.f32.mrf.mxu0
        %v3330 = vadd.f32 %v2881, %v3329
        %v3331 = vpop.f32.mrf.mxu0
        %v3332 = vadd.f32 %v2883, %v3331
        %3333 = vmatprep.mubr.f32.mxu0 %v1628
        %3334 = vmatmul.mubr.f32.gmra.mxu0 %v1627
        %v3335 = vpop.f32.mrf.mxu0
        %v3336 = vadd.f32 %v2887, %v3335
        %v3337 = vpop.f32.mrf.mxu0
        %v3338 = vadd.f32 %v2889, %v3337
        %3339 = vmatprep.mubr.f32.mxu0 %v1636
        %3340 = vmatmul.mubr.f32.gmra.mxu0 %v1635
        %v3341 = vpop.f32.mrf.mxu0
        %v3342 = vadd.f32 %v2893, %v3341
        %v3343 = vpop.f32.mrf.mxu0
        %v3344 = vadd.f32 %v2895, %v3343
        %3345 = vmatprep.mubr.f32.mxu0 %v1644
        %3346 = vmatmul.mubr.f32.gmra.mxu0 %v1643
        %v3347 = vpop.f32.mrf.mxu0
        %v3348 = vadd.f32 %v2899, %v3347
        %v3349 = vpop.f32.mrf.mxu0
        %v3350 = vadd.f32 %v2901, %v3349
        %3351 = vmatprep.mubr.f32.mxu0 %v1652
        %3352 = vmatmul.mubr.f32.gmra.mxu0 %v1651
        %v3353 = vpop.f32.mrf.mxu0
        %v3354 = vadd.f32 %v2905, %v3353
        %v3355 = vpop.f32.mrf.mxu0
        %v3356 = vadd.f32 %v2907, %v3355
        %3357 = vmatprep.mubr.f32.mxu0 %v1660
        %3358 = vmatmul.mubr.f32.gmra.mxu0 %v1659
        %v3359 = vpop.f32.mrf.mxu0
        %v3360 = vadd.f32 %v2911, %v3359
        %v3361 = vpop.f32.mrf.mxu0
        %v3362 = vadd.f32 %v2913, %v3361
        %3363 = vmatprep.mubr.f32.mxu0 %v1668
        %3364 = vmatmul.mubr.f32.gmra.mxu0 %v1667
        %v3365 = vpop.f32.mrf.mxu0
        %v3366 = vadd.f32 %v2917, %v3365
        %v3367 = vpop.f32.mrf.mxu0
        %v3368 = vadd.f32 %v2919, %v3367
        %3369 = vmatprep.mubr.f32.mxu0 %v1676
        %3370 = vmatmul.mubr.f32.gmra.mxu0 %v1675
        %v3371 = vpop.f32.mrf.mxu0
        %v3372 = vadd.f32 %v2923, %v3371
        %v3373 = vpop.f32.mrf.mxu0
        %v3374 = vadd.f32 %v2925, %v3373
        %3375 = vmatprep.mubr.f32.mxu0 %v1684
        %3376 = vmatmul.mubr.f32.gmra.mxu0 %v1683
        %v3377 = vpop.f32.mrf.mxu0
        %v3378 = vadd.f32 %v2929, %v3377
        %v3379 = vpop.f32.mrf.mxu0
        %v3380 = vadd.f32 %v2931, %v3379
        %3381 = vmatprep.mubr.f32.mxu0 %v1692
        %3382 = vmatmul.mubr.f32.gmra.mxu0 %v1691
        %v3383 = vpop.f32.mrf.mxu0
        %v3384 = vadd.f32 %v2935, %v3383
        %v3385 = vpop.f32.mrf.mxu0
        %v3386 = vadd.f32 %v2937, %v3385
        %3387 = vmatprep.mubr.f32.mxu0 %v1700
        %3388 = vmatmul.mubr.f32.gmra.mxu0 %v1699
        %v3389 = vpop.f32.mrf.mxu0
        %v3390 = vadd.f32 %v2941, %v3389
        %v3391 = vpop.f32.mrf.mxu0
        %v3392 = vadd.f32 %v2943, %v3391
        %3393 = vmatprep.mubr.f32.mxu0 %v1708
        %3394 = vmatmul.mubr.f32.gmra.mxu0 %v1707
        %v3395 = vpop.f32.mrf.mxu0
        %v3396 = vadd.f32 %v2947, %v3395
        %v3397 = vpop.f32.mrf.mxu0
        %v3398 = vadd.f32 %v2949, %v3397
        %3399 = vmatprep.mubr.f32.mxu0 %v1716
        %3400 = vmatmul.mubr.f32.gmra.mxu0 %v1715
        %v3401 = vpop.f32.mrf.mxu0
        %v3402 = vadd.f32 %v2953, %v3401
        %v3403 = vpop.f32.mrf.mxu0
        %v3404 = vadd.f32 %v2955, %v3403
        %3405 = vmatprep.mubr.f32.mxu0 %v1724
        %3406 = vmatmul.mubr.f32.gmra.mxu0 %v1723
        %v3407 = vpop.f32.mrf.mxu0
        %v3408 = vadd.f32 %v2959, %v3407
        %v3409 = vpop.f32.mrf.mxu0
        %v3410 = vadd.f32 %v2961, %v3409
        %3411 = vmatprep.mubr.f32.mxu0 %v1732
        %3412 = vmatmul.mubr.f32.gmra.mxu0 %v1731
        %v3413 = vpop.f32.mrf.mxu0
        %v3414 = vadd.f32 %v2965, %v3413
        %v3415 = vpop.f32.mrf.mxu0
        %v3416 = vadd.f32 %v2967, %v3415
        %3417 = vmatprep.mubr.f32.mxu0 %v1740
        %3418 = vmatmul.mubr.f32.gmra.mxu0 %v1739
        %v3419 = vpop.f32.mrf.mxu0
        %v3420 = vadd.f32 %v2971, %v3419
        %v3421 = vpop.f32.mrf.mxu0
        %v3422 = vadd.f32 %v2973, %v3421
        %3423 = vmatprep.mubr.f32.mxu0 %v1748
        %3424 = vmatmul.mubr.f32.gmra.mxu0 %v1747
        %v3425 = vpop.f32.mrf.mxu0
        %v3426 = vadd.f32 %v2977, %v3425
        %v3427 = vpop.f32.mrf.mxu0
        %v3428 = vadd.f32 %v2979, %v3427
        %3429 = vmatprep.mubr.f32.mxu0 %v1756
        %3430 = vmatmul.mubr.f32.gmra.mxu0 %v1755
        %v3431 = vpop.f32.mrf.mxu0
        %v3432 = vadd.f32 %v2983, %v3431
        %v3433 = vpop.f32.mrf.mxu0
        %v3434 = vadd.f32 %v2985, %v3433
        %3435 = vmatprep.mubr.f32.mxu0 %v1764
        %3436 = vmatmul.mubr.f32.gmra.mxu0 %v1763
        %v3437 = vpop.f32.mrf.mxu0
        %v3438 = vadd.f32 %v2989, %v3437
        %v3439 = vpop.f32.mrf.mxu0
        %v3440 = vadd.f32 %v2991, %v3439
        %3441 = vmatprep.mubr.f32.mxu0 %v1772
        %3442 = vmatmul.mubr.f32.gmra.mxu0 %v1771
        %v3443 = vpop.f32.mrf.mxu0
        %v3444 = vadd.f32 %v2995, %v3443
        %v3445 = vpop.f32.mrf.mxu0
        %v3446 = vadd.f32 %v2997, %v3445
        %3447 = vmatprep.mubr.f32.mxu0 %v1780
        %3448 = vmatmul.mubr.f32.gmra.mxu0 %v1779
        %v3449 = vpop.f32.mrf.mxu0
        %v3450 = vadd.f32 %v3001, %v3449
        %v3451 = vpop.f32.mrf.mxu0
        %v3452 = vadd.f32 %v3003, %v3451
        %3453 = vmatprep.mubr.f32.mxu0 %v1788
        %3454 = vmatmul.mubr.f32.gmra.mxu0 %v1787
        %v3455 = vpop.f32.mrf.mxu0
        %v3456 = vadd.f32 %v3007, %v3455
        %v3457 = vpop.f32.mrf.mxu0
        %v3458 = vadd.f32 %v3009, %v3457
        %3459 = vmatprep.mubr.f32.mxu0 %v1796
        %3460 = vmatmul.mubr.f32.gmra.mxu0 %v1795
        %v3461 = vpop.f32.mrf.mxu0
        %v3462 = vadd.f32 %v3013, %v3461
        %v3463 = vpop.f32.mrf.mxu0
        %v3464 = vadd.f32 %v3015, %v3463
        %3465 = vmatprep.mubr.f32.mxu0 %v1804
        %3466 = vmatmul.mubr.f32.gmra.mxu0 %v1803
        %v3467 = vpop.f32.mrf.mxu0
        %v3468 = vadd.f32 %v3019, %v3467
        %v3469 = vpop.f32.mrf.mxu0
        %v3470 = vadd.f32 %v3021, %v3469
        %3471 = vmatprep.mubr.f32.mxu0 %v1812
        %3472 = vmatmul.mubr.f32.gmra.mxu0 %v1811
        %v3473 = vpop.f32.mrf.mxu0
        %v3474 = vadd.f32 %v3025, %v3473
        %v3475 = vpop.f32.mrf.mxu0
        %v3476 = vadd.f32 %v3027, %v3475
        %3477 = vmatprep.mubr.f32.mxu0 %v1820
        %3478 = vmatmul.mubr.f32.gmra.mxu0 %v1819
        %v3479 = vpop.f32.mrf.mxu0
        %v3480 = vadd.f32 %v3031, %v3479
        %v3481 = vpop.f32.mrf.mxu0
        %v3482 = vadd.f32 %v3033, %v3481
        %3483 = vmatprep.mubr.f32.mxu0 %v1828
        %3484 = vmatmul.mubr.f32.gmra.mxu0 %v1827
        %v3485 = vpop.f32.mrf.mxu0
        %v3486 = vadd.f32 %v3037, %v3485
        %v3487 = vpop.f32.mrf.mxu0
        %v3488 = vadd.f32 %v3039, %v3487
        %3489 = vmatprep.mubr.f32.mxu0 %v1836
        %3490 = vmatmul.mubr.f32.gmra.mxu0 %v1835
        %v3491 = vpop.f32.mrf.mxu0
        %v3492 = vadd.f32 %v3043, %v3491
        %v3493 = vpop.f32.mrf.mxu0
        %v3494 = vadd.f32 %v3045, %v3493
        %3495 = vmatprep.mubr.f32.mxu0 %v1844
        %3496 = vmatmul.mubr.f32.gmra.mxu0 %v1843
        %v3497 = vpop.f32.mrf.mxu0
        %v3498 = vadd.f32 %v3049, %v3497
        %v3499 = vpop.f32.mrf.mxu0
        %v3500 = vadd.f32 %v3051, %v3499
        %3501 = vmatprep.mubr.f32.mxu0 %v1852
        %3502 = vmatmul.mubr.f32.gmra.mxu0 %v1851
        %v3503 = vpop.f32.mrf.mxu0
        %v3504 = vadd.f32 %v3055, %v3503
        %v3505 = vpop.f32.mrf.mxu0
        %v3506 = vadd.f32 %v3057, %v3505
        %3507 = vmatprep.mubr.f32.mxu0 %v1860
        %3508 = vmatmul.mubr.f32.gmra.mxu0 %v1859
        %v3509 = vpop.f32.mrf.mxu0
        %v3510 = vadd.f32 %v3061, %v3509
        %v3511 = vpop.f32.mrf.mxu0
        %v3512 = vadd.f32 %v3063, %v3511
        %3513 = vmatprep.mubr.f32.mxu0 %v1868
        %3514 = vmatmul.mubr.f32.gmra.mxu0 %v1867
        %v3515 = vpop.f32.mrf.mxu0
        %v3516 = vadd.f32 %v3067, %v3515
        %v3517 = vpop.f32.mrf.mxu0
        %v3518 = vadd.f32 %v3069, %v3517
        %3519 = vmatprep.mubr.f32.mxu0 %v1876
        %3520 = vmatmul.mubr.f32.gmra.mxu0 %v1875
        %v3521 = vpop.f32.mrf.mxu0
        %v3522 = vadd.f32 %v3073, %v3521
        %v3523 = vpop.f32.mrf.mxu0
        %v3524 = vadd.f32 %v3075, %v3523
        %3525 = vmatprep.mubr.f32.mxu0 %v1884
        %3526 = vmatmul.mubr.f32.gmra.mxu0 %v1883
        %v3527 = vpop.f32.mrf.mxu0
        %v3528 = vadd.f32 %v3079, %v3527
        %v3529 = vpop.f32.mrf.mxu0
        %v3530 = vadd.f32 %v3081, %v3529
        %3531 = vmatprep.mubr.f32.mxu0 %v1892
        %3532 = vmatmul.mubr.f32.gmra.mxu0 %v1891
        %v3533 = vpop.f32.mrf.mxu0
        %v3534 = vadd.f32 %v3085, %v3533
        %v3535 = vpop.f32.mrf.mxu0
        %v3536 = vadd.f32 %v3087, %v3535
        %3537 = vmatprep.mubr.f32.mxu0 %v1900
        %3538 = vmatmul.mubr.f32.gmra.mxu0 %v1899
        %v3539 = vpop.f32.mrf.mxu0
        %v3540 = vadd.f32 %v3091, %v3539
        %v3541 = vpop.f32.mrf.mxu0
        %v3542 = vadd.f32 %v3093, %v3541
        %3543 = vmatprep.mubr.f32.mxu0 %v1908
        %3544 = vmatmul.mubr.f32.gmra.mxu0 %v1907
        %v3545 = vpop.f32.mrf.mxu0
        %v3546 = vadd.f32 %v3097, %v3545
        %v3547 = vpop.f32.mrf.mxu0
        %v3548 = vadd.f32 %v3099, %v3547
        %3549 = vmatprep.mubr.f32.mxu0 %v1916
        %3550 = vmatmul.mubr.f32.gmra.mxu0 %v1915
        %v3551 = vpop.f32.mrf.mxu0
        %v3552 = vadd.f32 %v3103, %v3551
        %v3553 = vpop.f32.mrf.mxu0
        %v3554 = vadd.f32 %v3105, %v3553
        %3555 = vmatprep.mubr.f32.mxu0 %v1924
        %3556 = vmatmul.mubr.f32.gmra.mxu0 %v1923
        %v3557 = vpop.f32.mrf.mxu0
        %v3558 = vadd.f32 %v3109, %v3557
        %v3559 = vpop.f32.mrf.mxu0
        %v3560 = vadd.f32 %v3111, %v3559
        %3561 = vmatprep.mubr.f32.mxu0 %v1932
        %3562 = vmatmul.mubr.f32.gmra.mxu0 %v1931
        %v3563 = vpop.f32.mrf.mxu0
        %v3564 = vadd.f32 %v3115, %v3563
        %v3565 = vpop.f32.mrf.mxu0
        %v3566 = vadd.f32 %v3117, %v3565
        %3567 = vmatprep.mubr.f32.mxu0 %v1940
        %3568 = vmatmul.mubr.f32.gmra.mxu0 %v1939
        %v3569 = vpop.f32.mrf.mxu0
        %v3570 = vadd.f32 %v3121, %v3569
        %v3571 = vpop.f32.mrf.mxu0
        %v3572 = vadd.f32 %v3123, %v3571
        %3573 = vmatprep.mubr.f32.mxu0 %v1948
        %3574 = vmatmul.mubr.f32.gmra.mxu0 %v1947
        %v3575 = vpop.f32.mrf.mxu0
        %v3576 = vadd.f32 %v3127, %v3575
        %v3577 = vpop.f32.mrf.mxu0
        %v3578 = vadd.f32 %v3129, %v3577
        %3579 = vmatprep.mubr.f32.mxu0 %v1956
        %3580 = vmatmul.mubr.f32.gmra.mxu0 %v1955
        %v3581 = vpop.f32.mrf.mxu0
        %v3582 = vadd.f32 %v3133, %v3581
        %v3583 = vpop.f32.mrf.mxu0
        %v3584 = vadd.f32 %v3135, %v3583
        %3585 = vmatprep.mubr.f32.mxu0 %v1964
        %3586 = vmatmul.mubr.f32.gmra.mxu0 %v1963
        %v3587 = vpop.f32.mrf.mxu0
        %v3588 = vadd.f32 %v3139, %v3587
        %v3589 = vpop.f32.mrf.mxu0
        %v3590 = vadd.f32 %v3141, %v3589
        %3591 = vmatprep.mubr.f32.mxu0 %v1972
        %3592 = vmatmul.mubr.f32.gmra.mxu0 %v1971
        %v3593 = vpop.f32.mrf.mxu0
        %v3594 = vadd.f32 %v3145, %v3593
        %v3595 = vpop.f32.mrf.mxu0
        %v3596 = vadd.f32 %v3147, %v3595
        %3597 = vmatprep.mubr.f32.mxu0 %v1980
        %3598 = vmatmul.mubr.f32.gmra.mxu0 %v1979
        %v3599 = vpop.f32.mrf.mxu0
        %v3600 = vadd.f32 %v3151, %v3599
        %v3601 = vpop.f32.mrf.mxu0
        %v3602 = vadd.f32 %v3153, %v3601
        %3603 = vmatprep.mubr.f32.mxu0 %v1988
        %3604 = vmatmul.mubr.f32.gmra.mxu0 %v1987
        %v3605 = vpop.f32.mrf.mxu0
        %v3606 = vadd.f32 %v3157, %v3605
        %v3607 = vpop.f32.mrf.mxu0
        %v3608 = vadd.f32 %v3159, %v3607
        %3609 = vmatprep.mubr.f32.mxu0 %v1996
        %3610 = vmatmul.mubr.f32.gmra.mxu0 %v1995
        %v3611 = vpop.f32.mrf.mxu0
        %v3612 = vadd.f32 %v3163, %v3611
        %v3613 = vpop.f32.mrf.mxu0
        %v3614 = vadd.f32 %v3165, %v3613
        %3615 = vmatprep.mubr.f32.mxu0 %v2004
        %3616 = vmatmul.mubr.f32.gmra.mxu0 %v2003
        %v3617 = vpop.f32.mrf.mxu0
        %v3618 = vadd.f32 %v3169, %v3617
        %v3619 = vpop.f32.mrf.mxu0
        %v3620 = vadd.f32 %v3171, %v3619
        %3621 = vmatprep.mubr.f32.mxu0 %v2012
        %3622 = vmatmul.mubr.f32.gmra.mxu0 %v2011
        %v3623 = vpop.f32.mrf.mxu0
        %v3624 = vadd.f32 %v3175, %v3623
        %v3625 = vpop.f32.mrf.mxu0
        %v3626 = vadd.f32 %v3177, %v3625
        %3627 = vmatprep.mubr.f32.mxu0 %v2020
        %3628 = vmatmul.mubr.f32.gmra.mxu0 %v2019
        %v3629 = vpop.f32.mrf.mxu0
        %v3630 = vadd.f32 %v3181, %v3629
        %v3631 = vpop.f32.mrf.mxu0
        %v3632 = vadd.f32 %v3183, %v3631
        %3633 = vmatprep.mubr.f32.mxu0 %v2028
        %3634 = vmatmul.mubr.f32.gmra.mxu0 %v2027
        %v3635 = vpop.f32.mrf.mxu0
        %v3636 = vadd.f32 %v3187, %v3635
        %v3637 = vpop.f32.mrf.mxu0
        %v3638 = vadd.f32 %v3189, %v3637
        %3639 = vmatprep.mubr.f32.mxu0 %v2036
        %3640 = vmatmul.mubr.f32.gmra.mxu0 %v2035
        %v3641 = vpop.f32.mrf.mxu0
        %v3642 = vadd.f32 %v3193, %v3641
        %v3643 = vpop.f32.mrf.mxu0
        %v3644 = vadd.f32 %v3195, %v3643
        %3645 = vmatprep.mubr.f32.mxu0 %v2044
        %3646 = vmatmul.mubr.f32.gmra.mxu0 %v2043
        %v3647 = vpop.f32.mrf.mxu0
        %v3648 = vadd.f32 %v3199, %v3647
        %v3649 = vpop.f32.mrf.mxu0
        %v3650 = vadd.f32 %v3201, %v3649
        %3651 = vmatprep.mubr.f32.mxu0 %v2052
        %3652 = vmatmul.mubr.f32.gmra.mxu0 %v2051
        %v3653 = vpop.f32.mrf.mxu0
        %v3654 = vadd.f32 %v3205, %v3653
        %v3655 = vpop.f32.mrf.mxu0
        %v3656 = vadd.f32 %v3207, %v3655
        %3657 = vdwg.mxu0
        %3658 = vmatprep.subr.mxu0 %v2278
        %3659 = vmatpush1.msra.mxu0 %v2277
        %3660 = vmatprep.subr.mxu0 %v2276
        %3661 = vmatpush1.msra.mxu0 %v2275
        %3662 = vmatprep.subr.mxu0 %v2274
        %3663 = vmatpush1.msra.mxu0 %v2273
        %3664 = vmatprep.subr.mxu0 %v2272
        %3665 = vmatpush1.msra.mxu0 %v2271
        %3666 = vmatprep.subr.mxu0 %v2270
        %3667 = vmatpush1.msra.mxu0 %v2269
        %3668 = vmatprep.subr.mxu0 %v2268
        %3669 = vmatpush1.msra.mxu0 %v2267
        %3670 = vmatprep.subr.mxu0 %v2266
        %3671 = vmatpush1.msra.mxu0 %v2265
        %3672 = vmatprep.subr.mxu0 %v2264
        %3673 = vmatpush1.msra.mxu0 %v2263
        %3674 = vmatprep.subr.mxu0 %v2262
        %3675 = vmatpush1.msra.mxu0 %v2261
        %3676 = vmatprep.subr.mxu0 %v2260
        %3677 = vmatpush1.msra.mxu0 %v2259
        %3678 = vmatprep.subr.mxu0 %v2258
        %3679 = vmatpush1.msra.mxu0 %v2257
        %3680 = vmatprep.subr.mxu0 %v2256
        %3681 = vmatpush1.msra.mxu0 %v2255
        %3682 = vmatprep.subr.mxu0 %v2254
        %3683 = vmatpush1.msra.mxu0 %v2253
        %3684 = vmatprep.subr.mxu0 %v2252
        %3685 = vmatpush1.msra.mxu0 %v2251
        %3686 = vmatprep.subr.mxu0 %v2250
        %3687 = vmatpush1.msra.mxu0 %v2249
        %3688 = vmatprep.subr.mxu0 %v2248
        %3689 = vmatpush1.msra.mxu0 %v2247
        %3690 = vmatprep.subr.mxu0 %v2310
        %3691 = vmatpush2.msra.mxu0 %v2309
        %3692 = vmatprep.subr.mxu0 %v2308
        %3693 = vmatpush2.msra.mxu0 %v2307
        %3694 = vmatprep.subr.mxu0 %v2306
        %3695 = vmatpush2.msra.mxu0 %v2305
        %3696 = vmatprep.subr.mxu0 %v2304
        %3697 = vmatpush2.msra.mxu0 %v2303
        %3698 = vmatprep.subr.mxu0 %v2302
        %3699 = vmatpush2.msra.mxu0 %v2301
        %3700 = vmatprep.subr.mxu0 %v2300
        %3701 = vmatpush2.msra.mxu0 %v2299
        %3702 = vmatprep.subr.mxu0 %v2298
        %3703 = vmatpush2.msra.mxu0 %v2297
        %3704 = vmatprep.subr.mxu0 %v2296
        %3705 = vmatpush2.msra.mxu0 %v2295
        %3706 = vmatprep.subr.mxu0 %v2294
        %3707 = vmatpush2.msra.mxu0 %v2293
        %3708 = vmatprep.subr.mxu0 %v2292
        %3709 = vmatpush2.msra.mxu0 %v2291
        %3710 = vmatprep.subr.mxu0 %v2290
        %3711 = vmatpush2.msra.mxu0 %v2289
        %3712 = vmatprep.subr.mxu0 %v2288
        %3713 = vmatpush2.msra.mxu0 %v2287
        %3714 = vmatprep.subr.mxu0 %v2286
        %3715 = vmatpush2.msra.mxu0 %v2285
        %3716 = vmatprep.subr.mxu0 %v2284
        %3717 = vmatpush2.msra.mxu0 %v2283
        %3718 = vmatprep.subr.mxu0 %v2282
        %3719 = vmatpush2.msra.mxu0 %v2281
        %3720 = vmatprep.subr.mxu0 %v2280
        %3721 = vmatpush2.msra.mxu0 %v2279
        %3722 = vmatprep.mubr.f32.mxu0 %v1550
        %3723 = vmatmul.mubr.f32.gmra.mxu0 %v1549
        %v3724 = vpop.f32.mrf.mxu0
        %v3725 = vadd.f32 %v3276, %v3724
        %v3726 = vpop.f32.mrf.mxu0
        %v3727 = vadd.f32 %v3278, %v3726
        %3728 = vmatprep.mubr.f32.mxu0 %v1558
        %3729 = vmatmul.mubr.f32.gmra.mxu0 %v1557
        %v3730 = vpop.f32.mrf.mxu0
        %v3731 = vadd.f32 %v3282, %v3730
        %v3732 = vpop.f32.mrf.mxu0
        %v3733 = vadd.f32 %v3284, %v3732
        %3734 = vmatprep.mubr.f32.mxu0 %v1566
        %3735 = vmatmul.mubr.f32.gmra.mxu0 %v1565
        %v3736 = vpop.f32.mrf.mxu0
        %v3737 = vadd.f32 %v3288, %v3736
        %v3738 = vpop.f32.mrf.mxu0
        %v3739 = vadd.f32 %v3290, %v3738
        %3740 = vmatprep.mubr.f32.mxu0 %v1574
        %3741 = vmatmul.mubr.f32.gmra.mxu0 %v1573
        %v3742 = vpop.f32.mrf.mxu0
        %v3743 = vadd.f32 %v3294, %v3742
        %v3744 = vpop.f32.mrf.mxu0
        %v3745 = vadd.f32 %v3296, %v3744
        %3746 = vmatprep.mubr.f32.mxu0 %v1582
        %3747 = vmatmul.mubr.f32.gmra.mxu0 %v1581
        %v3748 = vpop.f32.mrf.mxu0
        %v3749 = vadd.f32 %v3300, %v3748
        %v3750 = vpop.f32.mrf.mxu0
        %v3751 = vadd.f32 %v3302, %v3750
        %3752 = vmatprep.mubr.f32.mxu0 %v1590
        %3753 = vmatmul.mubr.f32.gmra.mxu0 %v1589
        %v3754 = vpop.f32.mrf.mxu0
        %v3755 = vadd.f32 %v3306, %v3754
        %v3756 = vpop.f32.mrf.mxu0
        %v3757 = vadd.f32 %v3308, %v3756
        %3758 = vmatprep.mubr.f32.mxu0 %v1598
        %3759 = vmatmul.mubr.f32.gmra.mxu0 %v1597
        %v3760 = vpop.f32.mrf.mxu0
        %v3761 = vadd.f32 %v3312, %v3760
        %v3762 = vpop.f32.mrf.mxu0
        %v3763 = vadd.f32 %v3314, %v3762
        %3764 = vmatprep.mubr.f32.mxu0 %v1606
        %3765 = vmatmul.mubr.f32.gmra.mxu0 %v1605
        %v3766 = vpop.f32.mrf.mxu0
        %v3767 = vadd.f32 %v3318, %v3766
        %v3768 = vpop.f32.mrf.mxu0
        %v3769 = vadd.f32 %v3320, %v3768
        %3770 = vmatprep.mubr.f32.mxu0 %v1614
        %3771 = vmatmul.mubr.f32.gmra.mxu0 %v1613
        %v3772 = vpop.f32.mrf.mxu0
        %v3773 = vadd.f32 %v3324, %v3772
        %v3774 = vpop.f32.mrf.mxu0
        %v3775 = vadd.f32 %v3326, %v3774
        %3776 = vmatprep.mubr.f32.mxu0 %v1622
        %3777 = vmatmul.mubr.f32.gmra.mxu0 %v1621
        %v3778 = vpop.f32.mrf.mxu0
        %v3779 = vadd.f32 %v3330, %v3778
        %v3780 = vpop.f32.mrf.mxu0
        %v3781 = vadd.f32 %v3332, %v3780
        %3782 = vmatprep.mubr.f32.mxu0 %v1630
        %3783 = vmatmul.mubr.f32.gmra.mxu0 %v1629
        %v3784 = vpop.f32.mrf.mxu0
        %v3785 = vadd.f32 %v3336, %v3784
        %v3786 = vpop.f32.mrf.mxu0
        %v3787 = vadd.f32 %v3338, %v3786
        %3788 = vmatprep.mubr.f32.mxu0 %v1638
        %3789 = vmatmul.mubr.f32.gmra.mxu0 %v1637
        %v3790 = vpop.f32.mrf.mxu0
        %v3791 = vadd.f32 %v3342, %v3790
        %v3792 = vpop.f32.mrf.mxu0
        %v3793 = vadd.f32 %v3344, %v3792
        %3794 = vmatprep.mubr.f32.mxu0 %v1646
        %3795 = vmatmul.mubr.f32.gmra.mxu0 %v1645
        %v3796 = vpop.f32.mrf.mxu0
        %v3797 = vadd.f32 %v3348, %v3796
        %v3798 = vpop.f32.mrf.mxu0
        %v3799 = vadd.f32 %v3350, %v3798
        %3800 = vmatprep.mubr.f32.mxu0 %v1654
        %3801 = vmatmul.mubr.f32.gmra.mxu0 %v1653
        %v3802 = vpop.f32.mrf.mxu0
        %v3803 = vadd.f32 %v3354, %v3802
        %v3804 = vpop.f32.mrf.mxu0
        %v3805 = vadd.f32 %v3356, %v3804
        %3806 = vmatprep.mubr.f32.mxu0 %v1662
        %3807 = vmatmul.mubr.f32.gmra.mxu0 %v1661
        %v3808 = vpop.f32.mrf.mxu0
        %v3809 = vadd.f32 %v3360, %v3808
        %v3810 = vpop.f32.mrf.mxu0
        %v3811 = vadd.f32 %v3362, %v3810
        %3812 = vmatprep.mubr.f32.mxu0 %v1670
        %3813 = vmatmul.mubr.f32.gmra.mxu0 %v1669
        %v3814 = vpop.f32.mrf.mxu0
        %v3815 = vadd.f32 %v3366, %v3814
        %v3816 = vpop.f32.mrf.mxu0
        %v3817 = vadd.f32 %v3368, %v3816
        %3818 = vmatprep.mubr.f32.mxu0 %v1678
        %3819 = vmatmul.mubr.f32.gmra.mxu0 %v1677
        %v3820 = vpop.f32.mrf.mxu0
        %v3821 = vadd.f32 %v3372, %v3820
        %v3822 = vpop.f32.mrf.mxu0
        %v3823 = vadd.f32 %v3374, %v3822
        %3824 = vmatprep.mubr.f32.mxu0 %v1686
        %3825 = vmatmul.mubr.f32.gmra.mxu0 %v1685
        %v3826 = vpop.f32.mrf.mxu0
        %v3827 = vadd.f32 %v3378, %v3826
        %v3828 = vpop.f32.mrf.mxu0
        %v3829 = vadd.f32 %v3380, %v3828
        %3830 = vmatprep.mubr.f32.mxu0 %v1694
        %3831 = vmatmul.mubr.f32.gmra.mxu0 %v1693
        %v3832 = vpop.f32.mrf.mxu0
        %v3833 = vadd.f32 %v3384, %v3832
        %v3834 = vpop.f32.mrf.mxu0
        %v3835 = vadd.f32 %v3386, %v3834
        %3836 = vmatprep.mubr.f32.mxu0 %v1702
        %3837 = vmatmul.mubr.f32.gmra.mxu0 %v1701
        %v3838 = vpop.f32.mrf.mxu0
        %v3839 = vadd.f32 %v3390, %v3838
        %v3840 = vpop.f32.mrf.mxu0
        %v3841 = vadd.f32 %v3392, %v3840
        %3842 = vmatprep.mubr.f32.mxu0 %v1710
        %3843 = vmatmul.mubr.f32.gmra.mxu0 %v1709
        %v3844 = vpop.f32.mrf.mxu0
        %v3845 = vadd.f32 %v3396, %v3844
        %v3846 = vpop.f32.mrf.mxu0
        %v3847 = vadd.f32 %v3398, %v3846
        %3848 = vmatprep.mubr.f32.mxu0 %v1718
        %3849 = vmatmul.mubr.f32.gmra.mxu0 %v1717
        %v3850 = vpop.f32.mrf.mxu0
        %v3851 = vadd.f32 %v3402, %v3850
        %v3852 = vpop.f32.mrf.mxu0
        %v3853 = vadd.f32 %v3404, %v3852
        %3854 = vmatprep.mubr.f32.mxu0 %v1726
        %3855 = vmatmul.mubr.f32.gmra.mxu0 %v1725
        %v3856 = vpop.f32.mrf.mxu0
        %v3857 = vadd.f32 %v3408, %v3856
        %v3858 = vpop.f32.mrf.mxu0
        %v3859 = vadd.f32 %v3410, %v3858
        %3860 = vmatprep.mubr.f32.mxu0 %v1734
        %3861 = vmatmul.mubr.f32.gmra.mxu0 %v1733
        %v3862 = vpop.f32.mrf.mxu0
        %v3863 = vadd.f32 %v3414, %v3862
        %v3864 = vpop.f32.mrf.mxu0
        %v3865 = vadd.f32 %v3416, %v3864
        %3866 = vmatprep.mubr.f32.mxu0 %v1742
        %3867 = vmatmul.mubr.f32.gmra.mxu0 %v1741
        %v3868 = vpop.f32.mrf.mxu0
        %v3869 = vadd.f32 %v3420, %v3868
        %v3870 = vpop.f32.mrf.mxu0
        %v3871 = vadd.f32 %v3422, %v3870
        %3872 = vmatprep.mubr.f32.mxu0 %v1750
        %3873 = vmatmul.mubr.f32.gmra.mxu0 %v1749
        %v3874 = vpop.f32.mrf.mxu0
        %v3875 = vadd.f32 %v3426, %v3874
        %v3876 = vpop.f32.mrf.mxu0
        %v3877 = vadd.f32 %v3428, %v3876
        %3878 = vmatprep.mubr.f32.mxu0 %v1758
        %3879 = vmatmul.mubr.f32.gmra.mxu0 %v1757
        %v3880 = vpop.f32.mrf.mxu0
        %v3881 = vadd.f32 %v3432, %v3880
        %v3882 = vpop.f32.mrf.mxu0
        %v3883 = vadd.f32 %v3434, %v3882
        %3884 = vmatprep.mubr.f32.mxu0 %v1766
        %3885 = vmatmul.mubr.f32.gmra.mxu0 %v1765
        %v3886 = vpop.f32.mrf.mxu0
        %v3887 = vadd.f32 %v3438, %v3886
        %v3888 = vpop.f32.mrf.mxu0
        %v3889 = vadd.f32 %v3440, %v3888
        %3890 = vmatprep.mubr.f32.mxu0 %v1774
        %3891 = vmatmul.mubr.f32.gmra.mxu0 %v1773
        %v3892 = vpop.f32.mrf.mxu0
        %v3893 = vadd.f32 %v3444, %v3892
        %v3894 = vpop.f32.mrf.mxu0
        %v3895 = vadd.f32 %v3446, %v3894
        %3896 = vmatprep.mubr.f32.mxu0 %v1782
        %3897 = vmatmul.mubr.f32.gmra.mxu0 %v1781
        %v3898 = vpop.f32.mrf.mxu0
        %v3899 = vadd.f32 %v3450, %v3898
        %v3900 = vpop.f32.mrf.mxu0
        %v3901 = vadd.f32 %v3452, %v3900
        %3902 = vmatprep.mubr.f32.mxu0 %v1790
        %3903 = vmatmul.mubr.f32.gmra.mxu0 %v1789
        %v3904 = vpop.f32.mrf.mxu0
        %v3905 = vadd.f32 %v3456, %v3904
        %v3906 = vpop.f32.mrf.mxu0
        %v3907 = vadd.f32 %v3458, %v3906
        %3908 = vmatprep.mubr.f32.mxu0 %v1798
        %3909 = vmatmul.mubr.f32.gmra.mxu0 %v1797
        %v3910 = vpop.f32.mrf.mxu0
        %v3911 = vadd.f32 %v3462, %v3910
        %v3912 = vpop.f32.mrf.mxu0
        %v3913 = vadd.f32 %v3464, %v3912
        %3914 = vmatprep.mubr.f32.mxu0 %v1806
        %3915 = vmatmul.mubr.f32.gmra.mxu0 %v1805
        %v3916 = vpop.f32.mrf.mxu0
        %v3917 = vadd.f32 %v3468, %v3916
        %v3918 = vpop.f32.mrf.mxu0
        %v3919 = vadd.f32 %v3470, %v3918
        %3920 = vmatprep.mubr.f32.mxu0 %v1814
        %3921 = vmatmul.mubr.f32.gmra.mxu0 %v1813
        %v3922 = vpop.f32.mrf.mxu0
        %v3923 = vadd.f32 %v3474, %v3922
        %v3924 = vpop.f32.mrf.mxu0
        %v3925 = vadd.f32 %v3476, %v3924
        %3926 = vmatprep.mubr.f32.mxu0 %v1822
        %3927 = vmatmul.mubr.f32.gmra.mxu0 %v1821
        %v3928 = vpop.f32.mrf.mxu0
        %v3929 = vadd.f32 %v3480, %v3928
        %v3930 = vpop.f32.mrf.mxu0
        %v3931 = vadd.f32 %v3482, %v3930
        %3932 = vmatprep.mubr.f32.mxu0 %v1830
        %3933 = vmatmul.mubr.f32.gmra.mxu0 %v1829
        %v3934 = vpop.f32.mrf.mxu0
        %v3935 = vadd.f32 %v3486, %v3934
        %v3936 = vpop.f32.mrf.mxu0
        %v3937 = vadd.f32 %v3488, %v3936
        %3938 = vmatprep.mubr.f32.mxu0 %v1838
        %3939 = vmatmul.mubr.f32.gmra.mxu0 %v1837
        %v3940 = vpop.f32.mrf.mxu0
        %v3941 = vadd.f32 %v3492, %v3940
        %v3942 = vpop.f32.mrf.mxu0
        %v3943 = vadd.f32 %v3494, %v3942
        %3944 = vmatprep.mubr.f32.mxu0 %v1846
        %3945 = vmatmul.mubr.f32.gmra.mxu0 %v1845
        %v3946 = vpop.f32.mrf.mxu0
        %v3947 = vadd.f32 %v3498, %v3946
        %v3948 = vpop.f32.mrf.mxu0
        %v3949 = vadd.f32 %v3500, %v3948
        %3950 = vmatprep.mubr.f32.mxu0 %v1854
        %3951 = vmatmul.mubr.f32.gmra.mxu0 %v1853
        %v3952 = vpop.f32.mrf.mxu0
        %v3953 = vadd.f32 %v3504, %v3952
        %v3954 = vpop.f32.mrf.mxu0
        %v3955 = vadd.f32 %v3506, %v3954
        %3956 = vmatprep.mubr.f32.mxu0 %v1862
        %3957 = vmatmul.mubr.f32.gmra.mxu0 %v1861
        %v3958 = vpop.f32.mrf.mxu0
        %v3959 = vadd.f32 %v3510, %v3958
        %v3960 = vpop.f32.mrf.mxu0
        %v3961 = vadd.f32 %v3512, %v3960
        %3962 = vmatprep.mubr.f32.mxu0 %v1870
        %3963 = vmatmul.mubr.f32.gmra.mxu0 %v1869
        %v3964 = vpop.f32.mrf.mxu0
        %v3965 = vadd.f32 %v3516, %v3964
        %v3966 = vpop.f32.mrf.mxu0
        %v3967 = vadd.f32 %v3518, %v3966
        %3968 = vmatprep.mubr.f32.mxu0 %v1878
        %3969 = vmatmul.mubr.f32.gmra.mxu0 %v1877
        %v3970 = vpop.f32.mrf.mxu0
        %v3971 = vadd.f32 %v3522, %v3970
        %v3972 = vpop.f32.mrf.mxu0
        %v3973 = vadd.f32 %v3524, %v3972
        %3974 = vmatprep.mubr.f32.mxu0 %v1886
        %3975 = vmatmul.mubr.f32.gmra.mxu0 %v1885
        %v3976 = vpop.f32.mrf.mxu0
        %v3977 = vadd.f32 %v3528, %v3976
        %v3978 = vpop.f32.mrf.mxu0
        %v3979 = vadd.f32 %v3530, %v3978
        %3980 = vmatprep.mubr.f32.mxu0 %v1894
        %3981 = vmatmul.mubr.f32.gmra.mxu0 %v1893
        %v3982 = vpop.f32.mrf.mxu0
        %v3983 = vadd.f32 %v3534, %v3982
        %v3984 = vpop.f32.mrf.mxu0
        %v3985 = vadd.f32 %v3536, %v3984
        %3986 = vmatprep.mubr.f32.mxu0 %v1902
        %3987 = vmatmul.mubr.f32.gmra.mxu0 %v1901
        %v3988 = vpop.f32.mrf.mxu0
        %v3989 = vadd.f32 %v3540, %v3988
        %v3990 = vpop.f32.mrf.mxu0
        %v3991 = vadd.f32 %v3542, %v3990
        %3992 = vmatprep.mubr.f32.mxu0 %v1910
        %3993 = vmatmul.mubr.f32.gmra.mxu0 %v1909
        %v3994 = vpop.f32.mrf.mxu0
        %v3995 = vadd.f32 %v3546, %v3994
        %v3996 = vpop.f32.mrf.mxu0
        %v3997 = vadd.f32 %v3548, %v3996
        %3998 = vmatprep.mubr.f32.mxu0 %v1918
        %3999 = vmatmul.mubr.f32.gmra.mxu0 %v1917
        %v4000 = vpop.f32.mrf.mxu0
        %v4001 = vadd.f32 %v3552, %v4000
        %v4002 = vpop.f32.mrf.mxu0
        %v4003 = vadd.f32 %v3554, %v4002
        %4004 = vmatprep.mubr.f32.mxu0 %v1926
        %4005 = vmatmul.mubr.f32.gmra.mxu0 %v1925
        %v4006 = vpop.f32.mrf.mxu0
        %v4007 = vadd.f32 %v3558, %v4006
        %v4008 = vpop.f32.mrf.mxu0
        %v4009 = vadd.f32 %v3560, %v4008
        %4010 = vmatprep.mubr.f32.mxu0 %v1934
        %4011 = vmatmul.mubr.f32.gmra.mxu0 %v1933
        %v4012 = vpop.f32.mrf.mxu0
        %v4013 = vadd.f32 %v3564, %v4012
        %v4014 = vpop.f32.mrf.mxu0
        %v4015 = vadd.f32 %v3566, %v4014
        %4016 = vmatprep.mubr.f32.mxu0 %v1942
        %4017 = vmatmul.mubr.f32.gmra.mxu0 %v1941
        %v4018 = vpop.f32.mrf.mxu0
        %v4019 = vadd.f32 %v3570, %v4018
        %v4020 = vpop.f32.mrf.mxu0
        %v4021 = vadd.f32 %v3572, %v4020
        %4022 = vmatprep.mubr.f32.mxu0 %v1950
        %4023 = vmatmul.mubr.f32.gmra.mxu0 %v1949
        %v4024 = vpop.f32.mrf.mxu0
        %v4025 = vadd.f32 %v3576, %v4024
        %v4026 = vpop.f32.mrf.mxu0
        %v4027 = vadd.f32 %v3578, %v4026
        %4028 = vmatprep.mubr.f32.mxu0 %v1958
        %4029 = vmatmul.mubr.f32.gmra.mxu0 %v1957
        %v4030 = vpop.f32.mrf.mxu0
        %v4031 = vadd.f32 %v3582, %v4030
        %v4032 = vpop.f32.mrf.mxu0
        %v4033 = vadd.f32 %v3584, %v4032
        %4034 = vmatprep.mubr.f32.mxu0 %v1966
        %4035 = vmatmul.mubr.f32.gmra.mxu0 %v1965
        %v4036 = vpop.f32.mrf.mxu0
        %v4037 = vadd.f32 %v3588, %v4036
        %v4038 = vpop.f32.mrf.mxu0
        %v4039 = vadd.f32 %v3590, %v4038
        %4040 = vmatprep.mubr.f32.mxu0 %v1974
        %4041 = vmatmul.mubr.f32.gmra.mxu0 %v1973
        %v4042 = vpop.f32.mrf.mxu0
        %v4043 = vadd.f32 %v3594, %v4042
        %v4044 = vpop.f32.mrf.mxu0
        %v4045 = vadd.f32 %v3596, %v4044
        %4046 = vmatprep.mubr.f32.mxu0 %v1982
        %4047 = vmatmul.mubr.f32.gmra.mxu0 %v1981
        %v4048 = vpop.f32.mrf.mxu0
        %v4049 = vadd.f32 %v3600, %v4048
        %v4050 = vpop.f32.mrf.mxu0
        %v4051 = vadd.f32 %v3602, %v4050
        %4052 = vmatprep.mubr.f32.mxu0 %v1990
        %4053 = vmatmul.mubr.f32.gmra.mxu0 %v1989
        %v4054 = vpop.f32.mrf.mxu0
        %v4055 = vadd.f32 %v3606, %v4054
        %v4056 = vpop.f32.mrf.mxu0
        %v4057 = vadd.f32 %v3608, %v4056
        %4058 = vmatprep.mubr.f32.mxu0 %v1998
        %4059 = vmatmul.mubr.f32.gmra.mxu0 %v1997
        %v4060 = vpop.f32.mrf.mxu0
        %v4061 = vadd.f32 %v3612, %v4060
        %v4062 = vpop.f32.mrf.mxu0
        %v4063 = vadd.f32 %v3614, %v4062
        %4064 = vmatprep.mubr.f32.mxu0 %v2006
        %4065 = vmatmul.mubr.f32.gmra.mxu0 %v2005
        %v4066 = vpop.f32.mrf.mxu0
        %v4067 = vadd.f32 %v3618, %v4066
        %v4068 = vpop.f32.mrf.mxu0
        %v4069 = vadd.f32 %v3620, %v4068
        %4070 = vmatprep.mubr.f32.mxu0 %v2014
        %4071 = vmatmul.mubr.f32.gmra.mxu0 %v2013
        %v4072 = vpop.f32.mrf.mxu0
        %v4073 = vadd.f32 %v3624, %v4072
        %v4074 = vpop.f32.mrf.mxu0
        %v4075 = vadd.f32 %v3626, %v4074
        %4076 = vmatprep.mubr.f32.mxu0 %v2022
        %4077 = vmatmul.mubr.f32.gmra.mxu0 %v2021
        %v4078 = vpop.f32.mrf.mxu0
        %v4079 = vadd.f32 %v3630, %v4078
        %v4080 = vpop.f32.mrf.mxu0
        %v4081 = vadd.f32 %v3632, %v4080
        %4082 = vmatprep.mubr.f32.mxu0 %v2030
        %4083 = vmatmul.mubr.f32.gmra.mxu0 %v2029
        %v4084 = vpop.f32.mrf.mxu0
        %v4085 = vadd.f32 %v3636, %v4084
        %v4086 = vpop.f32.mrf.mxu0
        %v4087 = vadd.f32 %v3638, %v4086
        %4088 = vmatprep.mubr.f32.mxu0 %v2038
        %4089 = vmatmul.mubr.f32.gmra.mxu0 %v2037
        %v4090 = vpop.f32.mrf.mxu0
        %v4091 = vadd.f32 %v3642, %v4090
        %v4092 = vpop.f32.mrf.mxu0
        %v4093 = vadd.f32 %v3644, %v4092
        %4094 = vmatprep.mubr.f32.mxu0 %v2046
        %4095 = vmatmul.mubr.f32.gmra.mxu0 %v2045
        %v4096 = vpop.f32.mrf.mxu0
        %v4097 = vadd.f32 %v3648, %v4096
        %v4098 = vpop.f32.mrf.mxu0
        %v4099 = vadd.f32 %v3650, %v4098
        %4100 = vmatprep.mubr.f32.mxu0 %v2054
        %4101 = vmatmul.mubr.f32.gmra.mxu0 %v2053
        %v4102 = vpop.f32.mrf.mxu0
        %v4103 = vadd.f32 %v3654, %v4102
        %v4104 = vpop.f32.mrf.mxu0
        %v4105 = vadd.f32 %v3656, %v4104
        %4106 = vdwg.mxu0
        %4107 = vst [vmem:[%s256] sm:$0xff] %v3725
        %vm4108 = vcmask 556032
        %4109 = vst.msk [vmem:[%s256 + $0x8] sm:$0xff] %vm4108, %v3727
        %4110 = vst [vmem:[%s256 + $0x10] sm:$0xff] %v3731
        %4111 = vst.msk [vmem:[%s256 + $0x18] sm:$0xff] %vm4108, %v3733
        %4112 = vst [vmem:[%s256 + $0x20] sm:$0xff] %v3737
        %4113 = vst.msk [vmem:[%s256 + $0x28] sm:$0xff] %vm4108, %v3739
        %4114 = vst [vmem:[%s256 + $0x30] sm:$0xff] %v3743
        %4115 = vst.msk [vmem:[%s256 + $0x38] sm:$0xff] %vm4108, %v3745
        %4116 = vst [vmem:[%s256 + $0x40] sm:$0xff] %v3749
        %4117 = vst.msk [vmem:[%s256 + $0x48] sm:$0xff] %vm4108, %v3751
        %4118 = vst [vmem:[%s256 + $0x50] sm:$0xff] %v3755
        %4119 = vst.msk [vmem:[%s256 + $0x58] sm:$0xff] %vm4108, %v3757
        %4120 = vst [vmem:[%s256 + $0x60] sm:$0xff] %v3761
        %4121 = vst.msk [vmem:[%s256 + $0x68] sm:$0xff] %vm4108, %v3763
        %4122 = vst [vmem:[%s256 + $0x70] sm:$0xff] %v3767
        %4123 = vst.msk [vmem:[%s256 + $0x78] sm:$0xff] %vm4108, %v3769
        %4124 = vst [vmem:[%s256 + $0x80] sm:$0xff] %v3773
        %4125 = vst.msk [vmem:[%s256 + $0x88] sm:$0xff] %vm4108, %v3775
        %4126 = vst [vmem:[%s256 + $0x90] sm:$0xff] %v3779
        %4127 = vst.msk [vmem:[%s256 + $0x98] sm:$0xff] %vm4108, %v3781
        %4128 = vst [vmem:[%s256 + $0xa0] sm:$0xff] %v3785
        %4129 = vst.msk [vmem:[%s256 + $0xa8] sm:$0xff] %vm4108, %v3787
        %4130 = vst [vmem:[%s256 + $0xb0] sm:$0xff] %v3791
        %4131 = vst.msk [vmem:[%s256 + $0xb8] sm:$0xff] %vm4108, %v3793
        %4132 = vst [vmem:[%s256 + $0xc0] sm:$0xff] %v3797
        %4133 = vst.msk [vmem:[%s256 + $0xc8] sm:$0xff] %vm4108, %v3799
        %4134 = vst [vmem:[%s256 + $0xd0] sm:$0xff] %v3803
        %4135 = vst.msk [vmem:[%s256 + $0xd8] sm:$0xff] %vm4108, %v3805
        %4136 = vst [vmem:[%s256 + $0xe0] sm:$0xff] %v3809
        %4137 = vst.msk [vmem:[%s256 + $0xe8] sm:$0xff] %vm4108, %v3811
        %4138 = vst [vmem:[%s256 + $0xf0] sm:$0xff] %v3815
        %4139 = vst.msk [vmem:[%s256 + $0xf8] sm:$0xff] %vm4108, %v3817
        %4140 = vst [vmem:[%s256 + $0x100] sm:$0xff] %v3821
        %4141 = vst.msk [vmem:[%s256 + $0x108] sm:$0xff] %vm4108, %v3823
        %4142 = vst [vmem:[%s256 + $0x110] sm:$0xff] %v3827
        %4143 = vst.msk [vmem:[%s256 + $0x118] sm:$0xff] %vm4108, %v3829
        %4144 = vst [vmem:[%s256 + $0x120] sm:$0xff] %v3833
        %4145 = vst.msk [vmem:[%s256 + $0x128] sm:$0xff] %vm4108, %v3835
        %4146 = vst [vmem:[%s256 + $0x130] sm:$0xff] %v3839
        %4147 = vst.msk [vmem:[%s256 + $0x138] sm:$0xff] %vm4108, %v3841
        %4148 = vst [vmem:[%s256 + $0x140] sm:$0xff] %v3845
        %4149 = vst.msk [vmem:[%s256 + $0x148] sm:$0xff] %vm4108, %v3847
        %4150 = vst [vmem:[%s256 + $0x150] sm:$0xff] %v3851
        %4151 = vst.msk [vmem:[%s256 + $0x158] sm:$0xff] %vm4108, %v3853
        %4152 = vst [vmem:[%s256 + $0x160] sm:$0xff] %v3857
        %4153 = vst.msk [vmem:[%s256 + $0x168] sm:$0xff] %vm4108, %v3859
        %4154 = vst [vmem:[%s256 + $0x170] sm:$0xff] %v3863
        %4155 = vst.msk [vmem:[%s256 + $0x178] sm:$0xff] %vm4108, %v3865
        %4156 = vst [vmem:[%s256 + $0x180] sm:$0xff] %v3869
        %4157 = vst.msk [vmem:[%s256 + $0x188] sm:$0xff] %vm4108, %v3871
        %4158 = vst [vmem:[%s256 + $0x190] sm:$0xff] %v3875
        %4159 = vst.msk [vmem:[%s256 + $0x198] sm:$0xff] %vm4108, %v3877
        %4160 = vst [vmem:[%s256 + $0x1a0] sm:$0xff] %v3881
        %4161 = vst.msk [vmem:[%s256 + $0x1a8] sm:$0xff] %vm4108, %v3883
        %4162 = vst [vmem:[%s256 + $0x1b0] sm:$0xff] %v3887
        %4163 = vst.msk [vmem:[%s256 + $0x1b8] sm:$0xff] %vm4108, %v3889
        %4164 = vst [vmem:[%s256 + $0x1c0] sm:$0xff] %v3893
        %4165 = vst.msk [vmem:[%s256 + $0x1c8] sm:$0xff] %vm4108, %v3895
        %4166 = vst [vmem:[%s256 + $0x1d0] sm:$0xff] %v3899
        %4167 = vst.msk [vmem:[%s256 + $0x1d8] sm:$0xff] %vm4108, %v3901
        %4168 = vst [vmem:[%s256 + $0x1e0] sm:$0xff] %v3905
        %4169 = vst.msk [vmem:[%s256 + $0x1e8] sm:$0xff] %vm4108, %v3907
        %4170 = vst [vmem:[%s256 + $0x1f0] sm:$0xff] %v3911
        %4171 = vst.msk [vmem:[%s256 + $0x1f8] sm:$0xff] %vm4108, %v3913
        %4172 = vst [vmem:[%s256 + $0x200] sm:$0xff] %v3917
        %4173 = vst.msk [vmem:[%s256 + $0x208] sm:$0xff] %vm4108, %v3919
        %4174 = vst [vmem:[%s256 + $0x210] sm:$0xff] %v3923
        %4175 = vst.msk [vmem:[%s256 + $0x218] sm:$0xff] %vm4108, %v3925
        %4176 = vst [vmem:[%s256 + $0x220] sm:$0xff] %v3929
        %4177 = vst.msk [vmem:[%s256 + $0x228] sm:$0xff] %vm4108, %v3931
        %4178 = vst [vmem:[%s256 + $0x230] sm:$0xff] %v3935
        %4179 = vst.msk [vmem:[%s256 + $0x238] sm:$0xff] %vm4108, %v3937
        %4180 = vst [vmem:[%s256 + $0x240] sm:$0xff] %v3941
        %4181 = vst.msk [vmem:[%s256 + $0x248] sm:$0xff] %vm4108, %v3943
        %4182 = vst [vmem:[%s256 + $0x250] sm:$0xff] %v3947
        %4183 = vst.msk [vmem:[%s256 + $0x258] sm:$0xff] %vm4108, %v3949
        %4184 = vst [vmem:[%s256 + $0x260] sm:$0xff] %v3953
        %4185 = vst.msk [vmem:[%s256 + $0x268] sm:$0xff] %vm4108, %v3955
        %4186 = vst [vmem:[%s256 + $0x270] sm:$0xff] %v3959
        %4187 = vst.msk [vmem:[%s256 + $0x278] sm:$0xff] %vm4108, %v3961
        %4188 = vst [vmem:[%s256 + $0x280] sm:$0xff] %v3965
        %4189 = vst.msk [vmem:[%s256 + $0x288] sm:$0xff] %vm4108, %v3967
        %4190 = vst [vmem:[%s256 + $0x290] sm:$0xff] %v3971
        %4191 = vst.msk [vmem:[%s256 + $0x298] sm:$0xff] %vm4108, %v3973
        %4192 = vst [vmem:[%s256 + $0x2a0] sm:$0xff] %v3977
        %4193 = vst.msk [vmem:[%s256 + $0x2a8] sm:$0xff] %vm4108, %v3979
        %4194 = vst [vmem:[%s256 + $0x2b0] sm:$0xff] %v3983
        %4195 = vst.msk [vmem:[%s256 + $0x2b8] sm:$0xff] %vm4108, %v3985
        %4196 = vst [vmem:[%s256 + $0x2c0] sm:$0xff] %v3989
        %4197 = vst.msk [vmem:[%s256 + $0x2c8] sm:$0xff] %vm4108, %v3991
        %4198 = vst [vmem:[%s256 + $0x2d0] sm:$0xff] %v3995
        %4199 = vst.msk [vmem:[%s256 + $0x2d8] sm:$0xff] %vm4108, %v3997
        %4200 = vst [vmem:[%s256 + $0x2e0] sm:$0xff] %v4001
        %4201 = vst.msk [vmem:[%s256 + $0x2e8] sm:$0xff] %vm4108, %v4003
        %4202 = vst [vmem:[%s256 + $0x2f0] sm:$0xff] %v4007
        %4203 = vst.msk [vmem:[%s256 + $0x2f8] sm:$0xff] %vm4108, %v4009
        %4204 = vst [vmem:[%s256 + $0x300] sm:$0xff] %v4013
        %4205 = vst.msk [vmem:[%s256 + $0x308] sm:$0xff] %vm4108, %v4015
        %4206 = vst [vmem:[%s256 + $0x310] sm:$0xff] %v4019
        %4207 = vst.msk [vmem:[%s256 + $0x318] sm:$0xff] %vm4108, %v4021
        %4208 = vst [vmem:[%s256 + $0x320] sm:$0xff] %v4025
        %4209 = vst.msk [vmem:[%s256 + $0x328] sm:$0xff] %vm4108, %v4027
        %4210 = vst [vmem:[%s256 + $0x330] sm:$0xff] %v4031
        %4211 = vst.msk [vmem:[%s256 + $0x338] sm:$0xff] %vm4108, %v4033
        %4212 = vst [vmem:[%s256 + $0x340] sm:$0xff] %v4037
        %4213 = vst.msk [vmem:[%s256 + $0x348] sm:$0xff] %vm4108, %v4039
        %4214 = vst [vmem:[%s256 + $0x350] sm:$0xff] %v4043
        %4215 = vst.msk [vmem:[%s256 + $0x358] sm:$0xff] %vm4108, %v4045
        %4216 = vst [vmem:[%s256 + $0x360] sm:$0xff] %v4049
        %4217 = vst.msk [vmem:[%s256 + $0x368] sm:$0xff] %vm4108, %v4051
        %4218 = vst [vmem:[%s256 + $0x370] sm:$0xff] %v4055
        %4219 = vst.msk [vmem:[%s256 + $0x378] sm:$0xff] %vm4108, %v4057
        %4220 = vst [vmem:[%s256 + $0x380] sm:$0xff] %v4061
        %4221 = vst.msk [vmem:[%s256 + $0x388] sm:$0xff] %vm4108, %v4063
        %4222 = vst [vmem:[%s256 + $0x390] sm:$0xff] %v4067
        %4223 = vst.msk [vmem:[%s256 + $0x398] sm:$0xff] %vm4108, %v4069
        %4224 = vst [vmem:[%s256 + $0x3a0] sm:$0xff] %v4073
        %4225 = vst.msk [vmem:[%s256 + $0x3a8] sm:$0xff] %vm4108, %v4075
        %4226 = vst [vmem:[%s256 + $0x3b0] sm:$0xff] %v4079
        %4227 = vst.msk [vmem:[%s256 + $0x3b8] sm:$0xff] %vm4108, %v4081
        %4228 = vst [vmem:[%s256 + $0x3c0] sm:$0xff] %v4085
        %4229 = vst.msk [vmem:[%s256 + $0x3c8] sm:$0xff] %vm4108, %v4087
        %4230 = vst [vmem:[%s256 + $0x3d0] sm:$0xff] %v4091
        %4231 = vst.msk [vmem:[%s256 + $0x3d8] sm:$0xff] %vm4108, %v4093
        %4232 = vst [vmem:[%s256 + $0x3e0] sm:$0xff] %v4097
        %4233 = vst.msk [vmem:[%s256 + $0x3e8] sm:$0xff] %vm4108, %v4099
        %4234 = vst [vmem:[%s256 + $0x3f0] sm:$0xff] %v4103
        %4235 = vst.msk [vmem:[%s256 + $0x3f8] sm:$0xff] %vm4108, %v4105
        %s4236 = smul.u32 64, %s22
        %p4237 = scmp.lt.s32.totalorder %s21, 0
        %s4238 = scalar_select %p4237, %s21, 0
        %p4239 = scmp.lt.s32.totalorder %s4236, 127
        %s4240 = scalar_select %p4239, %s4236, 127
        %s4241 = smul.addr %s4240, 2
        %s4242 = smul.addr %s4238, 256
        %s4243 = sadd.s32 %s4241, %s4242
        %s4244 = smul.addr %s4243, 8
        %s4245 = scalar_lea.vmem %s3, %s4244
        // Predicated region
        $region41: #{tpu_custom_call.1} parent=31 // pred_check
          %p4246 = pneg %p127
        $region42: #{tpu_custom_call.1} parent=31 // pred_check_branch
          %4248 = sbr.rel (%p4246) target = $region44
        $region43: #{tpu_custom_call.1} parent=31 // pred_region
          %s4249 = smul.u32 64, %s22
        $region44: #{tpu_custom_call.1} parent=31 // pred_fallthru
          _
      $region32: #{tpu_custom_call.1} parent=5 // pred_fallthru
        _
      %p4250 = scmp.le.s32.totalorder 2, %s12
      // Predicated region
      $region45: #{tpu_custom_call.1} parent=5 // pred_check
        %p4251 = pneg %p4250
      $region46: #{tpu_custom_call.1} parent=5 // pred_check_branch
        %4253 = sbr.rel (%p4251) target = $region48
      $region47: #{tpu_custom_call.1} parent=5 // pred_region
        %s4254 = ssub.s32 %s12, 2
        // Predicated region
        $region49: #{tpu_custom_call.1} parent=47 // pred_check
          %p4255 = pneg %p133
        $region50: #{tpu_custom_call.1} parent=47 // pred_check_branch
          %4257 = sbr.rel (%p4255) target = $region52
        $region51: #{tpu_custom_call.1} parent=47 // pred_region
          %s4258 = smul.u32 64, %s24
          %p4259 = scmp.lt.s32.totalorder %s23, 0
          %s4260 = scalar_select %p4259, %s23, 0
          %p4261 = scmp.lt.s32.totalorder %s4258, 127
          %s4262 = scalar_select %p4261, %s4258, 127
          %s4263 = smul.addr %s4262, 2
          %s4264 = smul.addr %s4260, 256
          %s4265 = sadd.s32 %s4263, %s4264
          %s4266 = smul.addr %s4265, 8
          %s4267 = scalar_lea.vmem %s3, %s4266
        $region52: #{tpu_custom_call.1} parent=47 // pred_fallthru
          _
      $region48: #{tpu_custom_call.1} parent=5 // pred_fallthru
        _
    $region6: #{tpu_custom_call.1} parent=1 // loop_footer
      %s16 = sadd.s32 1, %s12
    $region7: #{tpu_custom_call.1} parent=1 // loop_footer_branch
      %11 = sbr.rel target = $region3
    $region8: #{tpu_custom_call.1} parent=1 // loop_exit
      _
    %4268 = vsyncpa [#allocation4], 1
    %s4269 = scalar_lea.sflag [#allocation4], 1
    %4270 = vsyncpa %s4269, 1

</llo_original>
